<compile_context>
chip_gen: v5e
topology: v5e:2x2
jax: 0.10.0
libtpu: 0.0.40
codegen_flags: <defaults>
</compile_context>

<pallas_src>
import functools

import jax
import jax.numpy as jnp
from jax.experimental import pallas as pl
from jax.experimental.pallas import tpu as pltpu


# ---------------------------------------------------------------------------
# Fused kernel: LoRA-updated conv as kh*kw shifted matmuls (im2col in VMEM).
#   x_ref : (1, C, H*W + halo)  flat, tail-zero-padded input for one image
#   w_ref : (kh*kw, O, C)       per-tap effective weight  w[tap,o,c]=W_eff[o,c,dh,dw]
#   b_ref : (1, O, 1)           bias
#   o_ref : (1, O, H*W)         flat output at input resolution (tail = junk,
#                               sliced off by the wrapper)
# ---------------------------------------------------------------------------
def _fused_lora_conv_kernel(x_ref, w_ref, b_ref, o_ref, *,
                            kh, kw, row_stride, hw, precision):
    acc = jnp.zeros(o_ref.shape[1:], jnp.float32)          # (O, H*W) f32
    for dh in range(kh):
        for dw in range(kw):
            tap = dh * kw + dw
            off = dh * row_stride + dw                      # static offset
            x_shift = x_ref[0, :, off:off + hw]             # (C, H*W) contiguous
            acc = acc + jnp.dot(w_ref[tap], x_shift,
                                preferred_element_type=jnp.float32,
                                precision=precision)
    o_ref[0] = acc + b_ref[0]                               # bias broadcast over H*W


# ---------------------------------------------------------------------------
# Wrapper: full LoRA_Conv2d forward (NCHW in, NCHW out).
# ---------------------------------------------------------------------------
@functools.partial(jax.jit, static_argnames=("kernel_size", "compute_dtype"))
def lora_conv2d(x_nchw, conv_w, conv_b, A, B, kernel_size=3,
                compute_dtype=jnp.float32):
    n, c, h, w = x_nchw.shape
    o = conv_w.shape[0]
    kh = kw = kernel_size
    ho, wo = h - kh + 1, w - kw + 1
    hw = h * w
    halo = (kh - 1) * w + (kw - 1)

    # --- LoRA weight fusion in plain JAX (tiny: O*C*k*k = 4.6K elements) ---
    delta = (B.astype(jnp.float32) @ A.astype(jnp.float32)).reshape(conv_w.shape)
    w_eff = conv_w.astype(jnp.float32) + delta
    # (kh*kw, O, C) with w_taps[dh*kw + dw, o, c] == w_eff[o, c, dh, dw]
    w_taps = jnp.transpose(w_eff, (2, 3, 0, 1)).reshape(kh * kw, o, c)
    w_taps = w_taps.astype(compute_dtype)

    # --- flatten spatial dims (free reshape) + tail zero-pad for the taps ---
    x_flat = x_nchw.reshape(n, c, hw).astype(compute_dtype)
    x_flat = jnp.pad(x_flat, ((0, 0), (0, 0), (0, halo)))

    bias = conv_b.reshape(1, o, 1).astype(jnp.float32)

    precision = (jax.lax.Precision.HIGHEST
                 if compute_dtype == jnp.float32 else None)

    kernel = functools.partial(_fused_lora_conv_kernel,
                               kh=kh, kw=kw, row_stride=w, hw=hw,
                               precision=precision)

    out_flat = pl.pallas_call(
        kernel,
        out_shape=jax.ShapeDtypeStruct((n, o, hw), jnp.float32),
        grid=(n,),
        in_specs=[
            pl.BlockSpec((1, c, hw + halo), lambda i: (i, 0, 0)),
            pl.BlockSpec((kh * kw, o, c), lambda i: (0, 0, 0)),  # fetched once
            pl.BlockSpec((1, o, 1), lambda i: (0, 0, 0)),        # fetched once
        ],
        out_specs=pl.BlockSpec((1, o, hw), lambda i: (i, 0, 0)),
        compiler_params=pltpu.CompilerParams(
            dimension_semantics=("parallel",)),
    )(x_flat, w_taps, bias)

    # (N, O, H*W) -> (N, O, H, W) is a free reshape; slicing off the invalid
    # tail rows/cols yields the NCHW result directly (no transpose).
    return out_flat.reshape(n, o, h, w)[:, :, :ho, :wo]


if __name__ == "__main__":
    # Module hyper-parameters (from the PyTorch script).
    in_channels, out_channels, kernel_size, r, groups = 16, 32, 3, 5, 1

    key = jax.random.PRNGKey(0)
    k_x, k_w, k_b, k_A, k_B = jax.random.split(key, 5)

    # Small input consistent with the module (NCHW).
    x = jax.random.normal(k_x, (2, in_channels, 16, 16), dtype=jnp.float32)

    # Deterministic synthetic parameters (shapes from __init__).
    conv_w = jax.random.normal(
        k_w, (out_channels, in_channels // groups, kernel_size, kernel_size),
        dtype=jnp.float32) * 0.1
    conv_b = jax.random.normal(k_b, (out_channels,), dtype=jnp.float32) * 0.1
    A = jax.random.normal(
        k_A, (r * kernel_size, in_channels * kernel_size), dtype=jnp.float32)
    B = jax.random.normal(
        k_B, (out_channels // groups * kernel_size, r * kernel_size),
        dtype=jnp.float32)

    # Pure-JAX reference (true module semantics).
    w_eff_ref = conv_w + (B @ A).reshape(conv_w.shape)
    y_ref = jax.lax.conv_general_dilated(
        x, w_eff_ref, window_strides=(1, 1), padding="VALID",
        dimension_numbers=("NCHW", "OIHW", "NCHW"),
        precision=jax.lax.Precision.HIGHEST,
    ) + conv_b.reshape(1, -1, 1, 1)

    # --- f32 path ---
    y = lora_conv2d(x, conv_w, conv_b, A, B, kernel_size=kernel_size)
    y = jax.block_until_ready(y)
    assert y.shape == (2, out_channels, 14, 14), y.shape
    assert jnp.allclose(y, y_ref, rtol=1e-3, atol=1e-3), float(
        jnp.max(jnp.abs(y - y_ref)))

    # --- bf16 fast path (checked against a bf16-rounded-input reference) ---
    y_bf16 = lora_conv2d(x, conv_w, conv_b, A, B, kernel_size=kernel_size,
                         compute_dtype=jnp.bfloat16)
    y_bf16 = jax.block_until_ready(y_bf16)
    x_r = x.astype(jnp.bfloat16).astype(jnp.float32)
    w_r = w_eff_ref.astype(jnp.bfloat16).astype(jnp.float32)
    y_ref_bf16 = jax.lax.conv_general_dilated(
        x_r, w_r, window_strides=(1, 1), padding="VALID",
        dimension_numbers=("NCHW", "OIHW", "NCHW"),
        precision=jax.lax.Precision.HIGHEST,
    ) + conv_b.reshape(1, -1, 1, 1)
    assert jnp.allclose(y_bf16, y_ref_bf16, rtol=1e-2, atol=1e-2), float(
        jnp.max(jnp.abs(y_bf16 - y_ref_bf16)))

    print("KERNEL_OK")
</pallas_src>

<mosaic_0001>
module attributes {stable_mosaic.version = 11 : i64} {
  func.func @_fused_lora_conv_kernel(%arg0: i32, %arg1: memref<1x16x290xf32, #tpu.memory_space<vmem>>, %arg2: memref<9x32x16xf32, #tpu.memory_space<vmem>>, %arg3: memref<1x32x1xf32, #tpu.memory_space<vmem>>, %arg4: memref<1x32x256xf32, #tpu.memory_space<vmem>>) attributes {dimension_semantics = [#tpu.dimension_semantics<parallel>], iteration_bounds = array<i64: 2>, scalar_prefetch = 0 : i64, scratch_operands = 0 : i64, tpu.core_type = #tpu.core_type<tc>, window_params = [{transform_indices = @transform_0, window_bounds = array<i64: 1, 16, 290>}, {pipeline_mode = #tpu.pipeline_mode<synchronous>, transform_indices = @transform_1, window_bounds = array<i64: 9, 32, 16>}, {pipeline_mode = #tpu.pipeline_mode<synchronous>, transform_indices = @transform_2, window_bounds = array<i64: 1, 32, 1>}, {transform_indices = @transform_3, window_bounds = array<i64: 1, 32, 256>}]} {
    %cst = arith.constant 0.000000e+00 : f32
    %0 = vector.broadcast %cst : f32 to vector<32x256xf32>
    %c0 = arith.constant 0 : index
    %c0_0 = arith.constant 0 : index
    %c0_1 = arith.constant 0 : index
    %1 = vector.load %arg1[%c0, %c0_0, %c0_1] : memref<1x16x290xf32, #tpu.memory_space<vmem>>, vector<1x16x256xf32>
    %2 = vector.shape_cast %1 : vector<1x16x256xf32> to vector<16x256xf32>
    %c0_2 = arith.constant 0 : index
    %c0_3 = arith.constant 0 : index
    %c0_4 = arith.constant 0 : index
    %3 = vector.load %arg2[%c0_2, %c0_3, %c0_4] : memref<9x32x16xf32, #tpu.memory_space<vmem>>, vector<1x32x16xf32>
    %4 = vector.shape_cast %3 : vector<1x32x16xf32> to vector<32x16xf32>
    %cst_5 = arith.constant dense<0.000000e+00> : vector<32x256xf32>
    %5 = tpu.matmul %4, %2, %cst_5 {dimension_numbers = #tpu.dot_dimension_numbers<[1], [0], [0], [1], [0, 0, 1, 1], [], []>, precision = #tpu.contract_precision<fp32>} : vector<32x16xf32>, vector<16x256xf32>, vector<32x256xf32> -> vector<32x256xf32>
    %6 = arith.addf %0, %5 : vector<32x256xf32>
    %c0_6 = arith.constant 0 : index
    %c0_7 = arith.constant 0 : index
    %c1 = arith.constant 1 : index
    %7 = vector.load %arg1[%c0_6, %c0_7, %c1] : memref<1x16x290xf32, #tpu.memory_space<vmem>>, vector<1x16x256xf32>
    %8 = vector.shape_cast %7 : vector<1x16x256xf32> to vector<16x256xf32>
    %c1_8 = arith.constant 1 : index
    %c0_9 = arith.constant 0 : index
    %c0_10 = arith.constant 0 : index
    %9 = vector.load %arg2[%c1_8, %c0_9, %c0_10] : memref<9x32x16xf32, #tpu.memory_space<vmem>>, vector<1x32x16xf32>
    %10 = vector.shape_cast %9 : vector<1x32x16xf32> to vector<32x16xf32>
    %cst_11 = arith.constant dense<0.000000e+00> : vector<32x256xf32>
    %11 = tpu.matmul %10, %8, %cst_11 {dimension_numbers = #tpu.dot_dimension_numbers<[1], [0], [0], [1], [0, 0, 1, 1], [], []>, precision = #tpu.contract_precision<fp32>} : vector<32x16xf32>, vector<16x256xf32>, vector<32x256xf32> -> vector<32x256xf32>
    %12 = arith.addf %6, %11 : vector<32x256xf32>
    %c0_12 = arith.constant 0 : index
    %c0_13 = arith.constant 0 : index
    %c2 = arith.constant 2 : index
    %13 = vector.load %arg1[%c0_12, %c0_13, %c2] : memref<1x16x290xf32, #tpu.memory_space<vmem>>, vector<1x16x256xf32>
    %14 = vector.shape_cast %13 : vector<1x16x256xf32> to vector<16x256xf32>
    %c2_14 = arith.constant 2 : index
    %c0_15 = arith.constant 0 : index
    %c0_16 = arith.constant 0 : index
    %15 = vector.load %arg2[%c2_14, %c0_15, %c0_16] : memref<9x32x16xf32, #tpu.memory_space<vmem>>, vector<1x32x16xf32>
    %16 = vector.shape_cast %15 : vector<1x32x16xf32> to vector<32x16xf32>
    %cst_17 = arith.constant dense<0.000000e+00> : vector<32x256xf32>
    %17 = tpu.matmul %16, %14, %cst_17 {dimension_numbers = #tpu.dot_dimension_numbers<[1], [0], [0], [1], [0, 0, 1, 1], [], []>, precision = #tpu.contract_precision<fp32>} : vector<32x16xf32>, vector<16x256xf32>, vector<32x256xf32> -> vector<32x256xf32>
    %18 = arith.addf %12, %17 : vector<32x256xf32>
    %c0_18 = arith.constant 0 : index
    %c0_19 = arith.constant 0 : index
    %c16 = arith.constant 16 : index
    %19 = vector.load %arg1[%c0_18, %c0_19, %c16] : memref<1x16x290xf32, #tpu.memory_space<vmem>>, vector<1x16x256xf32>
    %20 = vector.shape_cast %19 : vector<1x16x256xf32> to vector<16x256xf32>
    %c3 = arith.constant 3 : index
    %c0_20 = arith.constant 0 : index
    %c0_21 = arith.constant 0 : index
    %21 = vector.load %arg2[%c3, %c0_20, %c0_21] : memref<9x32x16xf32, #tpu.memory_space<vmem>>, vector<1x32x16xf32>
    %22 = vector.shape_cast %21 : vector<1x32x16xf32> to vector<32x16xf32>
    %cst_22 = arith.constant dense<0.000000e+00> : vector<32x256xf32>
    %23 = tpu.matmul %22, %20, %cst_22 {dimension_numbers = #tpu.dot_dimension_numbers<[1], [0], [0], [1], [0, 0, 1, 1], [], []>, precision = #tpu.contract_precision<fp32>} : vector<32x16xf32>, vector<16x256xf32>, vector<32x256xf32> -> vector<32x256xf32>
    %24 = arith.addf %18, %23 : vector<32x256xf32>
    %c0_23 = arith.constant 0 : index
    %c0_24 = arith.constant 0 : index
    %c17 = arith.constant 17 : index
    %25 = vector.load %arg1[%c0_23, %c0_24, %c17] : memref<1x16x290xf32, #tpu.memory_space<vmem>>, vector<1x16x256xf32>
    %26 = vector.shape_cast %25 : vector<1x16x256xf32> to vector<16x256xf32>
    %c4 = arith.constant 4 : index
    %c0_25 = arith.constant 0 : index
    %c0_26 = arith.constant 0 : index
    %27 = vector.load %arg2[%c4, %c0_25, %c0_26] : memref<9x32x16xf32, #tpu.memory_space<vmem>>, vector<1x32x16xf32>
    %28 = vector.shape_cast %27 : vector<1x32x16xf32> to vector<32x16xf32>
    %cst_27 = arith.constant dense<0.000000e+00> : vector<32x256xf32>
    %29 = tpu.matmul %28, %26, %cst_27 {dimension_numbers = #tpu.dot_dimension_numbers<[1], [0], [0], [1], [0, 0, 1, 1], [], []>, precision = #tpu.contract_precision<fp32>} : vector<32x16xf32>, vector<16x256xf32>, vector<32x256xf32> -> vector<32x256xf32>
    %30 = arith.addf %24, %29 : vector<32x256xf32>
    %c0_28 = arith.constant 0 : index
    %c0_29 = arith.constant 0 : index
    %c18 = arith.constant 18 : index
    %31 = vector.load %arg1[%c0_28, %c0_29, %c18] : memref<1x16x290xf32, #tpu.memory_space<vmem>>, vector<1x16x256xf32>
    %32 = vector.shape_cast %31 : vector<1x16x256xf32> to vector<16x256xf32>
    %c5 = arith.constant 5 : index
    %c0_30 = arith.constant 0 : index
    %c0_31 = arith.constant 0 : index
    %33 = vector.load %arg2[%c5, %c0_30, %c0_31] : memref<9x32x16xf32, #tpu.memory_space<vmem>>, vector<1x32x16xf32>
    %34 = vector.shape_cast %33 : vector<1x32x16xf32> to vector<32x16xf32>
    %cst_32 = arith.constant dense<0.000000e+00> : vector<32x256xf32>
    %35 = tpu.matmul %34, %32, %cst_32 {dimension_numbers = #tpu.dot_dimension_numbers<[1], [0], [0], [1], [0, 0, 1, 1], [], []>, precision = #tpu.contract_precision<fp32>} : vector<32x16xf32>, vector<16x256xf32>, vector<32x256xf32> -> vector<32x256xf32>
    %36 = arith.addf %30, %35 : vector<32x256xf32>
    %c0_33 = arith.constant 0 : index
    %c0_34 = arith.constant 0 : index
    %c32 = arith.constant 32 : index
    %37 = vector.load %arg1[%c0_33, %c0_34, %c32] : memref<1x16x290xf32, #tpu.memory_space<vmem>>, vector<1x16x256xf32>
    %38 = vector.shape_cast %37 : vector<1x16x256xf32> to vector<16x256xf32>
    %c6 = arith.constant 6 : index
    %c0_35 = arith.constant 0 : index
    %c0_36 = arith.constant 0 : index
    %39 = vector.load %arg2[%c6, %c0_35, %c0_36] : memref<9x32x16xf32, #tpu.memory_space<vmem>>, vector<1x32x16xf32>
    %40 = vector.shape_cast %39 : vector<1x32x16xf32> to vector<32x16xf32>
    %cst_37 = arith.constant dense<0.000000e+00> : vector<32x256xf32>
    %41 = tpu.matmul %40, %38, %cst_37 {dimension_numbers = #tpu.dot_dimension_numbers<[1], [0], [0], [1], [0, 0, 1, 1], [], []>, precision = #tpu.contract_precision<fp32>} : vector<32x16xf32>, vector<16x256xf32>, vector<32x256xf32> -> vector<32x256xf32>
    %42 = arith.addf %36, %41 : vector<32x256xf32>
    %c0_38 = arith.constant 0 : index
    %c0_39 = arith.constant 0 : index
    %c33 = arith.constant 33 : index
    %43 = vector.load %arg1[%c0_38, %c0_39, %c33] : memref<1x16x290xf32, #tpu.memory_space<vmem>>, vector<1x16x256xf32>
    %44 = vector.shape_cast %43 : vector<1x16x256xf32> to vector<16x256xf32>
    %c7 = arith.constant 7 : index
    %c0_40 = arith.constant 0 : index
    %c0_41 = arith.constant 0 : index
    %45 = vector.load %arg2[%c7, %c0_40, %c0_41] : memref<9x32x16xf32, #tpu.memory_space<vmem>>, vector<1x32x16xf32>
    %46 = vector.shape_cast %45 : vector<1x32x16xf32> to vector<32x16xf32>
    %cst_42 = arith.constant dense<0.000000e+00> : vector<32x256xf32>
    %47 = tpu.matmul %46, %44, %cst_42 {dimension_numbers = #tpu.dot_dimension_numbers<[1], [0], [0], [1], [0, 0, 1, 1], [], []>, precision = #tpu.contract_precision<fp32>} : vector<32x16xf32>, vector<16x256xf32>, vector<32x256xf32> -> vector<32x256xf32>
    %48 = arith.addf %42, %47 : vector<32x256xf32>
    %c0_43 = arith.constant 0 : index
    %c0_44 = arith.constant 0 : index
    %c34 = arith.constant 34 : index
    %49 = vector.load %arg1[%c0_43, %c0_44, %c34] : memref<1x16x290xf32, #tpu.memory_space<vmem>>, vector<1x16x256xf32>
    %50 = vector.shape_cast %49 : vector<1x16x256xf32> to vector<16x256xf32>
    %c8 = arith.constant 8 : index
    %c0_45 = arith.constant 0 : index
    %c0_46 = arith.constant 0 : index
    %51 = vector.load %arg2[%c8, %c0_45, %c0_46] : memref<9x32x16xf32, #tpu.memory_space<vmem>>, vector<1x32x16xf32>
    %52 = vector.shape_cast %51 : vector<1x32x16xf32> to vector<32x16xf32>
    %cst_47 = arith.constant dense<0.000000e+00> : vector<32x256xf32>
    %53 = tpu.matmul %52, %50, %cst_47 {dimension_numbers = #tpu.dot_dimension_numbers<[1], [0], [0], [1], [0, 0, 1, 1], [], []>, precision = #tpu.contract_precision<fp32>} : vector<32x16xf32>, vector<16x256xf32>, vector<32x256xf32> -> vector<32x256xf32>
    %54 = arith.addf %48, %53 : vector<32x256xf32>
    %c0_48 = arith.constant 0 : index
    %c0_49 = arith.constant 0 : index
    %c0_50 = arith.constant 0 : index
    %55 = vector.load %arg3[%c0_48, %c0_49, %c0_50] : memref<1x32x1xf32, #tpu.memory_space<vmem>>, vector<1x32x1xf32>
    %56 = vector.shape_cast %55 : vector<1x32x1xf32> to vector<32x1xf32>
    %57 = vector.broadcast %56 : vector<32x1xf32> to vector<32x256xf32>
    %58 = arith.addf %54, %57 : vector<32x256xf32>
    %c0_51 = arith.constant 0 : index
    %c0_52 = arith.constant 0 : index
    %c0_53 = arith.constant 0 : index
    %59 = vector.load %arg4[%c0_51, %c0_52, %c0_53] : memref<1x32x256xf32, #tpu.memory_space<vmem>>, vector<1x32x256xf32>
    %60 = vector.shape_cast %59 : vector<1x32x256xf32> to vector<32x256xf32>
    %61 = vector.shape_cast %58 : vector<32x256xf32> to vector<1x32x256xf32>
    tpu.vector_store %arg4[%c0_51, %c0_52, %c0_53], %61 {strides = array<i32>} : memref<1x32x256xf32, #tpu.memory_space<vmem>>, vector<1x32x256xf32>,
    return
  }
  func.func @transform_0(%arg0: i32) -> (i32, i32, i32) {
    %c0_i32 = arith.constant 0 : i32
    %c0_i32_0 = arith.constant 0 : i32
    %c0_i32_1 = arith.constant 0 : i32
    return %arg0, %c0_i32, %c0_i32_0 : i32, i32, i32
  }
  func.func @transform_1(%arg0: i32) -> (i32, i32, i32) {
    %c0_i32 = arith.constant 0 : i32
    %c0_i32_0 = arith.constant 0 : i32
    %c0_i32_1 = arith.constant 0 : i32
    %c0_i32_2 = arith.constant 0 : i32
    return %c0_i32, %c0_i32_0, %c0_i32_1 : i32, i32, i32
  }
  func.func @transform_2(%arg0: i32) -> (i32, i32, i32) {
    %c0_i32 = arith.constant 0 : i32
    %c0_i32_0 = arith.constant 0 : i32
    %c0_i32_1 = arith.constant 0 : i32
    %c0_i32_2 = arith.constant 0 : i32
    return %c0_i32, %c0_i32_0, %c0_i32_1 : i32, i32, i32
  }
  func.func @transform_3(%arg0: i32) -> (i32, i32, i32) {
    %c0_i32 = arith.constant 0 : i32
    %c0_i32_0 = arith.constant 0 : i32
    %c0_i32_1 = arith.constant 0 : i32
    return %arg0, %c0_i32, %c0_i32_0 : i32, i32, i32
  }
}

</mosaic_0001>

<llo_original>
// kernel: lora_conv2d.1
$region0: #{lora_conv2d.1}
  #allocation0 [shape = 'u32[]', space=smem, size = 0x4, offset = 0x4, fixed_abs, tag = 'smem constant byte address 0x4 - core index']
  #allocation1 [shape = 'u32[72,128]{1,0:T(1,128)}', space=vmem, size = 0x9000, scoped, tag = 'internal scratch']
  %s0 = inlined_call_operand.vmem [shape: f32[2,16,290], index: 0, kind: input, shape index: {}]
  %s1 = inlined_call_operand.vmem [shape: f32[9,32,16], index: 1, kind: input, shape index: {}]
  %s2 = inlined_call_operand.vmem [shape: f32[1,32,1], index: 2, kind: input, shape index: {}]
  %s3 = inlined_call_operand.vmem [shape: f32[2,32,256], index: 3, kind: output, shape index: {}]
  %s4 = sld [smem:[#allocation0]]
  $region45: #{lora_conv2d.1} parent=0
    _
  %s6 = ssub.s32 1, %s4
  %s7 = scalar_select 0, %s6, %s4
  loop: start=0, step=1, limit=4
  $region2: #{lora_conv2d.1} parent=0 // loop_pre_header
    _
  $region3: #{lora_conv2d.1} parent=0 // loop_header
    %s9 = sphi 0, %s13
    %p10 = scmp.ge.s32.totalorder %s9, 4
    %s19 = sphi 0, %s21
    %s22 = sphi 0, %s19
    %s23 = sphi 0, %s22
    %s39 = sphi 0, %s23
    %s43 = sphi 0, %s43
    %s45 = sphi 0, %s43
    %s46 = sphi 0, %s45
    %s60 = sphi 0, %s46
    %s64 = sphi 0, %s64
    %s66 = sphi 0, %s64
    %s67 = sphi 0, %s66
    %s81 = sphi 0, %s67
    %s87 = sphi 0, %s89
    %s90 = sphi 0, %s87
    %s91 = sphi 0, %s90
    %s107 = sphi 0, %s91
  $region4: #{lora_conv2d.1} parent=0 // loop_header_branch
    %12 = sbr.rel (%p10) target = $region8
  $region5: #{lora_conv2d.1} parent=0 // loop_body
    %s14 = ssub.s32 %s9, 1
    %s15 = ssub.s32 %s9, 2
    %s16 = sadd.s32 %s9, 1
    %s17 = ssub.s32 %s9, %s16
    %p18 = scmp.eq.s32.totalorder %s17, 0
    %s20 = sadd.s32 %s19, 1
    %s21 = scalar_select %p18, %s19, %s20
    %p24 = pneg %p18
    %p25 = scmp.eq.s32.totalorder %s9, 1
    %p26 = por %p24, %p25
    %p27 = scmp.ne.s32.totalorder %s19, %s22
    %p28 = scmp.eq.s32.totalorder %s9, 0
    %p29 = por %p27, %p28
    %p30 = scmp.ne.s32.totalorder %s19, %s22
    %p31 = scmp.eq.s32.totalorder %s14, 1
    %p32 = por %p30, %p31
    %p33 = scmp.ne.s32.totalorder %s22, %s23
    %p34 = scmp.eq.s32.totalorder %s14, 0
    %p35 = por %p33, %p34
    %p36 = scmp.ne.s32.totalorder %s22, %s23
    %p37 = scmp.eq.s32.totalorder %s15, 1
    %p38 = por %p36, %p37
    %p40 = scmp.ne.s32.totalorder %s23, %s39
    %p41 = scmp.eq.s32.totalorder %s15, 0
    %p42 = por %p40, %p41
    %s44 = sadd.s32 %s43, 1
    %p47 = scmp.eq.s32.totalorder %s9, 1
    %p48 = scmp.ne.s32.totalorder %s43, %s45
    %p49 = scmp.eq.s32.totalorder %s9, 0
    %p50 = por %p48, %p49
    %p51 = scmp.ne.s32.totalorder %s43, %s45
    %p52 = scmp.eq.s32.totalorder %s14, 1
    %p53 = por %p51, %p52
    %p54 = scmp.ne.s32.totalorder %s45, %s46
    %p55 = scmp.eq.s32.totalorder %s14, 0
    %p56 = por %p54, %p55
    %p57 = scmp.ne.s32.totalorder %s45, %s46
    %p58 = scmp.eq.s32.totalorder %s15, 1
    %p59 = por %p57, %p58
    %p61 = scmp.ne.s32.totalorder %s46, %s60
    %p62 = scmp.eq.s32.totalorder %s15, 0
    %p63 = por %p61, %p62
    %s65 = sadd.s32 %s64, 1
    %p68 = scmp.eq.s32.totalorder %s9, 1
    %p69 = scmp.ne.s32.totalorder %s64, %s66
    %p70 = scmp.eq.s32.totalorder %s9, 0
    %p71 = por %p69, %p70
    %p72 = scmp.ne.s32.totalorder %s64, %s66
    %p73 = scmp.eq.s32.totalorder %s14, 1
    %p74 = por %p72, %p73
    %p75 = scmp.ne.s32.totalorder %s66, %s67
    %p76 = scmp.eq.s32.totalorder %s14, 0
    %p77 = por %p75, %p76
    %p78 = scmp.ne.s32.totalorder %s66, %s67
    %p79 = scmp.eq.s32.totalorder %s15, 1
    %p80 = por %p78, %p79
    %p82 = scmp.ne.s32.totalorder %s67, %s81
    %p83 = scmp.eq.s32.totalorder %s15, 0
    %p84 = por %p82, %p83
    %s85 = ssub.s32 %s9, %s16
    %p86 = scmp.eq.s32.totalorder %s85, 0
    %s88 = sadd.s32 %s87, 1
    %s89 = scalar_select %p86, %s87, %s88
    %p92 = pneg %p86
    %p93 = scmp.eq.s32.totalorder %s9, 1
    %p94 = por %p92, %p93
    %p95 = scmp.ne.s32.totalorder %s87, %s90
    %p96 = scmp.eq.s32.totalorder %s9, 0
    %p97 = por %p95, %p96
    %p98 = scmp.ne.s32.totalorder %s87, %s90
    %p99 = scmp.eq.s32.totalorder %s14, 1
    %p100 = por %p98, %p99
    %p101 = scmp.ne.s32.totalorder %s90, %s91
    %p102 = scmp.eq.s32.totalorder %s14, 0
    %p103 = por %p101, %p102
    %p104 = scmp.ne.s32.totalorder %s90, %s91
    %p105 = scmp.eq.s32.totalorder %s15, 1
    %p106 = por %p104, %p105
    %p108 = scmp.ne.s32.totalorder %s91, %s107
    %p109 = scmp.eq.s32.totalorder %s15, 0
    %p110 = por %p108, %p109
    %p111 = scmp.le.s32.totalorder 1, %s9
    %p112 = scmp.lt.s32.totalorder %s9, 3
    %p113 = pnand %p111, %p112
    %p114 = pneg %p113
    // Predicated region
    $region9: #{lora_conv2d.1} parent=5 // pred_check
      _
    $region10: #{lora_conv2d.1} parent=5 // pred_check_branch
      %116 = sbr.rel (%p113) target = $region12
    $region11: #{lora_conv2d.1} parent=5 // pred_region
      %s117 = ssub.s32 %s9, 1
      // Predicated region
      $region13: #{lora_conv2d.1} parent=11 // pred_check
        %p118 = pneg %p56
      $region14: #{lora_conv2d.1} parent=11 // pred_check_branch
        %120 = sbr.rel (%p118) target = $region16
      $region15: #{lora_conv2d.1} parent=11 // pred_region
        _
      $region16: #{lora_conv2d.1} parent=11 // pred_fallthru
        _
      // Predicated region
      $region17: #{lora_conv2d.1} parent=11 // pred_check
        %p121 = pneg %p77
      $region18: #{lora_conv2d.1} parent=11 // pred_check_branch
        %123 = sbr.rel (%p121) target = $region20
      $region19: #{lora_conv2d.1} parent=11 // pred_region
        _
      $region20: #{lora_conv2d.1} parent=11 // pred_fallthru
        _
    $region12: #{lora_conv2d.1} parent=5 // pred_fallthru
      _
    %p124 = scmp.lt.s32.totalorder %s9, 2
    // Predicated region
    $region21: #{lora_conv2d.1} parent=5 // pred_check
      %p125 = pneg %p124
    $region22: #{lora_conv2d.1} parent=5 // pred_check_branch
      %127 = sbr.rel (%p125) target = $region24
    $region23: #{lora_conv2d.1} parent=5 // pred_region
      // Predicated region
      $region25: #{lora_conv2d.1} parent=23 // pred_check
        %p128 = pneg %p29
      $region26: #{lora_conv2d.1} parent=23 // pred_check_branch
        %130 = sbr.rel (%p128) target = $region28
      $region27: #{lora_conv2d.1} parent=23 // pred_region
        %p131 = scmp.lt.s32.totalorder %s9, 1
        %s132 = scalar_select %p131, %s9, 1
        %s133 = smul.addr %s132, 6
        %s134 = smul.addr %s133, 8
        %s135 = scalar_lea.vmem %s0, %s134
      $region28: #{lora_conv2d.1} parent=23 // pred_fallthru
        _
    $region24: #{lora_conv2d.1} parent=5 // pred_fallthru
      _
    %p136 = scmp.le.s32.totalorder 1, %s9
    %p137 = scmp.lt.s32.totalorder %s9, 3
    %p138 = pnand %p136, %p137
    %p139 = pneg %p138
    // Predicated region
    $region29: #{lora_conv2d.1} parent=5 // pred_check
      _
    $region30: #{lora_conv2d.1} parent=5 // pred_check_branch
      %141 = sbr.rel (%p138) target = $region32
    $region31: #{lora_conv2d.1} parent=5 // pred_region
      %s142 = ssub.s32 %s9, 1
      %p143 = scmp.lt.s32.totalorder %s14, 1
      %s144 = scalar_select %p143, %s14, 1
      %s145 = smul.addr %s144, 6
      %s146 = smul.addr %s145, 8
      %s147 = scalar_lea.vmem %s0, %s146
      %p148 = pneg %p35
      %p149 = pneg %p32
      %p150 = pneg %p56
      %p151 = pneg %p53
      %p152 = pneg %p77
      %p153 = pneg %p74
      %p154 = pneg %p103
      %p155 = pneg %p100
      %p156 = scmp.lt.s32.totalorder %s14, 1
      %s157 = scalar_select %p156, %s14, 1
      %s158 = smul.addr %s157, 8
      %s159 = smul.addr %s158, 8
      %s160 = scalar_lea.vmem %s3, %s159
      %p161 = scmp.lt.s32.totalorder %s14, 1
      %s162 = scalar_select %p161, %s14, 1
      %s163 = smul.addr %s162, 6
      %s164 = smul.addr %s163, 8
      %s165 = scalar_lea.vmem %s0, %s164
      %p166 = scmp.lt.s32.totalorder %s14, 1
      %s167 = scalar_select %p166, %s14, 1
      %s168 = smul.addr %s167, 8
      %s169 = smul.addr %s168, 8
      %s170 = scalar_lea.vmem %s3, %s169
      %v171 = vld [vmem:[%s165] sm:$0xff]
      %v172 = vld [vmem:[%s165 + $0x8] sm:$0xff]
      %v173 = vld [vmem:[%s165 + $0x18] sm:$0xff]
      %v174 = vld [vmem:[%s165 + $0x20] sm:$0xff]
      %v175 = vld [vmem:[%s1] sm:$0xff]
      %v176 = vld [vmem:[%s1 + $0x8] sm:$0xff]
      %v177 = vld [vmem:[%s1 + $0x10] sm:$0xff]
      %v178 = vld [vmem:[%s1 + $0x18] sm:$0xff]
      %v179 = vld [vmem:[%s165 + $0x10] sm:$0xff]
      %v180 = vld [vmem:[%s165 + $0x28] sm:$0xff]
      %s181 = scalar_lea.vmem %s1, 32
      %v182 = vld [vmem:[%s181] sm:$0xff]
      %v183 = vld [vmem:[%s181 + $0x8] sm:$0xff]
      %v184 = vld [vmem:[%s181 + $0x10] sm:$0xff]
      %v185 = vld [vmem:[%s181 + $0x18] sm:$0xff]
      %192 = vrot.lane.b32.xlu0 %v171, 127
      %v193 = vpop.permute.xlu0 %192
      %194 = vrot.lane.b32.xlu0 %v172, 127
      %v195 = vpop.permute.xlu0 %194
      %196 = vrot.lane.b32.xlu0 %v179, 127
      %v197 = vpop.permute.xlu0 %196
      %198 = vrot.lane.b32.xlu0 %v173, 127
      %v199 = vpop.permute.xlu0 %198
      %200 = vrot.lane.b32.xlu0 %v174, 127
      %v201 = vpop.permute.xlu0 %200
      %202 = vrot.lane.b32.xlu0 %v180, 127
      %v203 = vpop.permute.xlu0 %202
      %vm204 = vcmask 1039360
      %v205 = vsel %vm204, %v193, %v195
      %v206 = vsel %vm204, %v195, %v197
      %v207 = vsel %vm204, %v199, %v201
      %v208 = vsel %vm204, %v201, %v203
      %vm213 = vcmask 130048
      %v215 = vsel %vm213, %v182, 0
      %v218 = vsel %vm213, %v183, 0
      %v221 = vsel %vm213, %v184, 0
      %v224 = vsel %vm213, %v185, 0
      %226 = vmatpush.msra.mxu0 0.0
      %227 = vmatpush.msra.mxu0 0.0
      %228 = vmatpush.msra.mxu0 0.0
      %229 = vmatpush.msra.mxu0 0.0
      %230 = vmatpush.msra.mxu0 0.0
      %231 = vmatpush.msra.mxu0 0.0
      %232 = vmatpush.msra.mxu0 0.0
      %233 = vmatpush.msra.mxu0 0.0
      %234 = vmatpush.msra.mxu0 0.0
      %235 = vmatpush.msra.mxu0 0.0
      %236 = vmatpush.msra.mxu0 0.0
      %237 = vmatpush.msra.mxu0 0.0
      %238 = vmatpush.msra.mxu0 0.0
      %239 = vmatpush.msra.mxu0 0.0
      %v240 = vand.u32 %v207, 4294901760
      %241 = vmatpush.msra.mxu0 %v240
      %v242 = vand.u32 %v205, 4294901760
      %243 = vmatpush.msra.mxu0 %v242
      %v244 = vand.u32 %v215, 4294901760
      %v245 = vsub.f32 %v215, %v244
      %v246 = vand.u32 %v245, 4294901760
      %v247 = vsub.f32 %v245, %v246
      %v248 = vand.u32 %v247, 4294901760
      %249 = vmatmul.f32.gmra.mxu0 %v248
      %v250 = vpop.f32.mrf.mxu0
      %v251 = vadd.f32 0.0, %v250
      %v252 = vand.u32 %v218, 4294901760
      %v253 = vsub.f32 %v218, %v252
      %v254 = vand.u32 %v253, 4294901760
      %v255 = vsub.f32 %v253, %v254
      %v256 = vand.u32 %v255, 4294901760
      %257 = vmatmul.f32.gmra.mxu0 %v256
      %v258 = vpop.f32.mrf.mxu0
      %v259 = vadd.f32 0.0, %v258
      %v260 = vand.u32 %v221, 4294901760
      %v261 = vsub.f32 %v221, %v260
      %v262 = vand.u32 %v261, 4294901760
      %v263 = vsub.f32 %v261, %v262
      %v264 = vand.u32 %v263, 4294901760
      %265 = vmatmul.f32.gmra.mxu0 %v264
      %v266 = vpop.f32.mrf.mxu0
      %v267 = vadd.f32 0.0, %v266
      %v268 = vand.u32 %v224, 4294901760
      %v269 = vsub.f32 %v224, %v268
      %v270 = vand.u32 %v269, 4294901760
      %v271 = vsub.f32 %v269, %v270
      %v272 = vand.u32 %v271, 4294901760
      %273 = vmatmul.f32.gmra.mxu0 %v272
      %v274 = vpop.f32.mrf.mxu0
      %v275 = vadd.f32 0.0, %v274
      %276 = vdwg.mxu0
      %277 = vmatpush.msra.mxu0 0.0
      %278 = vmatpush.msra.mxu0 0.0
      %279 = vmatpush.msra.mxu0 0.0
      %280 = vmatpush.msra.mxu0 0.0
      %281 = vmatpush.msra.mxu0 0.0
      %282 = vmatpush.msra.mxu0 0.0
      %283 = vmatpush.msra.mxu0 0.0
      %284 = vmatpush.msra.mxu0 0.0
      %285 = vmatpush.msra.mxu0 0.0
      %286 = vmatpush.msra.mxu0 0.0
      %287 = vmatpush.msra.mxu0 0.0
      %288 = vmatpush.msra.mxu0 0.0
      %289 = vmatpush.msra.mxu0 0.0
      %290 = vmatpush.msra.mxu0 0.0
      %v291 = vand.u32 %v207, 4294901760
      %v292 = vsub.f32 %v207, %v291
      %v293 = vand.u32 %v292, 4294901760
      %v294 = vsub.f32 %v292, %v293
      %v295 = vand.u32 %v294, 4294901760
      %296 = vmatpush.msra.mxu0 %v295
      %v297 = vand.u32 %v205, 4294901760
      %v298 = vsub.f32 %v205, %v297
      %v299 = vand.u32 %v298, 4294901760
      %v300 = vsub.f32 %v298, %v299
      %v301 = vand.u32 %v300, 4294901760
      %302 = vmatpush.msra.mxu0 %v301
      %v303 = vand.u32 %v215, 4294901760
      %304 = vmatmul.f32.gmra.mxu0 %v303
      %v305 = vpop.f32.mrf.mxu0
      %v306 = vadd.f32 %v251, %v305
      %v307 = vand.u32 %v218, 4294901760
      %308 = vmatmul.f32.gmra.mxu0 %v307
      %v309 = vpop.f32.mrf.mxu0
      %v310 = vadd.f32 %v259, %v309
      %v311 = vand.u32 %v221, 4294901760
      %312 = vmatmul.f32.gmra.mxu0 %v311
      %v313 = vpop.f32.mrf.mxu0
      %v314 = vadd.f32 %v267, %v313
      %v315 = vand.u32 %v224, 4294901760
      %316 = vmatmul.f32.gmra.mxu0 %v315
      %v317 = vpop.f32.mrf.mxu0
      %v318 = vadd.f32 %v275, %v317
      %319 = vdwg.mxu0
      %320 = vmatpush.msra.mxu0 0.0
      %321 = vmatpush.msra.mxu0 0.0
      %322 = vmatpush.msra.mxu0 0.0
      %323 = vmatpush.msra.mxu0 0.0
      %324 = vmatpush.msra.mxu0 0.0
      %325 = vmatpush.msra.mxu0 0.0
      %326 = vmatpush.msra.mxu0 0.0
      %327 = vmatpush.msra.mxu0 0.0
      %328 = vmatpush.msra.mxu0 0.0
      %329 = vmatpush.msra.mxu0 0.0
      %330 = vmatpush.msra.mxu0 0.0
      %331 = vmatpush.msra.mxu0 0.0
      %332 = vmatpush.msra.mxu0 0.0
      %333 = vmatpush.msra.mxu0 0.0
      %v334 = vand.u32 %v207, 4294901760
      %v335 = vsub.f32 %v207, %v334
      %336 = vmatpush.msra.mxu0 %v335
      %v337 = vand.u32 %v205, 4294901760
      %v338 = vsub.f32 %v205, %v337
      %339 = vmatpush.msra.mxu0 %v338
      %v340 = vand.u32 %v215, 4294901760
      %v341 = vsub.f32 %v215, %v340
      %342 = vmatmul.f32.gmra.mxu0 %v341
      %v343 = vpop.f32.mrf.mxu0
      %v344 = vadd.f32 %v306, %v343
      %v345 = vand.u32 %v218, 4294901760
      %v346 = vsub.f32 %v218, %v345
      %347 = vmatmul.f32.gmra.mxu0 %v346
      %v348 = vpop.f32.mrf.mxu0
      %v349 = vadd.f32 %v310, %v348
      %v350 = vand.u32 %v221, 4294901760
      %v351 = vsub.f32 %v221, %v350
      %352 = vmatmul.f32.gmra.mxu0 %v351
      %v353 = vpop.f32.mrf.mxu0
      %v354 = vadd.f32 %v314, %v353
      %v355 = vand.u32 %v224, 4294901760
      %v356 = vsub.f32 %v224, %v355
      %357 = vmatmul.f32.gmra.mxu0 %v356
      %v358 = vpop.f32.mrf.mxu0
      %v359 = vadd.f32 %v318, %v358
      %360 = vdwg.mxu0
      %361 = vmatpush.msra.mxu0 0.0
      %362 = vmatpush.msra.mxu0 0.0
      %363 = vmatpush.msra.mxu0 0.0
      %364 = vmatpush.msra.mxu0 0.0
      %365 = vmatpush.msra.mxu0 0.0
      %366 = vmatpush.msra.mxu0 0.0
      %367 = vmatpush.msra.mxu0 0.0
      %368 = vmatpush.msra.mxu0 0.0
      %369 = vmatpush.msra.mxu0 0.0
      %370 = vmatpush.msra.mxu0 0.0
      %371 = vmatpush.msra.mxu0 0.0
      %372 = vmatpush.msra.mxu0 0.0
      %373 = vmatpush.msra.mxu0 0.0
      %374 = vmatpush.msra.mxu0 0.0
      %v375 = vand.u32 %v207, 4294901760
      %376 = vmatpush.msra.mxu0 %v375
      %v377 = vand.u32 %v205, 4294901760
      %378 = vmatpush.msra.mxu0 %v377
      %v379 = vand.u32 %v215, 4294901760
      %v380 = vsub.f32 %v215, %v379
      %v381 = vand.u32 %v380, 4294901760
      %382 = vmatmul.f32.gmra.mxu0 %v381
      %v383 = vpop.f32.mrf.mxu0
      %v384 = vadd.f32 %v344, %v383
      %v385 = vand.u32 %v218, 4294901760
      %v386 = vsub.f32 %v218, %v385
      %v387 = vand.u32 %v386, 4294901760
      %388 = vmatmul.f32.gmra.mxu0 %v387
      %v389 = vpop.f32.mrf.mxu0
      %v390 = vadd.f32 %v349, %v389
      %v391 = vand.u32 %v221, 4294901760
      %v392 = vsub.f32 %v221, %v391
      %v393 = vand.u32 %v392, 4294901760
      %394 = vmatmul.f32.gmra.mxu0 %v393
      %v395 = vpop.f32.mrf.mxu0
      %v396 = vadd.f32 %v354, %v395
      %v397 = vand.u32 %v224, 4294901760
      %v398 = vsub.f32 %v224, %v397
      %v399 = vand.u32 %v398, 4294901760
      %400 = vmatmul.f32.gmra.mxu0 %v399
      %v401 = vpop.f32.mrf.mxu0
      %v402 = vadd.f32 %v359, %v401
      %403 = vdwg.mxu0
      %404 = vmatpush.msra.mxu0 0.0
      %405 = vmatpush.msra.mxu0 0.0
      %406 = vmatpush.msra.mxu0 0.0
      %407 = vmatpush.msra.mxu0 0.0
      %408 = vmatpush.msra.mxu0 0.0
      %409 = vmatpush.msra.mxu0 0.0
      %410 = vmatpush.msra.mxu0 0.0
      %411 = vmatpush.msra.mxu0 0.0
      %412 = vmatpush.msra.mxu0 0.0
      %413 = vmatpush.msra.mxu0 0.0
      %414 = vmatpush.msra.mxu0 0.0
      %415 = vmatpush.msra.mxu0 0.0
      %416 = vmatpush.msra.mxu0 0.0
      %417 = vmatpush.msra.mxu0 0.0
      %v418 = vand.u32 %v207, 4294901760
      %v419 = vsub.f32 %v207, %v418
      %v420 = vand.u32 %v419, 4294901760
      %421 = vmatpush.msra.mxu0 %v420
      %v422 = vand.u32 %v205, 4294901760
      %v423 = vsub.f32 %v205, %v422
      %v424 = vand.u32 %v423, 4294901760
      %425 = vmatpush.msra.mxu0 %v424
      %v426 = vand.u32 %v215, 4294901760
      %427 = vmatmul.f32.gmra.mxu0 %v426
      %v428 = vpop.f32.mrf.mxu0
      %v429 = vadd.f32 %v384, %v428
      %v430 = vand.u32 %v218, 4294901760
      %431 = vmatmul.f32.gmra.mxu0 %v430
      %v432 = vpop.f32.mrf.mxu0
      %v433 = vadd.f32 %v390, %v432
      %v434 = vand.u32 %v221, 4294901760
      %435 = vmatmul.f32.gmra.mxu0 %v434
      %v436 = vpop.f32.mrf.mxu0
      %v437 = vadd.f32 %v396, %v436
      %v438 = vand.u32 %v224, 4294901760
      %439 = vmatmul.f32.gmra.mxu0 %v438
      %v440 = vpop.f32.mrf.mxu0
      %v441 = vadd.f32 %v402, %v440
      %442 = vdwg.mxu0
      %443 = vmatpush.msra.mxu0 0.0
      %444 = vmatpush.msra.mxu0 0.0
      %445 = vmatpush.msra.mxu0 0.0
      %446 = vmatpush.msra.mxu0 0.0
      %447 = vmatpush.msra.mxu0 0.0
      %448 = vmatpush.msra.mxu0 0.0
      %449 = vmatpush.msra.mxu0 0.0
      %450 = vmatpush.msra.mxu0 0.0
      %451 = vmatpush.msra.mxu0 0.0
      %452 = vmatpush.msra.mxu0 0.0
      %453 = vmatpush.msra.mxu0 0.0
      %454 = vmatpush.msra.mxu0 0.0
      %455 = vmatpush.msra.mxu0 0.0
      %456 = vmatpush.msra.mxu0 0.0
      %v457 = vand.u32 %v207, 4294901760
      %458 = vmatpush.msra.mxu0 %v457
      %v459 = vand.u32 %v205, 4294901760
      %460 = vmatpush.msra.mxu0 %v459
      %v461 = vand.u32 %v215, 4294901760
      %462 = vmatmul.f32.gmra.mxu0 %v461
      %v463 = vpop.f32.mrf.mxu0
      %v464 = vadd.f32 %v429, %v463
      %v465 = vand.u32 %v218, 4294901760
      %466 = vmatmul.f32.gmra.mxu0 %v465
      %v467 = vpop.f32.mrf.mxu0
      %v468 = vadd.f32 %v433, %v467
      %v469 = vand.u32 %v221, 4294901760
      %470 = vmatmul.f32.gmra.mxu0 %v469
      %v471 = vpop.f32.mrf.mxu0
      %v472 = vadd.f32 %v437, %v471
      %v473 = vand.u32 %v224, 4294901760
      %474 = vmatmul.f32.gmra.mxu0 %v473
      %v475 = vpop.f32.mrf.mxu0
      %v476 = vadd.f32 %v441, %v475
      %477 = vdwg.mxu0
      %478 = vmatpush.msra.mxu0 0.0
      %479 = vmatpush.msra.mxu0 0.0
      %480 = vmatpush.msra.mxu0 0.0
      %481 = vmatpush.msra.mxu0 0.0
      %482 = vmatpush.msra.mxu0 0.0
      %483 = vmatpush.msra.mxu0 0.0
      %484 = vmatpush.msra.mxu0 0.0
      %485 = vmatpush.msra.mxu0 0.0
      %486 = vmatpush.msra.mxu0 0.0
      %487 = vmatpush.msra.mxu0 0.0
      %488 = vmatpush.msra.mxu0 0.0
      %489 = vmatpush.msra.mxu0 0.0
      %490 = vmatpush.msra.mxu0 0.0
      %491 = vmatpush.msra.mxu0 0.0
      %v492 = vand.u32 %v208, 4294901760
      %493 = vmatpush.msra.mxu0 %v492
      %v494 = vand.u32 %v206, 4294901760
      %495 = vmatpush.msra.mxu0 %v494
      %v496 = vand.u32 %v215, 4294901760
      %v497 = vsub.f32 %v215, %v496
      %v498 = vand.u32 %v497, 4294901760
      %v499 = vsub.f32 %v497, %v498
      %v500 = vand.u32 %v499, 4294901760
      %501 = vmatmul.f32.gmra.mxu0 %v500
      %v502 = vpop.f32.mrf.mxu0
      %v503 = vadd.f32 0.0, %v502
      %v504 = vand.u32 %v218, 4294901760
      %v505 = vsub.f32 %v218, %v504
      %v506 = vand.u32 %v505, 4294901760
      %v507 = vsub.f32 %v505, %v506
      %v508 = vand.u32 %v507, 4294901760
      %509 = vmatmul.f32.gmra.mxu0 %v508
      %v510 = vpop.f32.mrf.mxu0
      %v511 = vadd.f32 0.0, %v510
      %v512 = vand.u32 %v221, 4294901760
      %v513 = vsub.f32 %v221, %v512
      %v514 = vand.u32 %v513, 4294901760
      %v515 = vsub.f32 %v513, %v514
      %v516 = vand.u32 %v515, 4294901760
      %517 = vmatmul.f32.gmra.mxu0 %v516
      %v518 = vpop.f32.mrf.mxu0
      %v519 = vadd.f32 0.0, %v518
      %v520 = vand.u32 %v224, 4294901760
      %v521 = vsub.f32 %v224, %v520
      %v522 = vand.u32 %v521, 4294901760
      %v523 = vsub.f32 %v521, %v522
      %v524 = vand.u32 %v523, 4294901760
      %525 = vmatmul.f32.gmra.mxu0 %v524
      %v526 = vpop.f32.mrf.mxu0
      %v527 = vadd.f32 0.0, %v526
      %528 = vdwg.mxu0
      %529 = vmatpush.msra.mxu0 0.0
      %530 = vmatpush.msra.mxu0 0.0
      %531 = vmatpush.msra.mxu0 0.0
      %532 = vmatpush.msra.mxu0 0.0
      %533 = vmatpush.msra.mxu0 0.0
      %534 = vmatpush.msra.mxu0 0.0
      %535 = vmatpush.msra.mxu0 0.0
      %536 = vmatpush.msra.mxu0 0.0
      %537 = vmatpush.msra.mxu0 0.0
      %538 = vmatpush.msra.mxu0 0.0
      %539 = vmatpush.msra.mxu0 0.0
      %540 = vmatpush.msra.mxu0 0.0
      %541 = vmatpush.msra.mxu0 0.0
      %542 = vmatpush.msra.mxu0 0.0
      %v543 = vand.u32 %v208, 4294901760
      %v544 = vsub.f32 %v208, %v543
      %v545 = vand.u32 %v544, 4294901760
      %v546 = vsub.f32 %v544, %v545
      %v547 = vand.u32 %v546, 4294901760
      %548 = vmatpush.msra.mxu0 %v547
      %v549 = vand.u32 %v206, 4294901760
      %v550 = vsub.f32 %v206, %v549
      %v551 = vand.u32 %v550, 4294901760
      %v552 = vsub.f32 %v550, %v551
      %v553 = vand.u32 %v552, 4294901760
      %554 = vmatpush.msra.mxu0 %v553
      %v555 = vand.u32 %v215, 4294901760
      %556 = vmatmul.f32.gmra.mxu0 %v555
      %v557 = vpop.f32.mrf.mxu0
      %v558 = vadd.f32 %v503, %v557
      %v559 = vand.u32 %v218, 4294901760
      %560 = vmatmul.f32.gmra.mxu0 %v559
      %v561 = vpop.f32.mrf.mxu0
      %v562 = vadd.f32 %v511, %v561
      %v563 = vand.u32 %v221, 4294901760
      %564 = vmatmul.f32.gmra.mxu0 %v563
      %v565 = vpop.f32.mrf.mxu0
      %v566 = vadd.f32 %v519, %v565
      %v567 = vand.u32 %v224, 4294901760
      %568 = vmatmul.f32.gmra.mxu0 %v567
      %v569 = vpop.f32.mrf.mxu0
      %v570 = vadd.f32 %v527, %v569
      %571 = vdwg.mxu0
      %572 = vmatpush.msra.mxu0 0.0
      %573 = vmatpush.msra.mxu0 0.0
      %574 = vmatpush.msra.mxu0 0.0
      %575 = vmatpush.msra.mxu0 0.0
      %576 = vmatpush.msra.mxu0 0.0
      %577 = vmatpush.msra.mxu0 0.0
      %578 = vmatpush.msra.mxu0 0.0
      %579 = vmatpush.msra.mxu0 0.0
      %580 = vmatpush.msra.mxu0 0.0
      %581 = vmatpush.msra.mxu0 0.0
      %582 = vmatpush.msra.mxu0 0.0
      %583 = vmatpush.msra.mxu0 0.0
      %584 = vmatpush.msra.mxu0 0.0
      %585 = vmatpush.msra.mxu0 0.0
      %v586 = vand.u32 %v208, 4294901760
      %v587 = vsub.f32 %v208, %v586
      %588 = vmatpush.msra.mxu0 %v587
      %v589 = vand.u32 %v206, 4294901760
      %v590 = vsub.f32 %v206, %v589
      %591 = vmatpush.msra.mxu0 %v590
      %v592 = vand.u32 %v215, 4294901760
      %v593 = vsub.f32 %v215, %v592
      %594 = vmatmul.f32.gmra.mxu0 %v593
      %v595 = vpop.f32.mrf.mxu0
      %v596 = vadd.f32 %v558, %v595
      %v597 = vand.u32 %v218, 4294901760
      %v598 = vsub.f32 %v218, %v597
      %599 = vmatmul.f32.gmra.mxu0 %v598
      %v600 = vpop.f32.mrf.mxu0
      %v601 = vadd.f32 %v562, %v600
      %v602 = vand.u32 %v221, 4294901760
      %v603 = vsub.f32 %v221, %v602
      %604 = vmatmul.f32.gmra.mxu0 %v603
      %v605 = vpop.f32.mrf.mxu0
      %v606 = vadd.f32 %v566, %v605
      %v607 = vand.u32 %v224, 4294901760
      %v608 = vsub.f32 %v224, %v607
      %609 = vmatmul.f32.gmra.mxu0 %v608
      %v610 = vpop.f32.mrf.mxu0
      %v611 = vadd.f32 %v570, %v610
      %612 = vdwg.mxu0
      %613 = vmatpush.msra.mxu0 0.0
      %614 = vmatpush.msra.mxu0 0.0
      %615 = vmatpush.msra.mxu0 0.0
      %616 = vmatpush.msra.mxu0 0.0
      %617 = vmatpush.msra.mxu0 0.0
      %618 = vmatpush.msra.mxu0 0.0
      %619 = vmatpush.msra.mxu0 0.0
      %620 = vmatpush.msra.mxu0 0.0
      %621 = vmatpush.msra.mxu0 0.0
      %622 = vmatpush.msra.mxu0 0.0
      %623 = vmatpush.msra.mxu0 0.0
      %624 = vmatpush.msra.mxu0 0.0
      %625 = vmatpush.msra.mxu0 0.0
      %626 = vmatpush.msra.mxu0 0.0
      %v627 = vand.u32 %v208, 4294901760
      %628 = vmatpush.msra.mxu0 %v627
      %v629 = vand.u32 %v206, 4294901760
      %630 = vmatpush.msra.mxu0 %v629
      %v631 = vand.u32 %v215, 4294901760
      %v632 = vsub.f32 %v215, %v631
      %v633 = vand.u32 %v632, 4294901760
      %634 = vmatmul.f32.gmra.mxu0 %v633
      %v635 = vpop.f32.mrf.mxu0
      %v636 = vadd.f32 %v596, %v635
      %v637 = vand.u32 %v218, 4294901760
      %v638 = vsub.f32 %v218, %v637
      %v639 = vand.u32 %v638, 4294901760
      %640 = vmatmul.f32.gmra.mxu0 %v639
      %v641 = vpop.f32.mrf.mxu0
      %v642 = vadd.f32 %v601, %v641
      %v643 = vand.u32 %v221, 4294901760
      %v644 = vsub.f32 %v221, %v643
      %v645 = vand.u32 %v644, 4294901760
      %646 = vmatmul.f32.gmra.mxu0 %v645
      %v647 = vpop.f32.mrf.mxu0
      %v648 = vadd.f32 %v606, %v647
      %v649 = vand.u32 %v224, 4294901760
      %v650 = vsub.f32 %v224, %v649
      %v651 = vand.u32 %v650, 4294901760
      %652 = vmatmul.f32.gmra.mxu0 %v651
      %v653 = vpop.f32.mrf.mxu0
      %v654 = vadd.f32 %v611, %v653
      %655 = vdwg.mxu0
      %656 = vmatpush.msra.mxu0 0.0
      %657 = vmatpush.msra.mxu0 0.0
      %658 = vmatpush.msra.mxu0 0.0
      %659 = vmatpush.msra.mxu0 0.0
      %660 = vmatpush.msra.mxu0 0.0
      %661 = vmatpush.msra.mxu0 0.0
      %662 = vmatpush.msra.mxu0 0.0
      %663 = vmatpush.msra.mxu0 0.0
      %664 = vmatpush.msra.mxu0 0.0
      %665 = vmatpush.msra.mxu0 0.0
      %666 = vmatpush.msra.mxu0 0.0
      %667 = vmatpush.msra.mxu0 0.0
      %668 = vmatpush.msra.mxu0 0.0
      %669 = vmatpush.msra.mxu0 0.0
      %v670 = vand.u32 %v208, 4294901760
      %v671 = vsub.f32 %v208, %v670
      %v672 = vand.u32 %v671, 4294901760
      %673 = vmatpush.msra.mxu0 %v672
      %v674 = vand.u32 %v206, 4294901760
      %v675 = vsub.f32 %v206, %v674
      %v676 = vand.u32 %v675, 4294901760
      %677 = vmatpush.msra.mxu0 %v676
      %v678 = vand.u32 %v215, 4294901760
      %679 = vmatmul.f32.gmra.mxu0 %v678
      %v680 = vpop.f32.mrf.mxu0
      %v681 = vadd.f32 %v636, %v680
      %v682 = vand.u32 %v218, 4294901760
      %683 = vmatmul.f32.gmra.mxu0 %v682
      %v684 = vpop.f32.mrf.mxu0
      %v685 = vadd.f32 %v642, %v684
      %v686 = vand.u32 %v221, 4294901760
      %687 = vmatmul.f32.gmra.mxu0 %v686
      %v688 = vpop.f32.mrf.mxu0
      %v689 = vadd.f32 %v648, %v688
      %v690 = vand.u32 %v224, 4294901760
      %691 = vmatmul.f32.gmra.mxu0 %v690
      %v692 = vpop.f32.mrf.mxu0
      %v693 = vadd.f32 %v654, %v692
      %694 = vdwg.mxu0
      %695 = vmatpush.msra.mxu0 0.0
      %696 = vmatpush.msra.mxu0 0.0
      %697 = vmatpush.msra.mxu0 0.0
      %698 = vmatpush.msra.mxu0 0.0
      %699 = vmatpush.msra.mxu0 0.0
      %700 = vmatpush.msra.mxu0 0.0
      %701 = vmatpush.msra.mxu0 0.0
      %702 = vmatpush.msra.mxu0 0.0
      %703 = vmatpush.msra.mxu0 0.0
      %704 = vmatpush.msra.mxu0 0.0
      %705 = vmatpush.msra.mxu0 0.0
      %706 = vmatpush.msra.mxu0 0.0
      %707 = vmatpush.msra.mxu0 0.0
      %708 = vmatpush.msra.mxu0 0.0
      %v709 = vand.u32 %v208, 4294901760
      %710 = vmatpush.msra.mxu0 %v709
      %v711 = vand.u32 %v206, 4294901760
      %712 = vmatpush.msra.mxu0 %v711
      %v713 = vand.u32 %v215, 4294901760
      %714 = vmatmul.f32.gmra.mxu0 %v713
      %v715 = vpop.f32.mrf.mxu0
      %v716 = vadd.f32 %v681, %v715
      %v717 = vand.u32 %v218, 4294901760
      %718 = vmatmul.f32.gmra.mxu0 %v717
      %v719 = vpop.f32.mrf.mxu0
      %v720 = vadd.f32 %v685, %v719
      %v721 = vand.u32 %v221, 4294901760
      %722 = vmatmul.f32.gmra.mxu0 %v721
      %v723 = vpop.f32.mrf.mxu0
      %v724 = vadd.f32 %v689, %v723
      %v725 = vand.u32 %v224, 4294901760
      %726 = vmatmul.f32.gmra.mxu0 %v725
      %v727 = vpop.f32.mrf.mxu0
      %v728 = vadd.f32 %v693, %v727
      %729 = vdwg.mxu0
      %v731 = vsel %vm213, %v175, 0
      %v734 = vsel %vm213, %v176, 0
      %v737 = vsel %vm213, %v177, 0
      %v740 = vsel %vm213, %v178, 0
      %742 = vmatpush.msra.mxu0 0.0
      %743 = vmatpush.msra.mxu0 0.0
      %744 = vmatpush.msra.mxu0 0.0
      %745 = vmatpush.msra.mxu0 0.0
      %746 = vmatpush.msra.mxu0 0.0
      %747 = vmatpush.msra.mxu0 0.0
      %748 = vmatpush.msra.mxu0 0.0
      %749 = vmatpush.msra.mxu0 0.0
      %750 = vmatpush.msra.mxu0 0.0
      %751 = vmatpush.msra.mxu0 0.0
      %752 = vmatpush.msra.mxu0 0.0
      %753 = vmatpush.msra.mxu0 0.0
      %754 = vmatpush.msra.mxu0 0.0
      %755 = vmatpush.msra.mxu0 0.0
      %v756 = vand.u32 %v173, 4294901760
      %757 = vmatpush.msra.mxu0 %v756
      %v758 = vand.u32 %v171, 4294901760
      %759 = vmatpush.msra.mxu0 %v758
      %v760 = vand.u32 %v731, 4294901760
      %v761 = vsub.f32 %v731, %v760
      %v762 = vand.u32 %v761, 4294901760
      %v763 = vsub.f32 %v761, %v762
      %v764 = vand.u32 %v763, 4294901760
      %765 = vmatmul.f32.gmra.mxu0 %v764
      %v766 = vpop.f32.mrf.mxu0
      %v767 = vadd.f32 %v464, %v766
      %v768 = vand.u32 %v734, 4294901760
      %v769 = vsub.f32 %v734, %v768
      %v770 = vand.u32 %v769, 4294901760
      %v771 = vsub.f32 %v769, %v770
      %v772 = vand.u32 %v771, 4294901760
      %773 = vmatmul.f32.gmra.mxu0 %v772
      %v774 = vpop.f32.mrf.mxu0
      %v775 = vadd.f32 %v468, %v774
      %v776 = vand.u32 %v737, 4294901760
      %v777 = vsub.f32 %v737, %v776
      %v778 = vand.u32 %v777, 4294901760
      %v779 = vsub.f32 %v777, %v778
      %v780 = vand.u32 %v779, 4294901760
      %781 = vmatmul.f32.gmra.mxu0 %v780
      %v782 = vpop.f32.mrf.mxu0
      %v783 = vadd.f32 %v472, %v782
      %v784 = vand.u32 %v740, 4294901760
      %v785 = vsub.f32 %v740, %v784
      %v786 = vand.u32 %v785, 4294901760
      %v787 = vsub.f32 %v785, %v786
      %v788 = vand.u32 %v787, 4294901760
      %789 = vmatmul.f32.gmra.mxu0 %v788
      %v790 = vpop.f32.mrf.mxu0
      %v791 = vadd.f32 %v476, %v790
      %792 = vdwg.mxu0
      %793 = vmatpush.msra.mxu0 0.0
      %794 = vmatpush.msra.mxu0 0.0
      %795 = vmatpush.msra.mxu0 0.0
      %796 = vmatpush.msra.mxu0 0.0
      %797 = vmatpush.msra.mxu0 0.0
      %798 = vmatpush.msra.mxu0 0.0
      %799 = vmatpush.msra.mxu0 0.0
      %800 = vmatpush.msra.mxu0 0.0
      %801 = vmatpush.msra.mxu0 0.0
      %802 = vmatpush.msra.mxu0 0.0
      %803 = vmatpush.msra.mxu0 0.0
      %804 = vmatpush.msra.mxu0 0.0
      %805 = vmatpush.msra.mxu0 0.0
      %806 = vmatpush.msra.mxu0 0.0
      %v807 = vand.u32 %v173, 4294901760
      %v808 = vsub.f32 %v173, %v807
      %v809 = vand.u32 %v808, 4294901760
      %v810 = vsub.f32 %v808, %v809
      %v811 = vand.u32 %v810, 4294901760
      %812 = vmatpush.msra.mxu0 %v811
      %v813 = vand.u32 %v171, 4294901760
      %v814 = vsub.f32 %v171, %v813
      %v815 = vand.u32 %v814, 4294901760
      %v816 = vsub.f32 %v814, %v815
      %v817 = vand.u32 %v816, 4294901760
      %818 = vmatpush.msra.mxu0 %v817
      %v819 = vand.u32 %v731, 4294901760
      %820 = vmatmul.f32.gmra.mxu0 %v819
      %v821 = vpop.f32.mrf.mxu0
      %v822 = vadd.f32 %v767, %v821
      %v823 = vand.u32 %v734, 4294901760
      %824 = vmatmul.f32.gmra.mxu0 %v823
      %v825 = vpop.f32.mrf.mxu0
      %v826 = vadd.f32 %v775, %v825
      %v827 = vand.u32 %v737, 4294901760
      %828 = vmatmul.f32.gmra.mxu0 %v827
      %v829 = vpop.f32.mrf.mxu0
      %v830 = vadd.f32 %v783, %v829
      %v831 = vand.u32 %v740, 4294901760
      %832 = vmatmul.f32.gmra.mxu0 %v831
      %v833 = vpop.f32.mrf.mxu0
      %v834 = vadd.f32 %v791, %v833
      %835 = vdwg.mxu0
      %836 = vmatpush.msra.mxu0 0.0
      %837 = vmatpush.msra.mxu0 0.0
      %838 = vmatpush.msra.mxu0 0.0
      %839 = vmatpush.msra.mxu0 0.0
      %840 = vmatpush.msra.mxu0 0.0
      %841 = vmatpush.msra.mxu0 0.0
      %842 = vmatpush.msra.mxu0 0.0
      %843 = vmatpush.msra.mxu0 0.0
      %844 = vmatpush.msra.mxu0 0.0
      %845 = vmatpush.msra.mxu0 0.0
      %846 = vmatpush.msra.mxu0 0.0
      %847 = vmatpush.msra.mxu0 0.0
      %848 = vmatpush.msra.mxu0 0.0
      %849 = vmatpush.msra.mxu0 0.0
      %v850 = vand.u32 %v173, 4294901760
      %v851 = vsub.f32 %v173, %v850
      %852 = vmatpush.msra.mxu0 %v851
      %v853 = vand.u32 %v171, 4294901760
      %v854 = vsub.f32 %v171, %v853
      %855 = vmatpush.msra.mxu0 %v854
      %v856 = vand.u32 %v731, 4294901760
      %v857 = vsub.f32 %v731, %v856
      %858 = vmatmul.f32.gmra.mxu0 %v857
      %v859 = vpop.f32.mrf.mxu0
      %v860 = vadd.f32 %v822, %v859
      %v861 = vand.u32 %v734, 4294901760
      %v862 = vsub.f32 %v734, %v861
      %863 = vmatmul.f32.gmra.mxu0 %v862
      %v864 = vpop.f32.mrf.mxu0
      %v865 = vadd.f32 %v826, %v864
      %v866 = vand.u32 %v737, 4294901760
      %v867 = vsub.f32 %v737, %v866
      %868 = vmatmul.f32.gmra.mxu0 %v867
      %v869 = vpop.f32.mrf.mxu0
      %v870 = vadd.f32 %v830, %v869
      %v871 = vand.u32 %v740, 4294901760
      %v872 = vsub.f32 %v740, %v871
      %873 = vmatmul.f32.gmra.mxu0 %v872
      %v874 = vpop.f32.mrf.mxu0
      %v875 = vadd.f32 %v834, %v874
      %876 = vdwg.mxu0
      %877 = vmatpush.msra.mxu0 0.0
      %878 = vmatpush.msra.mxu0 0.0
      %879 = vmatpush.msra.mxu0 0.0
      %880 = vmatpush.msra.mxu0 0.0
      %881 = vmatpush.msra.mxu0 0.0
      %882 = vmatpush.msra.mxu0 0.0
      %883 = vmatpush.msra.mxu0 0.0
      %884 = vmatpush.msra.mxu0 0.0
      %885 = vmatpush.msra.mxu0 0.0
      %886 = vmatpush.msra.mxu0 0.0
      %887 = vmatpush.msra.mxu0 0.0
      %888 = vmatpush.msra.mxu0 0.0
      %889 = vmatpush.msra.mxu0 0.0
      %890 = vmatpush.msra.mxu0 0.0
      %v891 = vand.u32 %v173, 4294901760
      %892 = vmatpush.msra.mxu0 %v891
      %v893 = vand.u32 %v171, 4294901760
      %894 = vmatpush.msra.mxu0 %v893
      %v895 = vand.u32 %v731, 4294901760
      %v896 = vsub.f32 %v731, %v895
      %v897 = vand.u32 %v896, 4294901760
      %898 = vmatmul.f32.gmra.mxu0 %v897
      %v899 = vpop.f32.mrf.mxu0
      %v900 = vadd.f32 %v860, %v899
      %v901 = vand.u32 %v734, 4294901760
      %v902 = vsub.f32 %v734, %v901
      %v903 = vand.u32 %v902, 4294901760
      %904 = vmatmul.f32.gmra.mxu0 %v903
      %v905 = vpop.f32.mrf.mxu0
      %v906 = vadd.f32 %v865, %v905
      %v907 = vand.u32 %v737, 4294901760
      %v908 = vsub.f32 %v737, %v907
      %v909 = vand.u32 %v908, 4294901760
      %910 = vmatmul.f32.gmra.mxu0 %v909
      %v911 = vpop.f32.mrf.mxu0
      %v912 = vadd.f32 %v870, %v911
      %v913 = vand.u32 %v740, 4294901760
      %v914 = vsub.f32 %v740, %v913
      %v915 = vand.u32 %v914, 4294901760
      %916 = vmatmul.f32.gmra.mxu0 %v915
      %v917 = vpop.f32.mrf.mxu0
      %v918 = vadd.f32 %v875, %v917
      %919 = vdwg.mxu0
      %920 = vmatpush.msra.mxu0 0.0
      %921 = vmatpush.msra.mxu0 0.0
      %922 = vmatpush.msra.mxu0 0.0
      %923 = vmatpush.msra.mxu0 0.0
      %924 = vmatpush.msra.mxu0 0.0
      %925 = vmatpush.msra.mxu0 0.0
      %926 = vmatpush.msra.mxu0 0.0
      %927 = vmatpush.msra.mxu0 0.0
      %928 = vmatpush.msra.mxu0 0.0
      %929 = vmatpush.msra.mxu0 0.0
      %930 = vmatpush.msra.mxu0 0.0
      %931 = vmatpush.msra.mxu0 0.0
      %932 = vmatpush.msra.mxu0 0.0
      %933 = vmatpush.msra.mxu0 0.0
      %v934 = vand.u32 %v173, 4294901760
      %v935 = vsub.f32 %v173, %v934
      %v936 = vand.u32 %v935, 4294901760
      %937 = vmatpush.msra.mxu0 %v936
      %v938 = vand.u32 %v171, 4294901760
      %v939 = vsub.f32 %v171, %v938
      %v940 = vand.u32 %v939, 4294901760
      %941 = vmatpush.msra.mxu0 %v940
      %v942 = vand.u32 %v731, 4294901760
      %943 = vmatmul.f32.gmra.mxu0 %v942
      %v944 = vpop.f32.mrf.mxu0
      %v945 = vadd.f32 %v900, %v944
      %v946 = vand.u32 %v734, 4294901760
      %947 = vmatmul.f32.gmra.mxu0 %v946
      %v948 = vpop.f32.mrf.mxu0
      %v949 = vadd.f32 %v906, %v948
      %v950 = vand.u32 %v737, 4294901760
      %951 = vmatmul.f32.gmra.mxu0 %v950
      %v952 = vpop.f32.mrf.mxu0
      %v953 = vadd.f32 %v912, %v952
      %v954 = vand.u32 %v740, 4294901760
      %955 = vmatmul.f32.gmra.mxu0 %v954
      %v956 = vpop.f32.mrf.mxu0
      %v957 = vadd.f32 %v918, %v956
      %958 = vdwg.mxu0
      %959 = vmatpush.msra.mxu0 0.0
      %960 = vmatpush.msra.mxu0 0.0
      %961 = vmatpush.msra.mxu0 0.0
      %962 = vmatpush.msra.mxu0 0.0
      %963 = vmatpush.msra.mxu0 0.0
      %964 = vmatpush.msra.mxu0 0.0
      %965 = vmatpush.msra.mxu0 0.0
      %966 = vmatpush.msra.mxu0 0.0
      %967 = vmatpush.msra.mxu0 0.0
      %968 = vmatpush.msra.mxu0 0.0
      %969 = vmatpush.msra.mxu0 0.0
      %970 = vmatpush.msra.mxu0 0.0
      %971 = vmatpush.msra.mxu0 0.0
      %972 = vmatpush.msra.mxu0 0.0
      %v973 = vand.u32 %v173, 4294901760
      %974 = vmatpush.msra.mxu0 %v973
      %v975 = vand.u32 %v171, 4294901760
      %976 = vmatpush.msra.mxu0 %v975
      %v977 = vand.u32 %v731, 4294901760
      %978 = vmatmul.f32.gmra.mxu0 %v977
      %v979 = vpop.f32.mrf.mxu0
      %v980 = vadd.f32 %v945, %v979
      %v981 = vand.u32 %v734, 4294901760
      %982 = vmatmul.f32.gmra.mxu0 %v981
      %v983 = vpop.f32.mrf.mxu0
      %v984 = vadd.f32 %v949, %v983
      %v985 = vand.u32 %v737, 4294901760
      %986 = vmatmul.f32.gmra.mxu0 %v985
      %v987 = vpop.f32.mrf.mxu0
      %v988 = vadd.f32 %v953, %v987
      %v989 = vand.u32 %v740, 4294901760
      %990 = vmatmul.f32.gmra.mxu0 %v989
      %v991 = vpop.f32.mrf.mxu0
      %v992 = vadd.f32 %v957, %v991
      %993 = vdwg.mxu0
      %994 = vmatpush.msra.mxu0 0.0
      %995 = vmatpush.msra.mxu0 0.0
      %996 = vmatpush.msra.mxu0 0.0
      %997 = vmatpush.msra.mxu0 0.0
      %998 = vmatpush.msra.mxu0 0.0
      %999 = vmatpush.msra.mxu0 0.0
      %1000 = vmatpush.msra.mxu0 0.0
      %1001 = vmatpush.msra.mxu0 0.0
      %1002 = vmatpush.msra.mxu0 0.0
      %1003 = vmatpush.msra.mxu0 0.0
      %1004 = vmatpush.msra.mxu0 0.0
      %1005 = vmatpush.msra.mxu0 0.0
      %1006 = vmatpush.msra.mxu0 0.0
      %1007 = vmatpush.msra.mxu0 0.0
      %v1008 = vand.u32 %v174, 4294901760
      %1009 = vmatpush.msra.mxu0 %v1008
      %v1010 = vand.u32 %v172, 4294901760
      %1011 = vmatpush.msra.mxu0 %v1010
      %v1012 = vand.u32 %v731, 4294901760
      %v1013 = vsub.f32 %v731, %v1012
      %v1014 = vand.u32 %v1013, 4294901760
      %v1015 = vsub.f32 %v1013, %v1014
      %v1016 = vand.u32 %v1015, 4294901760
      %1017 = vmatmul.f32.gmra.mxu0 %v1016
      %v1018 = vpop.f32.mrf.mxu0
      %v1019 = vadd.f32 %v716, %v1018
      %v1020 = vand.u32 %v734, 4294901760
      %v1021 = vsub.f32 %v734, %v1020
      %v1022 = vand.u32 %v1021, 4294901760
      %v1023 = vsub.f32 %v1021, %v1022
      %v1024 = vand.u32 %v1023, 4294901760
      %1025 = vmatmul.f32.gmra.mxu0 %v1024
      %v1026 = vpop.f32.mrf.mxu0
      %v1027 = vadd.f32 %v720, %v1026
      %v1028 = vand.u32 %v737, 4294901760
      %v1029 = vsub.f32 %v737, %v1028
      %v1030 = vand.u32 %v1029, 4294901760
      %v1031 = vsub.f32 %v1029, %v1030
      %v1032 = vand.u32 %v1031, 4294901760
      %1033 = vmatmul.f32.gmra.mxu0 %v1032
      %v1034 = vpop.f32.mrf.mxu0
      %v1035 = vadd.f32 %v724, %v1034
      %v1036 = vand.u32 %v740, 4294901760
      %v1037 = vsub.f32 %v740, %v1036
      %v1038 = vand.u32 %v1037, 4294901760
      %v1039 = vsub.f32 %v1037, %v1038
      %v1040 = vand.u32 %v1039, 4294901760
      %1041 = vmatmul.f32.gmra.mxu0 %v1040
      %v1042 = vpop.f32.mrf.mxu0
      %v1043 = vadd.f32 %v728, %v1042
      %1044 = vdwg.mxu0
      %1045 = vmatpush.msra.mxu0 0.0
      %1046 = vmatpush.msra.mxu0 0.0
      %1047 = vmatpush.msra.mxu0 0.0
      %1048 = vmatpush.msra.mxu0 0.0
      %1049 = vmatpush.msra.mxu0 0.0
      %1050 = vmatpush.msra.mxu0 0.0
      %1051 = vmatpush.msra.mxu0 0.0
      %1052 = vmatpush.msra.mxu0 0.0
      %1053 = vmatpush.msra.mxu0 0.0
      %1054 = vmatpush.msra.mxu0 0.0
      %1055 = vmatpush.msra.mxu0 0.0
      %1056 = vmatpush.msra.mxu0 0.0
      %1057 = vmatpush.msra.mxu0 0.0
      %1058 = vmatpush.msra.mxu0 0.0
      %v1059 = vand.u32 %v174, 4294901760
      %v1060 = vsub.f32 %v174, %v1059
      %v1061 = vand.u32 %v1060, 4294901760
      %v1062 = vsub.f32 %v1060, %v1061
      %v1063 = vand.u32 %v1062, 4294901760
      %1064 = vmatpush.msra.mxu0 %v1063
      %v1065 = vand.u32 %v172, 4294901760
      %v1066 = vsub.f32 %v172, %v1065
      %v1067 = vand.u32 %v1066, 4294901760
      %v1068 = vsub.f32 %v1066, %v1067
      %v1069 = vand.u32 %v1068, 4294901760
      %1070 = vmatpush.msra.mxu0 %v1069
      %v1071 = vand.u32 %v731, 4294901760
      %1072 = vmatmul.f32.gmra.mxu0 %v1071
      %v1073 = vpop.f32.mrf.mxu0
      %v1074 = vadd.f32 %v1019, %v1073
      %v1075 = vand.u32 %v734, 4294901760
      %1076 = vmatmul.f32.gmra.mxu0 %v1075
      %v1077 = vpop.f32.mrf.mxu0
      %v1078 = vadd.f32 %v1027, %v1077
      %v1079 = vand.u32 %v737, 4294901760
      %1080 = vmatmul.f32.gmra.mxu0 %v1079
      %v1081 = vpop.f32.mrf.mxu0
      %v1082 = vadd.f32 %v1035, %v1081
      %v1083 = vand.u32 %v740, 4294901760
      %1084 = vmatmul.f32.gmra.mxu0 %v1083
      %v1085 = vpop.f32.mrf.mxu0
      %v1086 = vadd.f32 %v1043, %v1085
      %1087 = vdwg.mxu0
      %1088 = vmatpush.msra.mxu0 0.0
      %1089 = vmatpush.msra.mxu0 0.0
      %1090 = vmatpush.msra.mxu0 0.0
      %1091 = vmatpush.msra.mxu0 0.0
      %1092 = vmatpush.msra.mxu0 0.0
      %1093 = vmatpush.msra.mxu0 0.0
      %1094 = vmatpush.msra.mxu0 0.0
      %1095 = vmatpush.msra.mxu0 0.0
      %1096 = vmatpush.msra.mxu0 0.0
      %1097 = vmatpush.msra.mxu0 0.0
      %1098 = vmatpush.msra.mxu0 0.0
      %1099 = vmatpush.msra.mxu0 0.0
      %1100 = vmatpush.msra.mxu0 0.0
      %1101 = vmatpush.msra.mxu0 0.0
      %v1102 = vand.u32 %v174, 4294901760
      %v1103 = vsub.f32 %v174, %v1102
      %1104 = vmatpush.msra.mxu0 %v1103
      %v1105 = vand.u32 %v172, 4294901760
      %v1106 = vsub.f32 %v172, %v1105
      %1107 = vmatpush.msra.mxu0 %v1106
      %v1108 = vand.u32 %v731, 4294901760
      %v1109 = vsub.f32 %v731, %v1108
      %1110 = vmatmul.f32.gmra.mxu0 %v1109
      %v1111 = vpop.f32.mrf.mxu0
      %v1112 = vadd.f32 %v1074, %v1111
      %v1113 = vand.u32 %v734, 4294901760
      %v1114 = vsub.f32 %v734, %v1113
      %1115 = vmatmul.f32.gmra.mxu0 %v1114
      %v1116 = vpop.f32.mrf.mxu0
      %v1117 = vadd.f32 %v1078, %v1116
      %v1118 = vand.u32 %v737, 4294901760
      %v1119 = vsub.f32 %v737, %v1118
      %1120 = vmatmul.f32.gmra.mxu0 %v1119
      %v1121 = vpop.f32.mrf.mxu0
      %v1122 = vadd.f32 %v1082, %v1121
      %v1123 = vand.u32 %v740, 4294901760
      %v1124 = vsub.f32 %v740, %v1123
      %1125 = vmatmul.f32.gmra.mxu0 %v1124
      %v1126 = vpop.f32.mrf.mxu0
      %v1127 = vadd.f32 %v1086, %v1126
      %1128 = vdwg.mxu0
      %1129 = vmatpush.msra.mxu0 0.0
      %1130 = vmatpush.msra.mxu0 0.0
      %1131 = vmatpush.msra.mxu0 0.0
      %1132 = vmatpush.msra.mxu0 0.0
      %1133 = vmatpush.msra.mxu0 0.0
      %1134 = vmatpush.msra.mxu0 0.0
      %1135 = vmatpush.msra.mxu0 0.0
      %1136 = vmatpush.msra.mxu0 0.0
      %1137 = vmatpush.msra.mxu0 0.0
      %1138 = vmatpush.msra.mxu0 0.0
      %1139 = vmatpush.msra.mxu0 0.0
      %1140 = vmatpush.msra.mxu0 0.0
      %1141 = vmatpush.msra.mxu0 0.0
      %1142 = vmatpush.msra.mxu0 0.0
      %v1143 = vand.u32 %v174, 4294901760
      %1144 = vmatpush.msra.mxu0 %v1143
      %v1145 = vand.u32 %v172, 4294901760
      %1146 = vmatpush.msra.mxu0 %v1145
      %v1147 = vand.u32 %v731, 4294901760
      %v1148 = vsub.f32 %v731, %v1147
      %v1149 = vand.u32 %v1148, 4294901760
      %1150 = vmatmul.f32.gmra.mxu0 %v1149
      %v1151 = vpop.f32.mrf.mxu0
      %v1152 = vadd.f32 %v1112, %v1151
      %v1153 = vand.u32 %v734, 4294901760
      %v1154 = vsub.f32 %v734, %v1153
      %v1155 = vand.u32 %v1154, 4294901760
      %1156 = vmatmul.f32.gmra.mxu0 %v1155
      %v1157 = vpop.f32.mrf.mxu0
      %v1158 = vadd.f32 %v1117, %v1157
      %v1159 = vand.u32 %v737, 4294901760
      %v1160 = vsub.f32 %v737, %v1159
      %v1161 = vand.u32 %v1160, 4294901760
      %1162 = vmatmul.f32.gmra.mxu0 %v1161
      %v1163 = vpop.f32.mrf.mxu0
      %v1164 = vadd.f32 %v1122, %v1163
      %v1165 = vand.u32 %v740, 4294901760
      %v1166 = vsub.f32 %v740, %v1165
      %v1167 = vand.u32 %v1166, 4294901760
      %1168 = vmatmul.f32.gmra.mxu0 %v1167
      %v1169 = vpop.f32.mrf.mxu0
      %v1170 = vadd.f32 %v1127, %v1169
      %1171 = vdwg.mxu0
      %1172 = vmatpush.msra.mxu0 0.0
      %1173 = vmatpush.msra.mxu0 0.0
      %1174 = vmatpush.msra.mxu0 0.0
      %1175 = vmatpush.msra.mxu0 0.0
      %1176 = vmatpush.msra.mxu0 0.0
      %1177 = vmatpush.msra.mxu0 0.0
      %1178 = vmatpush.msra.mxu0 0.0
      %1179 = vmatpush.msra.mxu0 0.0
      %1180 = vmatpush.msra.mxu0 0.0
      %1181 = vmatpush.msra.mxu0 0.0
      %1182 = vmatpush.msra.mxu0 0.0
      %1183 = vmatpush.msra.mxu0 0.0
      %1184 = vmatpush.msra.mxu0 0.0
      %1185 = vmatpush.msra.mxu0 0.0
      %v1186 = vand.u32 %v174, 4294901760
      %v1187 = vsub.f32 %v174, %v1186
      %v1188 = vand.u32 %v1187, 4294901760
      %1189 = vmatpush.msra.mxu0 %v1188
      %v1190 = vand.u32 %v172, 4294901760
      %v1191 = vsub.f32 %v172, %v1190
      %v1192 = vand.u32 %v1191, 4294901760
      %1193 = vmatpush.msra.mxu0 %v1192
      %v1194 = vand.u32 %v731, 4294901760
      %1195 = vmatmul.f32.gmra.mxu0 %v1194
      %v1196 = vpop.f32.mrf.mxu0
      %v1197 = vadd.f32 %v1152, %v1196
      %v1198 = vand.u32 %v734, 4294901760
      %1199 = vmatmul.f32.gmra.mxu0 %v1198
      %v1200 = vpop.f32.mrf.mxu0
      %v1201 = vadd.f32 %v1158, %v1200
      %v1202 = vand.u32 %v737, 4294901760
      %1203 = vmatmul.f32.gmra.mxu0 %v1202
      %v1204 = vpop.f32.mrf.mxu0
      %v1205 = vadd.f32 %v1164, %v1204
      %v1206 = vand.u32 %v740, 4294901760
      %1207 = vmatmul.f32.gmra.mxu0 %v1206
      %v1208 = vpop.f32.mrf.mxu0
      %v1209 = vadd.f32 %v1170, %v1208
      %1210 = vdwg.mxu0
      %1211 = vmatpush.msra.mxu0 0.0
      %1212 = vmatpush.msra.mxu0 0.0
      %1213 = vmatpush.msra.mxu0 0.0
      %1214 = vmatpush.msra.mxu0 0.0
      %1215 = vmatpush.msra.mxu0 0.0
      %1216 = vmatpush.msra.mxu0 0.0
      %1217 = vmatpush.msra.mxu0 0.0
      %1218 = vmatpush.msra.mxu0 0.0
      %1219 = vmatpush.msra.mxu0 0.0
      %1220 = vmatpush.msra.mxu0 0.0
      %1221 = vmatpush.msra.mxu0 0.0
      %1222 = vmatpush.msra.mxu0 0.0
      %1223 = vmatpush.msra.mxu0 0.0
      %1224 = vmatpush.msra.mxu0 0.0
      %v1225 = vand.u32 %v174, 4294901760
      %1226 = vmatpush.msra.mxu0 %v1225
      %v1227 = vand.u32 %v172, 4294901760
      %1228 = vmatpush.msra.mxu0 %v1227
      %v1229 = vand.u32 %v731, 4294901760
      %1230 = vmatmul.f32.gmra.mxu0 %v1229
      %v1231 = vpop.f32.mrf.mxu0
      %v1232 = vadd.f32 %v1197, %v1231
      %v1233 = vand.u32 %v734, 4294901760
      %1234 = vmatmul.f32.gmra.mxu0 %v1233
      %v1235 = vpop.f32.mrf.mxu0
      %v1236 = vadd.f32 %v1201, %v1235
      %v1237 = vand.u32 %v737, 4294901760
      %1238 = vmatmul.f32.gmra.mxu0 %v1237
      %v1239 = vpop.f32.mrf.mxu0
      %v1240 = vadd.f32 %v1205, %v1239
      %v1241 = vand.u32 %v740, 4294901760
      %1242 = vmatmul.f32.gmra.mxu0 %v1241
      %v1243 = vpop.f32.mrf.mxu0
      %v1244 = vadd.f32 %v1209, %v1243
      %1245 = vdwg.mxu0
      %s1246 = scalar_lea.vmem %s1, 64
      %v1247 = vld [vmem:[%s1246] sm:$0xff]
      %v1248 = vld [vmem:[%s1246 + $0x8] sm:$0xff]
      %v1249 = vld [vmem:[%s1246 + $0x10] sm:$0xff]
      %v1250 = vld [vmem:[%s1246 + $0x18] sm:$0xff]
      %1251 = vrot.lane.b32.xlu0 %v171, 126
      %v1252 = vpop.permute.xlu0 %1251
      %1253 = vrot.lane.b32.xlu0 %v172, 126
      %v1254 = vpop.permute.xlu0 %1253
      %1255 = vrot.lane.b32.xlu0 %v179, 126
      %v1256 = vpop.permute.xlu0 %1255
      %1257 = vrot.lane.b32.xlu0 %v173, 126
      %v1258 = vpop.permute.xlu0 %1257
      %1259 = vrot.lane.b32.xlu0 %v174, 126
      %v1260 = vpop.permute.xlu0 %1259
      %1261 = vrot.lane.b32.xlu0 %v180, 126
      %v1262 = vpop.permute.xlu0 %1261
      %vm1263 = vcmask 1031168
      %v1264 = vsel %vm1263, %v1252, %v1254
      %v1265 = vsel %vm1263, %v1254, %v1256
      %v1266 = vsel %vm1263, %v1258, %v1260
      %v1267 = vsel %vm1263, %v1260, %v1262
      %v1273 = vsel %vm213, %v1247, 0
      %v1276 = vsel %vm213, %v1248, 0
      %v1279 = vsel %vm213, %v1249, 0
      %v1282 = vsel %vm213, %v1250, 0
      %1284 = vmatpush.msra.mxu0 0.0
      %1285 = vmatpush.msra.mxu0 0.0
      %1286 = vmatpush.msra.mxu0 0.0
      %1287 = vmatpush.msra.mxu0 0.0
      %1288 = vmatpush.msra.mxu0 0.0
      %1289 = vmatpush.msra.mxu0 0.0
      %1290 = vmatpush.msra.mxu0 0.0
      %1291 = vmatpush.msra.mxu0 0.0
      %1292 = vmatpush.msra.mxu0 0.0
      %1293 = vmatpush.msra.mxu0 0.0
      %1294 = vmatpush.msra.mxu0 0.0
      %1295 = vmatpush.msra.mxu0 0.0
      %1296 = vmatpush.msra.mxu0 0.0
      %1297 = vmatpush.msra.mxu0 0.0
      %v1298 = vand.u32 %v1266, 4294901760
      %1299 = vmatpush.msra.mxu0 %v1298
      %v1300 = vand.u32 %v1264, 4294901760
      %1301 = vmatpush.msra.mxu0 %v1300
      %v1302 = vand.u32 %v1273, 4294901760
      %v1303 = vsub.f32 %v1273, %v1302
      %v1304 = vand.u32 %v1303, 4294901760
      %v1305 = vsub.f32 %v1303, %v1304
      %v1306 = vand.u32 %v1305, 4294901760
      %1307 = vmatmul.f32.gmra.mxu0 %v1306
      %v1308 = vpop.f32.mrf.mxu0
      %v1309 = vadd.f32 0.0, %v1308
      %v1310 = vand.u32 %v1276, 4294901760
      %v1311 = vsub.f32 %v1276, %v1310
      %v1312 = vand.u32 %v1311, 4294901760
      %v1313 = vsub.f32 %v1311, %v1312
      %v1314 = vand.u32 %v1313, 4294901760
      %1315 = vmatmul.f32.gmra.mxu0 %v1314
      %v1316 = vpop.f32.mrf.mxu0
      %v1317 = vadd.f32 0.0, %v1316
      %v1318 = vand.u32 %v1279, 4294901760
      %v1319 = vsub.f32 %v1279, %v1318
      %v1320 = vand.u32 %v1319, 4294901760
      %v1321 = vsub.f32 %v1319, %v1320
      %v1322 = vand.u32 %v1321, 4294901760
      %1323 = vmatmul.f32.gmra.mxu0 %v1322
      %v1324 = vpop.f32.mrf.mxu0
      %v1325 = vadd.f32 0.0, %v1324
      %v1326 = vand.u32 %v1282, 4294901760
      %v1327 = vsub.f32 %v1282, %v1326
      %v1328 = vand.u32 %v1327, 4294901760
      %v1329 = vsub.f32 %v1327, %v1328
      %v1330 = vand.u32 %v1329, 4294901760
      %1331 = vmatmul.f32.gmra.mxu0 %v1330
      %v1332 = vpop.f32.mrf.mxu0
      %v1333 = vadd.f32 0.0, %v1332
      %1334 = vdwg.mxu0
      %1335 = vmatpush.msra.mxu0 0.0
      %1336 = vmatpush.msra.mxu0 0.0
      %1337 = vmatpush.msra.mxu0 0.0
      %1338 = vmatpush.msra.mxu0 0.0
      %1339 = vmatpush.msra.mxu0 0.0
      %1340 = vmatpush.msra.mxu0 0.0
      %1341 = vmatpush.msra.mxu0 0.0
      %1342 = vmatpush.msra.mxu0 0.0
      %1343 = vmatpush.msra.mxu0 0.0
      %1344 = vmatpush.msra.mxu0 0.0
      %1345 = vmatpush.msra.mxu0 0.0
      %1346 = vmatpush.msra.mxu0 0.0
      %1347 = vmatpush.msra.mxu0 0.0
      %1348 = vmatpush.msra.mxu0 0.0
      %v1349 = vand.u32 %v1266, 4294901760
      %v1350 = vsub.f32 %v1266, %v1349
      %v1351 = vand.u32 %v1350, 4294901760
      %v1352 = vsub.f32 %v1350, %v1351
      %v1353 = vand.u32 %v1352, 4294901760
      %1354 = vmatpush.msra.mxu0 %v1353
      %v1355 = vand.u32 %v1264, 4294901760
      %v1356 = vsub.f32 %v1264, %v1355
      %v1357 = vand.u32 %v1356, 4294901760
      %v1358 = vsub.f32 %v1356, %v1357
      %v1359 = vand.u32 %v1358, 4294901760
      %1360 = vmatpush.msra.mxu0 %v1359
      %v1361 = vand.u32 %v1273, 4294901760
      %1362 = vmatmul.f32.gmra.mxu0 %v1361
      %v1363 = vpop.f32.mrf.mxu0
      %v1364 = vadd.f32 %v1309, %v1363
      %v1365 = vand.u32 %v1276, 4294901760
      %1366 = vmatmul.f32.gmra.mxu0 %v1365
      %v1367 = vpop.f32.mrf.mxu0
      %v1368 = vadd.f32 %v1317, %v1367
      %v1369 = vand.u32 %v1279, 4294901760
      %1370 = vmatmul.f32.gmra.mxu0 %v1369
      %v1371 = vpop.f32.mrf.mxu0
      %v1372 = vadd.f32 %v1325, %v1371
      %v1373 = vand.u32 %v1282, 4294901760
      %1374 = vmatmul.f32.gmra.mxu0 %v1373
      %v1375 = vpop.f32.mrf.mxu0
      %v1376 = vadd.f32 %v1333, %v1375
      %1377 = vdwg.mxu0
      %1378 = vmatpush.msra.mxu0 0.0
      %1379 = vmatpush.msra.mxu0 0.0
      %1380 = vmatpush.msra.mxu0 0.0
      %1381 = vmatpush.msra.mxu0 0.0
      %1382 = vmatpush.msra.mxu0 0.0
      %1383 = vmatpush.msra.mxu0 0.0
      %1384 = vmatpush.msra.mxu0 0.0
      %1385 = vmatpush.msra.mxu0 0.0
      %1386 = vmatpush.msra.mxu0 0.0
      %1387 = vmatpush.msra.mxu0 0.0
      %1388 = vmatpush.msra.mxu0 0.0
      %1389 = vmatpush.msra.mxu0 0.0
      %1390 = vmatpush.msra.mxu0 0.0
      %1391 = vmatpush.msra.mxu0 0.0
      %v1392 = vand.u32 %v1266, 4294901760
      %v1393 = vsub.f32 %v1266, %v1392
      %1394 = vmatpush.msra.mxu0 %v1393
      %v1395 = vand.u32 %v1264, 4294901760
      %v1396 = vsub.f32 %v1264, %v1395
      %1397 = vmatpush.msra.mxu0 %v1396
      %v1398 = vand.u32 %v1273, 4294901760
      %v1399 = vsub.f32 %v1273, %v1398
      %1400 = vmatmul.f32.gmra.mxu0 %v1399
      %v1401 = vpop.f32.mrf.mxu0
      %v1402 = vadd.f32 %v1364, %v1401
      %v1403 = vand.u32 %v1276, 4294901760
      %v1404 = vsub.f32 %v1276, %v1403
      %1405 = vmatmul.f32.gmra.mxu0 %v1404
      %v1406 = vpop.f32.mrf.mxu0
      %v1407 = vadd.f32 %v1368, %v1406
      %v1408 = vand.u32 %v1279, 4294901760
      %v1409 = vsub.f32 %v1279, %v1408
      %1410 = vmatmul.f32.gmra.mxu0 %v1409
      %v1411 = vpop.f32.mrf.mxu0
      %v1412 = vadd.f32 %v1372, %v1411
      %v1413 = vand.u32 %v1282, 4294901760
      %v1414 = vsub.f32 %v1282, %v1413
      %1415 = vmatmul.f32.gmra.mxu0 %v1414
      %v1416 = vpop.f32.mrf.mxu0
      %v1417 = vadd.f32 %v1376, %v1416
      %1418 = vdwg.mxu0
      %1419 = vmatpush.msra.mxu0 0.0
      %1420 = vmatpush.msra.mxu0 0.0
      %1421 = vmatpush.msra.mxu0 0.0
      %1422 = vmatpush.msra.mxu0 0.0
      %1423 = vmatpush.msra.mxu0 0.0
      %1424 = vmatpush.msra.mxu0 0.0
      %1425 = vmatpush.msra.mxu0 0.0
      %1426 = vmatpush.msra.mxu0 0.0
      %1427 = vmatpush.msra.mxu0 0.0
      %1428 = vmatpush.msra.mxu0 0.0
      %1429 = vmatpush.msra.mxu0 0.0
      %1430 = vmatpush.msra.mxu0 0.0
      %1431 = vmatpush.msra.mxu0 0.0
      %1432 = vmatpush.msra.mxu0 0.0
      %v1433 = vand.u32 %v1266, 4294901760
      %1434 = vmatpush.msra.mxu0 %v1433
      %v1435 = vand.u32 %v1264, 4294901760
      %1436 = vmatpush.msra.mxu0 %v1435
      %v1437 = vand.u32 %v1273, 4294901760
      %v1438 = vsub.f32 %v1273, %v1437
      %v1439 = vand.u32 %v1438, 4294901760
      %1440 = vmatmul.f32.gmra.mxu0 %v1439
      %v1441 = vpop.f32.mrf.mxu0
      %v1442 = vadd.f32 %v1402, %v1441
      %v1443 = vand.u32 %v1276, 4294901760
      %v1444 = vsub.f32 %v1276, %v1443
      %v1445 = vand.u32 %v1444, 4294901760
      %1446 = vmatmul.f32.gmra.mxu0 %v1445
      %v1447 = vpop.f32.mrf.mxu0
      %v1448 = vadd.f32 %v1407, %v1447
      %v1449 = vand.u32 %v1279, 4294901760
      %v1450 = vsub.f32 %v1279, %v1449
      %v1451 = vand.u32 %v1450, 4294901760
      %1452 = vmatmul.f32.gmra.mxu0 %v1451
      %v1453 = vpop.f32.mrf.mxu0
      %v1454 = vadd.f32 %v1412, %v1453
      %v1455 = vand.u32 %v1282, 4294901760
      %v1456 = vsub.f32 %v1282, %v1455
      %v1457 = vand.u32 %v1456, 4294901760
      %1458 = vmatmul.f32.gmra.mxu0 %v1457
      %v1459 = vpop.f32.mrf.mxu0
      %v1460 = vadd.f32 %v1417, %v1459
      %1461 = vdwg.mxu0
      %1462 = vmatpush.msra.mxu0 0.0
      %1463 = vmatpush.msra.mxu0 0.0
      %1464 = vmatpush.msra.mxu0 0.0
      %1465 = vmatpush.msra.mxu0 0.0
      %1466 = vmatpush.msra.mxu0 0.0
      %1467 = vmatpush.msra.mxu0 0.0
      %1468 = vmatpush.msra.mxu0 0.0
      %1469 = vmatpush.msra.mxu0 0.0
      %1470 = vmatpush.msra.mxu0 0.0
      %1471 = vmatpush.msra.mxu0 0.0
      %1472 = vmatpush.msra.mxu0 0.0
      %1473 = vmatpush.msra.mxu0 0.0
      %1474 = vmatpush.msra.mxu0 0.0
      %1475 = vmatpush.msra.mxu0 0.0
      %v1476 = vand.u32 %v1266, 4294901760
      %v1477 = vsub.f32 %v1266, %v1476
      %v1478 = vand.u32 %v1477, 4294901760
      %1479 = vmatpush.msra.mxu0 %v1478
      %v1480 = vand.u32 %v1264, 4294901760
      %v1481 = vsub.f32 %v1264, %v1480
      %v1482 = vand.u32 %v1481, 4294901760
      %1483 = vmatpush.msra.mxu0 %v1482
      %v1484 = vand.u32 %v1273, 4294901760
      %1485 = vmatmul.f32.gmra.mxu0 %v1484
      %v1486 = vpop.f32.mrf.mxu0
      %v1487 = vadd.f32 %v1442, %v1486
      %v1488 = vand.u32 %v1276, 4294901760
      %1489 = vmatmul.f32.gmra.mxu0 %v1488
      %v1490 = vpop.f32.mrf.mxu0
      %v1491 = vadd.f32 %v1448, %v1490
      %v1492 = vand.u32 %v1279, 4294901760
      %1493 = vmatmul.f32.gmra.mxu0 %v1492
      %v1494 = vpop.f32.mrf.mxu0
      %v1495 = vadd.f32 %v1454, %v1494
      %v1496 = vand.u32 %v1282, 4294901760
      %1497 = vmatmul.f32.gmra.mxu0 %v1496
      %v1498 = vpop.f32.mrf.mxu0
      %v1499 = vadd.f32 %v1460, %v1498
      %1500 = vdwg.mxu0
      %1501 = vmatpush.msra.mxu0 0.0
      %1502 = vmatpush.msra.mxu0 0.0
      %1503 = vmatpush.msra.mxu0 0.0
      %1504 = vmatpush.msra.mxu0 0.0
      %1505 = vmatpush.msra.mxu0 0.0
      %1506 = vmatpush.msra.mxu0 0.0
      %1507 = vmatpush.msra.mxu0 0.0
      %1508 = vmatpush.msra.mxu0 0.0
      %1509 = vmatpush.msra.mxu0 0.0
      %1510 = vmatpush.msra.mxu0 0.0
      %1511 = vmatpush.msra.mxu0 0.0
      %1512 = vmatpush.msra.mxu0 0.0
      %1513 = vmatpush.msra.mxu0 0.0
      %1514 = vmatpush.msra.mxu0 0.0
      %v1515 = vand.u32 %v1266, 4294901760
      %1516 = vmatpush.msra.mxu0 %v1515
      %v1517 = vand.u32 %v1264, 4294901760
      %1518 = vmatpush.msra.mxu0 %v1517
      %v1519 = vand.u32 %v1273, 4294901760
      %1520 = vmatmul.f32.gmra.mxu0 %v1519
      %v1521 = vpop.f32.mrf.mxu0
      %v1522 = vadd.f32 %v1487, %v1521
      %v1523 = vand.u32 %v1276, 4294901760
      %1524 = vmatmul.f32.gmra.mxu0 %v1523
      %v1525 = vpop.f32.mrf.mxu0
      %v1526 = vadd.f32 %v1491, %v1525
      %v1527 = vand.u32 %v1279, 4294901760
      %1528 = vmatmul.f32.gmra.mxu0 %v1527
      %v1529 = vpop.f32.mrf.mxu0
      %v1530 = vadd.f32 %v1495, %v1529
      %v1531 = vand.u32 %v1282, 4294901760
      %1532 = vmatmul.f32.gmra.mxu0 %v1531
      %v1533 = vpop.f32.mrf.mxu0
      %v1534 = vadd.f32 %v1499, %v1533
      %1535 = vdwg.mxu0
      %1536 = vmatpush.msra.mxu0 0.0
      %1537 = vmatpush.msra.mxu0 0.0
      %1538 = vmatpush.msra.mxu0 0.0
      %1539 = vmatpush.msra.mxu0 0.0
      %1540 = vmatpush.msra.mxu0 0.0
      %1541 = vmatpush.msra.mxu0 0.0
      %1542 = vmatpush.msra.mxu0 0.0
      %1543 = vmatpush.msra.mxu0 0.0
      %1544 = vmatpush.msra.mxu0 0.0
      %1545 = vmatpush.msra.mxu0 0.0
      %1546 = vmatpush.msra.mxu0 0.0
      %1547 = vmatpush.msra.mxu0 0.0
      %1548 = vmatpush.msra.mxu0 0.0
      %1549 = vmatpush.msra.mxu0 0.0
      %v1550 = vand.u32 %v1267, 4294901760
      %1551 = vmatpush.msra.mxu0 %v1550
      %v1552 = vand.u32 %v1265, 4294901760
      %1553 = vmatpush.msra.mxu0 %v1552
      %v1554 = vand.u32 %v1273, 4294901760
      %v1555 = vsub.f32 %v1273, %v1554
      %v1556 = vand.u32 %v1555, 4294901760
      %v1557 = vsub.f32 %v1555, %v1556
      %v1558 = vand.u32 %v1557, 4294901760
      %1559 = vmatmul.f32.gmra.mxu0 %v1558
      %v1560 = vpop.f32.mrf.mxu0
      %v1561 = vadd.f32 0.0, %v1560
      %v1562 = vand.u32 %v1276, 4294901760
      %v1563 = vsub.f32 %v1276, %v1562
      %v1564 = vand.u32 %v1563, 4294901760
      %v1565 = vsub.f32 %v1563, %v1564
      %v1566 = vand.u32 %v1565, 4294901760
      %1567 = vmatmul.f32.gmra.mxu0 %v1566
      %v1568 = vpop.f32.mrf.mxu0
      %v1569 = vadd.f32 0.0, %v1568
      %v1570 = vand.u32 %v1279, 4294901760
      %v1571 = vsub.f32 %v1279, %v1570
      %v1572 = vand.u32 %v1571, 4294901760
      %v1573 = vsub.f32 %v1571, %v1572
      %v1574 = vand.u32 %v1573, 4294901760
      %1575 = vmatmul.f32.gmra.mxu0 %v1574
      %v1576 = vpop.f32.mrf.mxu0
      %v1577 = vadd.f32 0.0, %v1576
      %v1578 = vand.u32 %v1282, 4294901760
      %v1579 = vsub.f32 %v1282, %v1578
      %v1580 = vand.u32 %v1579, 4294901760
      %v1581 = vsub.f32 %v1579, %v1580
      %v1582 = vand.u32 %v1581, 4294901760
      %1583 = vmatmul.f32.gmra.mxu0 %v1582
      %v1584 = vpop.f32.mrf.mxu0
      %v1585 = vadd.f32 0.0, %v1584
      %1586 = vdwg.mxu0
      %1587 = vmatpush.msra.mxu0 0.0
      %1588 = vmatpush.msra.mxu0 0.0
      %1589 = vmatpush.msra.mxu0 0.0
      %1590 = vmatpush.msra.mxu0 0.0
      %1591 = vmatpush.msra.mxu0 0.0
      %1592 = vmatpush.msra.mxu0 0.0
      %1593 = vmatpush.msra.mxu0 0.0
      %1594 = vmatpush.msra.mxu0 0.0
      %1595 = vmatpush.msra.mxu0 0.0
      %1596 = vmatpush.msra.mxu0 0.0
      %1597 = vmatpush.msra.mxu0 0.0
      %1598 = vmatpush.msra.mxu0 0.0
      %1599 = vmatpush.msra.mxu0 0.0
      %1600 = vmatpush.msra.mxu0 0.0
      %v1601 = vand.u32 %v1267, 4294901760
      %v1602 = vsub.f32 %v1267, %v1601
      %v1603 = vand.u32 %v1602, 4294901760
      %v1604 = vsub.f32 %v1602, %v1603
      %v1605 = vand.u32 %v1604, 4294901760
      %1606 = vmatpush.msra.mxu0 %v1605
      %v1607 = vand.u32 %v1265, 4294901760
      %v1608 = vsub.f32 %v1265, %v1607
      %v1609 = vand.u32 %v1608, 4294901760
      %v1610 = vsub.f32 %v1608, %v1609
      %v1611 = vand.u32 %v1610, 4294901760
      %1612 = vmatpush.msra.mxu0 %v1611
      %v1613 = vand.u32 %v1273, 4294901760
      %1614 = vmatmul.f32.gmra.mxu0 %v1613
      %v1615 = vpop.f32.mrf.mxu0
      %v1616 = vadd.f32 %v1561, %v1615
      %v1617 = vand.u32 %v1276, 4294901760
      %1618 = vmatmul.f32.gmra.mxu0 %v1617
      %v1619 = vpop.f32.mrf.mxu0
      %v1620 = vadd.f32 %v1569, %v1619
      %v1621 = vand.u32 %v1279, 4294901760
      %1622 = vmatmul.f32.gmra.mxu0 %v1621
      %v1623 = vpop.f32.mrf.mxu0
      %v1624 = vadd.f32 %v1577, %v1623
      %v1625 = vand.u32 %v1282, 4294901760
      %1626 = vmatmul.f32.gmra.mxu0 %v1625
      %v1627 = vpop.f32.mrf.mxu0
      %v1628 = vadd.f32 %v1585, %v1627
      %1629 = vdwg.mxu0
      %1630 = vmatpush.msra.mxu0 0.0
      %1631 = vmatpush.msra.mxu0 0.0
      %1632 = vmatpush.msra.mxu0 0.0
      %1633 = vmatpush.msra.mxu0 0.0
      %1634 = vmatpush.msra.mxu0 0.0
      %1635 = vmatpush.msra.mxu0 0.0
      %1636 = vmatpush.msra.mxu0 0.0
      %1637 = vmatpush.msra.mxu0 0.0
      %1638 = vmatpush.msra.mxu0 0.0
      %1639 = vmatpush.msra.mxu0 0.0
      %1640 = vmatpush.msra.mxu0 0.0
      %1641 = vmatpush.msra.mxu0 0.0
      %1642 = vmatpush.msra.mxu0 0.0
      %1643 = vmatpush.msra.mxu0 0.0
      %v1644 = vand.u32 %v1267, 4294901760
      %v1645 = vsub.f32 %v1267, %v1644
      %1646 = vmatpush.msra.mxu0 %v1645
      %v1647 = vand.u32 %v1265, 4294901760
      %v1648 = vsub.f32 %v1265, %v1647
      %1649 = vmatpush.msra.mxu0 %v1648
      %v1650 = vand.u32 %v1273, 4294901760
      %v1651 = vsub.f32 %v1273, %v1650
      %1652 = vmatmul.f32.gmra.mxu0 %v1651
      %v1653 = vpop.f32.mrf.mxu0
      %v1654 = vadd.f32 %v1616, %v1653
      %v1655 = vand.u32 %v1276, 4294901760
      %v1656 = vsub.f32 %v1276, %v1655
      %1657 = vmatmul.f32.gmra.mxu0 %v1656
      %v1658 = vpop.f32.mrf.mxu0
      %v1659 = vadd.f32 %v1620, %v1658
      %v1660 = vand.u32 %v1279, 4294901760
      %v1661 = vsub.f32 %v1279, %v1660
      %1662 = vmatmul.f32.gmra.mxu0 %v1661
      %v1663 = vpop.f32.mrf.mxu0
      %v1664 = vadd.f32 %v1624, %v1663
      %v1665 = vand.u32 %v1282, 4294901760
      %v1666 = vsub.f32 %v1282, %v1665
      %1667 = vmatmul.f32.gmra.mxu0 %v1666
      %v1668 = vpop.f32.mrf.mxu0
      %v1669 = vadd.f32 %v1628, %v1668
      %1670 = vdwg.mxu0
      %1671 = vmatpush.msra.mxu0 0.0
      %1672 = vmatpush.msra.mxu0 0.0
      %1673 = vmatpush.msra.mxu0 0.0
      %1674 = vmatpush.msra.mxu0 0.0
      %1675 = vmatpush.msra.mxu0 0.0
      %1676 = vmatpush.msra.mxu0 0.0
      %1677 = vmatpush.msra.mxu0 0.0
      %1678 = vmatpush.msra.mxu0 0.0
      %1679 = vmatpush.msra.mxu0 0.0
      %1680 = vmatpush.msra.mxu0 0.0
      %1681 = vmatpush.msra.mxu0 0.0
      %1682 = vmatpush.msra.mxu0 0.0
      %1683 = vmatpush.msra.mxu0 0.0
      %1684 = vmatpush.msra.mxu0 0.0
      %v1685 = vand.u32 %v1267, 4294901760
      %1686 = vmatpush.msra.mxu0 %v1685
      %v1687 = vand.u32 %v1265, 4294901760
      %1688 = vmatpush.msra.mxu0 %v1687
      %v1689 = vand.u32 %v1273, 4294901760
      %v1690 = vsub.f32 %v1273, %v1689
      %v1691 = vand.u32 %v1690, 4294901760
      %1692 = vmatmul.f32.gmra.mxu0 %v1691
      %v1693 = vpop.f32.mrf.mxu0
      %v1694 = vadd.f32 %v1654, %v1693
      %v1695 = vand.u32 %v1276, 4294901760
      %v1696 = vsub.f32 %v1276, %v1695
      %v1697 = vand.u32 %v1696, 4294901760
      %1698 = vmatmul.f32.gmra.mxu0 %v1697
      %v1699 = vpop.f32.mrf.mxu0
      %v1700 = vadd.f32 %v1659, %v1699
      %v1701 = vand.u32 %v1279, 4294901760
      %v1702 = vsub.f32 %v1279, %v1701
      %v1703 = vand.u32 %v1702, 4294901760
      %1704 = vmatmul.f32.gmra.mxu0 %v1703
      %v1705 = vpop.f32.mrf.mxu0
      %v1706 = vadd.f32 %v1664, %v1705
      %v1707 = vand.u32 %v1282, 4294901760
      %v1708 = vsub.f32 %v1282, %v1707
      %v1709 = vand.u32 %v1708, 4294901760
      %1710 = vmatmul.f32.gmra.mxu0 %v1709
      %v1711 = vpop.f32.mrf.mxu0
      %v1712 = vadd.f32 %v1669, %v1711
      %1713 = vdwg.mxu0
      %1714 = vmatpush.msra.mxu0 0.0
      %1715 = vmatpush.msra.mxu0 0.0
      %1716 = vmatpush.msra.mxu0 0.0
      %1717 = vmatpush.msra.mxu0 0.0
      %1718 = vmatpush.msra.mxu0 0.0
      %1719 = vmatpush.msra.mxu0 0.0
      %1720 = vmatpush.msra.mxu0 0.0
      %1721 = vmatpush.msra.mxu0 0.0
      %1722 = vmatpush.msra.mxu0 0.0
      %1723 = vmatpush.msra.mxu0 0.0
      %1724 = vmatpush.msra.mxu0 0.0
      %1725 = vmatpush.msra.mxu0 0.0
      %1726 = vmatpush.msra.mxu0 0.0
      %1727 = vmatpush.msra.mxu0 0.0
      %v1728 = vand.u32 %v1267, 4294901760
      %v1729 = vsub.f32 %v1267, %v1728
      %v1730 = vand.u32 %v1729, 4294901760
      %1731 = vmatpush.msra.mxu0 %v1730
      %v1732 = vand.u32 %v1265, 4294901760
      %v1733 = vsub.f32 %v1265, %v1732
      %v1734 = vand.u32 %v1733, 4294901760
      %1735 = vmatpush.msra.mxu0 %v1734
      %v1736 = vand.u32 %v1273, 4294901760
      %1737 = vmatmul.f32.gmra.mxu0 %v1736
      %v1738 = vpop.f32.mrf.mxu0
      %v1739 = vadd.f32 %v1694, %v1738
      %v1740 = vand.u32 %v1276, 4294901760
      %1741 = vmatmul.f32.gmra.mxu0 %v1740
      %v1742 = vpop.f32.mrf.mxu0
      %v1743 = vadd.f32 %v1700, %v1742
      %v1744 = vand.u32 %v1279, 4294901760
      %1745 = vmatmul.f32.gmra.mxu0 %v1744
      %v1746 = vpop.f32.mrf.mxu0
      %v1747 = vadd.f32 %v1706, %v1746
      %v1748 = vand.u32 %v1282, 4294901760
      %1749 = vmatmul.f32.gmra.mxu0 %v1748
      %v1750 = vpop.f32.mrf.mxu0
      %v1751 = vadd.f32 %v1712, %v1750
      %1752 = vdwg.mxu0
      %1753 = vmatpush.msra.mxu0 0.0
      %1754 = vmatpush.msra.mxu0 0.0
      %1755 = vmatpush.msra.mxu0 0.0
      %1756 = vmatpush.msra.mxu0 0.0
      %1757 = vmatpush.msra.mxu0 0.0
      %1758 = vmatpush.msra.mxu0 0.0
      %1759 = vmatpush.msra.mxu0 0.0
      %1760 = vmatpush.msra.mxu0 0.0
      %1761 = vmatpush.msra.mxu0 0.0
      %1762 = vmatpush.msra.mxu0 0.0
      %1763 = vmatpush.msra.mxu0 0.0
      %1764 = vmatpush.msra.mxu0 0.0
      %1765 = vmatpush.msra.mxu0 0.0
      %1766 = vmatpush.msra.mxu0 0.0
      %v1767 = vand.u32 %v1267, 4294901760
      %1768 = vmatpush.msra.mxu0 %v1767
      %v1769 = vand.u32 %v1265, 4294901760
      %1770 = vmatpush.msra.mxu0 %v1769
      %v1771 = vand.u32 %v1273, 4294901760
      %1772 = vmatmul.f32.gmra.mxu0 %v1771
      %v1773 = vpop.f32.mrf.mxu0
      %v1774 = vadd.f32 %v1739, %v1773
      %v1775 = vand.u32 %v1276, 4294901760
      %1776 = vmatmul.f32.gmra.mxu0 %v1775
      %v1777 = vpop.f32.mrf.mxu0
      %v1778 = vadd.f32 %v1743, %v1777
      %v1779 = vand.u32 %v1279, 4294901760
      %1780 = vmatmul.f32.gmra.mxu0 %v1779
      %v1781 = vpop.f32.mrf.mxu0
      %v1782 = vadd.f32 %v1747, %v1781
      %v1783 = vand.u32 %v1282, 4294901760
      %1784 = vmatmul.f32.gmra.mxu0 %v1783
      %v1785 = vpop.f32.mrf.mxu0
      %v1786 = vadd.f32 %v1751, %v1785
      %1787 = vdwg.mxu0
      %v1788 = vadd.f32 %v980, %v1522
      %v1789 = vadd.f32 %v1232, %v1774
      %v1790 = vadd.f32 %v984, %v1526
      %v1791 = vadd.f32 %v1236, %v1778
      %v1792 = vadd.f32 %v988, %v1530
      %v1793 = vadd.f32 %v1240, %v1782
      %v1794 = vadd.f32 %v992, %v1534
      %v1795 = vadd.f32 %v1244, %v1786
      %s1796 = scalar_lea.vmem %s1, 96
      %v1797 = vld [vmem:[%s1796] sm:$0xff]
      %v1798 = vld [vmem:[%s1796 + $0x8] sm:$0xff]
      %v1799 = vld [vmem:[%s1796 + $0x10] sm:$0xff]
      %v1800 = vld [vmem:[%s1796 + $0x18] sm:$0xff]
      %1801 = vrot.lane.b32.xlu0 %v171, 112
      %v1802 = vpop.permute.xlu0 %1801
      %1803 = vrot.lane.b32.xlu0 %v172, 112
      %v1804 = vpop.permute.xlu0 %1803
      %1805 = vrot.lane.b32.xlu0 %v179, 112
      %v1806 = vpop.permute.xlu0 %1805
      %1807 = vrot.lane.b32.xlu0 %v173, 112
      %v1808 = vpop.permute.xlu0 %1807
      %1809 = vrot.lane.b32.xlu0 %v174, 112
      %v1810 = vpop.permute.xlu0 %1809
      %1811 = vrot.lane.b32.xlu0 %v180, 112
      %v1812 = vpop.permute.xlu0 %1811
      %vm1813 = vcmask 916480
      %v1814 = vsel %vm1813, %v1802, %v1804
      %v1815 = vsel %vm1813, %v1804, %v1806
      %v1816 = vsel %vm1813, %v1808, %v1810
      %v1817 = vsel %vm1813, %v1810, %v1812
      %v1823 = vsel %vm213, %v1797, 0
      %v1826 = vsel %vm213, %v1798, 0
      %v1829 = vsel %vm213, %v1799, 0
      %v1832 = vsel %vm213, %v1800, 0
      %1834 = vmatpush.msra.mxu0 0.0
      %1835 = vmatpush.msra.mxu0 0.0
      %1836 = vmatpush.msra.mxu0 0.0
      %1837 = vmatpush.msra.mxu0 0.0
      %1838 = vmatpush.msra.mxu0 0.0
      %1839 = vmatpush.msra.mxu0 0.0
      %1840 = vmatpush.msra.mxu0 0.0
      %1841 = vmatpush.msra.mxu0 0.0
      %1842 = vmatpush.msra.mxu0 0.0
      %1843 = vmatpush.msra.mxu0 0.0
      %1844 = vmatpush.msra.mxu0 0.0
      %1845 = vmatpush.msra.mxu0 0.0
      %1846 = vmatpush.msra.mxu0 0.0
      %1847 = vmatpush.msra.mxu0 0.0
      %v1848 = vand.u32 %v1816, 4294901760
      %1849 = vmatpush.msra.mxu0 %v1848
      %v1850 = vand.u32 %v1814, 4294901760
      %1851 = vmatpush.msra.mxu0 %v1850
      %v1852 = vand.u32 %v1823, 4294901760
      %v1853 = vsub.f32 %v1823, %v1852
      %v1854 = vand.u32 %v1853, 4294901760
      %v1855 = vsub.f32 %v1853, %v1854
      %v1856 = vand.u32 %v1855, 4294901760
      %1857 = vmatmul.f32.gmra.mxu0 %v1856
      %v1858 = vpop.f32.mrf.mxu0
      %v1859 = vadd.f32 0.0, %v1858
      %v1860 = vand.u32 %v1826, 4294901760
      %v1861 = vsub.f32 %v1826, %v1860
      %v1862 = vand.u32 %v1861, 4294901760
      %v1863 = vsub.f32 %v1861, %v1862
      %v1864 = vand.u32 %v1863, 4294901760
      %1865 = vmatmul.f32.gmra.mxu0 %v1864
      %v1866 = vpop.f32.mrf.mxu0
      %v1867 = vadd.f32 0.0, %v1866
      %v1868 = vand.u32 %v1829, 4294901760
      %v1869 = vsub.f32 %v1829, %v1868
      %v1870 = vand.u32 %v1869, 4294901760
      %v1871 = vsub.f32 %v1869, %v1870
      %v1872 = vand.u32 %v1871, 4294901760
      %1873 = vmatmul.f32.gmra.mxu0 %v1872
      %v1874 = vpop.f32.mrf.mxu0
      %v1875 = vadd.f32 0.0, %v1874
      %v1876 = vand.u32 %v1832, 4294901760
      %v1877 = vsub.f32 %v1832, %v1876
      %v1878 = vand.u32 %v1877, 4294901760
      %v1879 = vsub.f32 %v1877, %v1878
      %v1880 = vand.u32 %v1879, 4294901760
      %1881 = vmatmul.f32.gmra.mxu0 %v1880
      %v1882 = vpop.f32.mrf.mxu0
      %v1883 = vadd.f32 0.0, %v1882
      %1884 = vdwg.mxu0
      %1885 = vmatpush.msra.mxu0 0.0
      %1886 = vmatpush.msra.mxu0 0.0
      %1887 = vmatpush.msra.mxu0 0.0
      %1888 = vmatpush.msra.mxu0 0.0
      %1889 = vmatpush.msra.mxu0 0.0
      %1890 = vmatpush.msra.mxu0 0.0
      %1891 = vmatpush.msra.mxu0 0.0
      %1892 = vmatpush.msra.mxu0 0.0
      %1893 = vmatpush.msra.mxu0 0.0
      %1894 = vmatpush.msra.mxu0 0.0
      %1895 = vmatpush.msra.mxu0 0.0
      %1896 = vmatpush.msra.mxu0 0.0
      %1897 = vmatpush.msra.mxu0 0.0
      %1898 = vmatpush.msra.mxu0 0.0
      %v1899 = vand.u32 %v1816, 4294901760
      %v1900 = vsub.f32 %v1816, %v1899
      %v1901 = vand.u32 %v1900, 4294901760
      %v1902 = vsub.f32 %v1900, %v1901
      %v1903 = vand.u32 %v1902, 4294901760
      %1904 = vmatpush.msra.mxu0 %v1903
      %v1905 = vand.u32 %v1814, 4294901760
      %v1906 = vsub.f32 %v1814, %v1905
      %v1907 = vand.u32 %v1906, 4294901760
      %v1908 = vsub.f32 %v1906, %v1907
      %v1909 = vand.u32 %v1908, 4294901760
      %1910 = vmatpush.msra.mxu0 %v1909
      %v1911 = vand.u32 %v1823, 4294901760
      %1912 = vmatmul.f32.gmra.mxu0 %v1911
      %v1913 = vpop.f32.mrf.mxu0
      %v1914 = vadd.f32 %v1859, %v1913
      %v1915 = vand.u32 %v1826, 4294901760
      %1916 = vmatmul.f32.gmra.mxu0 %v1915
      %v1917 = vpop.f32.mrf.mxu0
      %v1918 = vadd.f32 %v1867, %v1917
      %v1919 = vand.u32 %v1829, 4294901760
      %1920 = vmatmul.f32.gmra.mxu0 %v1919
      %v1921 = vpop.f32.mrf.mxu0
      %v1922 = vadd.f32 %v1875, %v1921
      %v1923 = vand.u32 %v1832, 4294901760
      %1924 = vmatmul.f32.gmra.mxu0 %v1923
      %v1925 = vpop.f32.mrf.mxu0
      %v1926 = vadd.f32 %v1883, %v1925
      %1927 = vdwg.mxu0
      %1928 = vmatpush.msra.mxu0 0.0
      %1929 = vmatpush.msra.mxu0 0.0
      %1930 = vmatpush.msra.mxu0 0.0
      %1931 = vmatpush.msra.mxu0 0.0
      %1932 = vmatpush.msra.mxu0 0.0
      %1933 = vmatpush.msra.mxu0 0.0
      %1934 = vmatpush.msra.mxu0 0.0
      %1935 = vmatpush.msra.mxu0 0.0
      %1936 = vmatpush.msra.mxu0 0.0
      %1937 = vmatpush.msra.mxu0 0.0
      %1938 = vmatpush.msra.mxu0 0.0
      %1939 = vmatpush.msra.mxu0 0.0
      %1940 = vmatpush.msra.mxu0 0.0
      %1941 = vmatpush.msra.mxu0 0.0
      %v1942 = vand.u32 %v1816, 4294901760
      %v1943 = vsub.f32 %v1816, %v1942
      %1944 = vmatpush.msra.mxu0 %v1943
      %v1945 = vand.u32 %v1814, 4294901760
      %v1946 = vsub.f32 %v1814, %v1945
      %1947 = vmatpush.msra.mxu0 %v1946
      %v1948 = vand.u32 %v1823, 4294901760
      %v1949 = vsub.f32 %v1823, %v1948
      %1950 = vmatmul.f32.gmra.mxu0 %v1949
      %v1951 = vpop.f32.mrf.mxu0
      %v1952 = vadd.f32 %v1914, %v1951
      %v1953 = vand.u32 %v1826, 4294901760
      %v1954 = vsub.f32 %v1826, %v1953
      %1955 = vmatmul.f32.gmra.mxu0 %v1954
      %v1956 = vpop.f32.mrf.mxu0
      %v1957 = vadd.f32 %v1918, %v1956
      %v1958 = vand.u32 %v1829, 4294901760
      %v1959 = vsub.f32 %v1829, %v1958
      %1960 = vmatmul.f32.gmra.mxu0 %v1959
      %v1961 = vpop.f32.mrf.mxu0
      %v1962 = vadd.f32 %v1922, %v1961
      %v1963 = vand.u32 %v1832, 4294901760
      %v1964 = vsub.f32 %v1832, %v1963
      %1965 = vmatmul.f32.gmra.mxu0 %v1964
      %v1966 = vpop.f32.mrf.mxu0
      %v1967 = vadd.f32 %v1926, %v1966
      %1968 = vdwg.mxu0
      %1969 = vmatpush.msra.mxu0 0.0
      %1970 = vmatpush.msra.mxu0 0.0
      %1971 = vmatpush.msra.mxu0 0.0
      %1972 = vmatpush.msra.mxu0 0.0
      %1973 = vmatpush.msra.mxu0 0.0
      %1974 = vmatpush.msra.mxu0 0.0
      %1975 = vmatpush.msra.mxu0 0.0
      %1976 = vmatpush.msra.mxu0 0.0
      %1977 = vmatpush.msra.mxu0 0.0
      %1978 = vmatpush.msra.mxu0 0.0
      %1979 = vmatpush.msra.mxu0 0.0
      %1980 = vmatpush.msra.mxu0 0.0
      %1981 = vmatpush.msra.mxu0 0.0
      %1982 = vmatpush.msra.mxu0 0.0
      %v1983 = vand.u32 %v1816, 4294901760
      %1984 = vmatpush.msra.mxu0 %v1983
      %v1985 = vand.u32 %v1814, 4294901760
      %1986 = vmatpush.msra.mxu0 %v1985
      %v1987 = vand.u32 %v1823, 4294901760
      %v1988 = vsub.f32 %v1823, %v1987
      %v1989 = vand.u32 %v1988, 4294901760
      %1990 = vmatmul.f32.gmra.mxu0 %v1989
      %v1991 = vpop.f32.mrf.mxu0
      %v1992 = vadd.f32 %v1952, %v1991
      %v1993 = vand.u32 %v1826, 4294901760
      %v1994 = vsub.f32 %v1826, %v1993
      %v1995 = vand.u32 %v1994, 4294901760
      %1996 = vmatmul.f32.gmra.mxu0 %v1995
      %v1997 = vpop.f32.mrf.mxu0
      %v1998 = vadd.f32 %v1957, %v1997
      %v1999 = vand.u32 %v1829, 4294901760
      %v2000 = vsub.f32 %v1829, %v1999
      %v2001 = vand.u32 %v2000, 4294901760
      %2002 = vmatmul.f32.gmra.mxu0 %v2001
      %v2003 = vpop.f32.mrf.mxu0
      %v2004 = vadd.f32 %v1962, %v2003
      %v2005 = vand.u32 %v1832, 4294901760
      %v2006 = vsub.f32 %v1832, %v2005
      %v2007 = vand.u32 %v2006, 4294901760
      %2008 = vmatmul.f32.gmra.mxu0 %v2007
      %v2009 = vpop.f32.mrf.mxu0
      %v2010 = vadd.f32 %v1967, %v2009
      %2011 = vdwg.mxu0
      %2012 = vmatpush.msra.mxu0 0.0
      %2013 = vmatpush.msra.mxu0 0.0
      %2014 = vmatpush.msra.mxu0 0.0
      %2015 = vmatpush.msra.mxu0 0.0
      %2016 = vmatpush.msra.mxu0 0.0
      %2017 = vmatpush.msra.mxu0 0.0
      %2018 = vmatpush.msra.mxu0 0.0
      %2019 = vmatpush.msra.mxu0 0.0
      %2020 = vmatpush.msra.mxu0 0.0
      %2021 = vmatpush.msra.mxu0 0.0
      %2022 = vmatpush.msra.mxu0 0.0
      %2023 = vmatpush.msra.mxu0 0.0
      %2024 = vmatpush.msra.mxu0 0.0
      %2025 = vmatpush.msra.mxu0 0.0
      %v2026 = vand.u32 %v1816, 4294901760
      %v2027 = vsub.f32 %v1816, %v2026
      %v2028 = vand.u32 %v2027, 4294901760
      %2029 = vmatpush.msra.mxu0 %v2028
      %v2030 = vand.u32 %v1814, 4294901760
      %v2031 = vsub.f32 %v1814, %v2030
      %v2032 = vand.u32 %v2031, 4294901760
      %2033 = vmatpush.msra.mxu0 %v2032
      %v2034 = vand.u32 %v1823, 4294901760
      %2035 = vmatmul.f32.gmra.mxu0 %v2034
      %v2036 = vpop.f32.mrf.mxu0
      %v2037 = vadd.f32 %v1992, %v2036
      %v2038 = vand.u32 %v1826, 4294901760
      %2039 = vmatmul.f32.gmra.mxu0 %v2038
      %v2040 = vpop.f32.mrf.mxu0
      %v2041 = vadd.f32 %v1998, %v2040
      %v2042 = vand.u32 %v1829, 4294901760
      %2043 = vmatmul.f32.gmra.mxu0 %v2042
      %v2044 = vpop.f32.mrf.mxu0
      %v2045 = vadd.f32 %v2004, %v2044
      %v2046 = vand.u32 %v1832, 4294901760
      %2047 = vmatmul.f32.gmra.mxu0 %v2046
      %v2048 = vpop.f32.mrf.mxu0
      %v2049 = vadd.f32 %v2010, %v2048
      %2050 = vdwg.mxu0
      %2051 = vmatpush.msra.mxu0 0.0
      %2052 = vmatpush.msra.mxu0 0.0
      %2053 = vmatpush.msra.mxu0 0.0
      %2054 = vmatpush.msra.mxu0 0.0
      %2055 = vmatpush.msra.mxu0 0.0
      %2056 = vmatpush.msra.mxu0 0.0
      %2057 = vmatpush.msra.mxu0 0.0
      %2058 = vmatpush.msra.mxu0 0.0
      %2059 = vmatpush.msra.mxu0 0.0
      %2060 = vmatpush.msra.mxu0 0.0
      %2061 = vmatpush.msra.mxu0 0.0
      %2062 = vmatpush.msra.mxu0 0.0
      %2063 = vmatpush.msra.mxu0 0.0
      %2064 = vmatpush.msra.mxu0 0.0
      %v2065 = vand.u32 %v1816, 4294901760
      %2066 = vmatpush.msra.mxu0 %v2065
      %v2067 = vand.u32 %v1814, 4294901760
      %2068 = vmatpush.msra.mxu0 %v2067
      %v2069 = vand.u32 %v1823, 4294901760
      %2070 = vmatmul.f32.gmra.mxu0 %v2069
      %v2071 = vpop.f32.mrf.mxu0
      %v2072 = vadd.f32 %v2037, %v2071
      %v2073 = vand.u32 %v1826, 4294901760
      %2074 = vmatmul.f32.gmra.mxu0 %v2073
      %v2075 = vpop.f32.mrf.mxu0
      %v2076 = vadd.f32 %v2041, %v2075
      %v2077 = vand.u32 %v1829, 4294901760
      %2078 = vmatmul.f32.gmra.mxu0 %v2077
      %v2079 = vpop.f32.mrf.mxu0
      %v2080 = vadd.f32 %v2045, %v2079
      %v2081 = vand.u32 %v1832, 4294901760
      %2082 = vmatmul.f32.gmra.mxu0 %v2081
      %v2083 = vpop.f32.mrf.mxu0
      %v2084 = vadd.f32 %v2049, %v2083
      %2085 = vdwg.mxu0
      %2086 = vmatpush.msra.mxu0 0.0
      %2087 = vmatpush.msra.mxu0 0.0
      %2088 = vmatpush.msra.mxu0 0.0
      %2089 = vmatpush.msra.mxu0 0.0
      %2090 = vmatpush.msra.mxu0 0.0
      %2091 = vmatpush.msra.mxu0 0.0
      %2092 = vmatpush.msra.mxu0 0.0
      %2093 = vmatpush.msra.mxu0 0.0
      %2094 = vmatpush.msra.mxu0 0.0
      %2095 = vmatpush.msra.mxu0 0.0
      %2096 = vmatpush.msra.mxu0 0.0
      %2097 = vmatpush.msra.mxu0 0.0
      %2098 = vmatpush.msra.mxu0 0.0
      %2099 = vmatpush.msra.mxu0 0.0
      %v2100 = vand.u32 %v1817, 4294901760
      %2101 = vmatpush.msra.mxu0 %v2100
      %v2102 = vand.u32 %v1815, 4294901760
      %2103 = vmatpush.msra.mxu0 %v2102
      %v2104 = vand.u32 %v1823, 4294901760
      %v2105 = vsub.f32 %v1823, %v2104
      %v2106 = vand.u32 %v2105, 4294901760
      %v2107 = vsub.f32 %v2105, %v2106
      %v2108 = vand.u32 %v2107, 4294901760
      %2109 = vmatmul.f32.gmra.mxu0 %v2108
      %v2110 = vpop.f32.mrf.mxu0
      %v2111 = vadd.f32 0.0, %v2110
      %v2112 = vand.u32 %v1826, 4294901760
      %v2113 = vsub.f32 %v1826, %v2112
      %v2114 = vand.u32 %v2113, 4294901760
      %v2115 = vsub.f32 %v2113, %v2114
      %v2116 = vand.u32 %v2115, 4294901760
      %2117 = vmatmul.f32.gmra.mxu0 %v2116
      %v2118 = vpop.f32.mrf.mxu0
      %v2119 = vadd.f32 0.0, %v2118
      %v2120 = vand.u32 %v1829, 4294901760
      %v2121 = vsub.f32 %v1829, %v2120
      %v2122 = vand.u32 %v2121, 4294901760
      %v2123 = vsub.f32 %v2121, %v2122
      %v2124 = vand.u32 %v2123, 4294901760
      %2125 = vmatmul.f32.gmra.mxu0 %v2124
      %v2126 = vpop.f32.mrf.mxu0
      %v2127 = vadd.f32 0.0, %v2126
      %v2128 = vand.u32 %v1832, 4294901760
      %v2129 = vsub.f32 %v1832, %v2128
      %v2130 = vand.u32 %v2129, 4294901760
      %v2131 = vsub.f32 %v2129, %v2130
      %v2132 = vand.u32 %v2131, 4294901760
      %2133 = vmatmul.f32.gmra.mxu0 %v2132
      %v2134 = vpop.f32.mrf.mxu0
      %v2135 = vadd.f32 0.0, %v2134
      %2136 = vdwg.mxu0
      %2137 = vmatpush.msra.mxu0 0.0
      %2138 = vmatpush.msra.mxu0 0.0
      %2139 = vmatpush.msra.mxu0 0.0
      %2140 = vmatpush.msra.mxu0 0.0
      %2141 = vmatpush.msra.mxu0 0.0
      %2142 = vmatpush.msra.mxu0 0.0
      %2143 = vmatpush.msra.mxu0 0.0
      %2144 = vmatpush.msra.mxu0 0.0
      %2145 = vmatpush.msra.mxu0 0.0
      %2146 = vmatpush.msra.mxu0 0.0
      %2147 = vmatpush.msra.mxu0 0.0
      %2148 = vmatpush.msra.mxu0 0.0
      %2149 = vmatpush.msra.mxu0 0.0
      %2150 = vmatpush.msra.mxu0 0.0
      %v2151 = vand.u32 %v1817, 4294901760
      %v2152 = vsub.f32 %v1817, %v2151
      %v2153 = vand.u32 %v2152, 4294901760
      %v2154 = vsub.f32 %v2152, %v2153
      %v2155 = vand.u32 %v2154, 4294901760
      %2156 = vmatpush.msra.mxu0 %v2155
      %v2157 = vand.u32 %v1815, 4294901760
      %v2158 = vsub.f32 %v1815, %v2157
      %v2159 = vand.u32 %v2158, 4294901760
      %v2160 = vsub.f32 %v2158, %v2159
      %v2161 = vand.u32 %v2160, 4294901760
      %2162 = vmatpush.msra.mxu0 %v2161
      %v2163 = vand.u32 %v1823, 4294901760
      %2164 = vmatmul.f32.gmra.mxu0 %v2163
      %v2165 = vpop.f32.mrf.mxu0
      %v2166 = vadd.f32 %v2111, %v2165
      %v2167 = vand.u32 %v1826, 4294901760
      %2168 = vmatmul.f32.gmra.mxu0 %v2167
      %v2169 = vpop.f32.mrf.mxu0
      %v2170 = vadd.f32 %v2119, %v2169
      %v2171 = vand.u32 %v1829, 4294901760
      %2172 = vmatmul.f32.gmra.mxu0 %v2171
      %v2173 = vpop.f32.mrf.mxu0
      %v2174 = vadd.f32 %v2127, %v2173
      %v2175 = vand.u32 %v1832, 4294901760
      %2176 = vmatmul.f32.gmra.mxu0 %v2175
      %v2177 = vpop.f32.mrf.mxu0
      %v2178 = vadd.f32 %v2135, %v2177
      %2179 = vdwg.mxu0
      %2180 = vmatpush.msra.mxu0 0.0
      %2181 = vmatpush.msra.mxu0 0.0
      %2182 = vmatpush.msra.mxu0 0.0
      %2183 = vmatpush.msra.mxu0 0.0
      %2184 = vmatpush.msra.mxu0 0.0
      %2185 = vmatpush.msra.mxu0 0.0
      %2186 = vmatpush.msra.mxu0 0.0
      %2187 = vmatpush.msra.mxu0 0.0
      %2188 = vmatpush.msra.mxu0 0.0
      %2189 = vmatpush.msra.mxu0 0.0
      %2190 = vmatpush.msra.mxu0 0.0
      %2191 = vmatpush.msra.mxu0 0.0
      %2192 = vmatpush.msra.mxu0 0.0
      %2193 = vmatpush.msra.mxu0 0.0
      %v2194 = vand.u32 %v1817, 4294901760
      %v2195 = vsub.f32 %v1817, %v2194
      %2196 = vmatpush.msra.mxu0 %v2195
      %v2197 = vand.u32 %v1815, 4294901760
      %v2198 = vsub.f32 %v1815, %v2197
      %2199 = vmatpush.msra.mxu0 %v2198
      %v2200 = vand.u32 %v1823, 4294901760
      %v2201 = vsub.f32 %v1823, %v2200
      %2202 = vmatmul.f32.gmra.mxu0 %v2201
      %v2203 = vpop.f32.mrf.mxu0
      %v2204 = vadd.f32 %v2166, %v2203
      %v2205 = vand.u32 %v1826, 4294901760
      %v2206 = vsub.f32 %v1826, %v2205
      %2207 = vmatmul.f32.gmra.mxu0 %v2206
      %v2208 = vpop.f32.mrf.mxu0
      %v2209 = vadd.f32 %v2170, %v2208
      %v2210 = vand.u32 %v1829, 4294901760
      %v2211 = vsub.f32 %v1829, %v2210
      %2212 = vmatmul.f32.gmra.mxu0 %v2211
      %v2213 = vpop.f32.mrf.mxu0
      %v2214 = vadd.f32 %v2174, %v2213
      %v2215 = vand.u32 %v1832, 4294901760
      %v2216 = vsub.f32 %v1832, %v2215
      %2217 = vmatmul.f32.gmra.mxu0 %v2216
      %v2218 = vpop.f32.mrf.mxu0
      %v2219 = vadd.f32 %v2178, %v2218
      %2220 = vdwg.mxu0
      %2221 = vmatpush.msra.mxu0 0.0
      %2222 = vmatpush.msra.mxu0 0.0
      %2223 = vmatpush.msra.mxu0 0.0
      %2224 = vmatpush.msra.mxu0 0.0
      %2225 = vmatpush.msra.mxu0 0.0
      %2226 = vmatpush.msra.mxu0 0.0
      %2227 = vmatpush.msra.mxu0 0.0
      %2228 = vmatpush.msra.mxu0 0.0
      %2229 = vmatpush.msra.mxu0 0.0
      %2230 = vmatpush.msra.mxu0 0.0
      %2231 = vmatpush.msra.mxu0 0.0
      %2232 = vmatpush.msra.mxu0 0.0
      %2233 = vmatpush.msra.mxu0 0.0
      %2234 = vmatpush.msra.mxu0 0.0
      %v2235 = vand.u32 %v1817, 4294901760
      %2236 = vmatpush.msra.mxu0 %v2235
      %v2237 = vand.u32 %v1815, 4294901760
      %2238 = vmatpush.msra.mxu0 %v2237
      %v2239 = vand.u32 %v1823, 4294901760
      %v2240 = vsub.f32 %v1823, %v2239
      %v2241 = vand.u32 %v2240, 4294901760
      %2242 = vmatmul.f32.gmra.mxu0 %v2241
      %v2243 = vpop.f32.mrf.mxu0
      %v2244 = vadd.f32 %v2204, %v2243
      %v2245 = vand.u32 %v1826, 4294901760
      %v2246 = vsub.f32 %v1826, %v2245
      %v2247 = vand.u32 %v2246, 4294901760
      %2248 = vmatmul.f32.gmra.mxu0 %v2247
      %v2249 = vpop.f32.mrf.mxu0
      %v2250 = vadd.f32 %v2209, %v2249
      %v2251 = vand.u32 %v1829, 4294901760
      %v2252 = vsub.f32 %v1829, %v2251
      %v2253 = vand.u32 %v2252, 4294901760
      %2254 = vmatmul.f32.gmra.mxu0 %v2253
      %v2255 = vpop.f32.mrf.mxu0
      %v2256 = vadd.f32 %v2214, %v2255
      %v2257 = vand.u32 %v1832, 4294901760
      %v2258 = vsub.f32 %v1832, %v2257
      %v2259 = vand.u32 %v2258, 4294901760
      %2260 = vmatmul.f32.gmra.mxu0 %v2259
      %v2261 = vpop.f32.mrf.mxu0
      %v2262 = vadd.f32 %v2219, %v2261
      %2263 = vdwg.mxu0
      %2264 = vmatpush.msra.mxu0 0.0
      %2265 = vmatpush.msra.mxu0 0.0
      %2266 = vmatpush.msra.mxu0 0.0
      %2267 = vmatpush.msra.mxu0 0.0
      %2268 = vmatpush.msra.mxu0 0.0
      %2269 = vmatpush.msra.mxu0 0.0
      %2270 = vmatpush.msra.mxu0 0.0
      %2271 = vmatpush.msra.mxu0 0.0
      %2272 = vmatpush.msra.mxu0 0.0
      %2273 = vmatpush.msra.mxu0 0.0
      %2274 = vmatpush.msra.mxu0 0.0
      %2275 = vmatpush.msra.mxu0 0.0
      %2276 = vmatpush.msra.mxu0 0.0
      %2277 = vmatpush.msra.mxu0 0.0
      %v2278 = vand.u32 %v1817, 4294901760
      %v2279 = vsub.f32 %v1817, %v2278
      %v2280 = vand.u32 %v2279, 4294901760
      %2281 = vmatpush.msra.mxu0 %v2280
      %v2282 = vand.u32 %v1815, 4294901760
      %v2283 = vsub.f32 %v1815, %v2282
      %v2284 = vand.u32 %v2283, 4294901760
      %2285 = vmatpush.msra.mxu0 %v2284
      %v2286 = vand.u32 %v1823, 4294901760
      %2287 = vmatmul.f32.gmra.mxu0 %v2286
      %v2288 = vpop.f32.mrf.mxu0
      %v2289 = vadd.f32 %v2244, %v2288
      %v2290 = vand.u32 %v1826, 4294901760
      %2291 = vmatmul.f32.gmra.mxu0 %v2290
      %v2292 = vpop.f32.mrf.mxu0
      %v2293 = vadd.f32 %v2250, %v2292
      %v2294 = vand.u32 %v1829, 4294901760
      %2295 = vmatmul.f32.gmra.mxu0 %v2294
      %v2296 = vpop.f32.mrf.mxu0
      %v2297 = vadd.f32 %v2256, %v2296
      %v2298 = vand.u32 %v1832, 4294901760
      %2299 = vmatmul.f32.gmra.mxu0 %v2298
      %v2300 = vpop.f32.mrf.mxu0
      %v2301 = vadd.f32 %v2262, %v2300
      %2302 = vdwg.mxu0
      %2303 = vmatpush.msra.mxu0 0.0
      %2304 = vmatpush.msra.mxu0 0.0
      %2305 = vmatpush.msra.mxu0 0.0
      %2306 = vmatpush.msra.mxu0 0.0
      %2307 = vmatpush.msra.mxu0 0.0
      %2308 = vmatpush.msra.mxu0 0.0
      %2309 = vmatpush.msra.mxu0 0.0
      %2310 = vmatpush.msra.mxu0 0.0
      %2311 = vmatpush.msra.mxu0 0.0
      %2312 = vmatpush.msra.mxu0 0.0
      %2313 = vmatpush.msra.mxu0 0.0
      %2314 = vmatpush.msra.mxu0 0.0
      %2315 = vmatpush.msra.mxu0 0.0
      %2316 = vmatpush.msra.mxu0 0.0
      %v2317 = vand.u32 %v1817, 4294901760
      %2318 = vmatpush.msra.mxu0 %v2317
      %v2319 = vand.u32 %v1815, 4294901760
      %2320 = vmatpush.msra.mxu0 %v2319
      %v2321 = vand.u32 %v1823, 4294901760
      %2322 = vmatmul.f32.gmra.mxu0 %v2321
      %v2323 = vpop.f32.mrf.mxu0
      %v2324 = vadd.f32 %v2289, %v2323
      %v2325 = vand.u32 %v1826, 4294901760
      %2326 = vmatmul.f32.gmra.mxu0 %v2325
      %v2327 = vpop.f32.mrf.mxu0
      %v2328 = vadd.f32 %v2293, %v2327
      %v2329 = vand.u32 %v1829, 4294901760
      %2330 = vmatmul.f32.gmra.mxu0 %v2329
      %v2331 = vpop.f32.mrf.mxu0
      %v2332 = vadd.f32 %v2297, %v2331
      %v2333 = vand.u32 %v1832, 4294901760
      %2334 = vmatmul.f32.gmra.mxu0 %v2333
      %v2335 = vpop.f32.mrf.mxu0
      %v2336 = vadd.f32 %v2301, %v2335
      %2337 = vdwg.mxu0
      %v2338 = vadd.f32 %v1788, %v2072
      %v2339 = vadd.f32 %v1789, %v2324
      %v2340 = vadd.f32 %v1790, %v2076
      %v2341 = vadd.f32 %v1791, %v2328
      %v2342 = vadd.f32 %v1792, %v2080
      %v2343 = vadd.f32 %v1793, %v2332
      %v2344 = vadd.f32 %v1794, %v2084
      %v2345 = vadd.f32 %v1795, %v2336
      %s2346 = scalar_lea.vmem %s1, 128
      %v2347 = vld [vmem:[%s2346] sm:$0xff]
      %v2348 = vld [vmem:[%s2346 + $0x8] sm:$0xff]
      %v2349 = vld [vmem:[%s2346 + $0x10] sm:$0xff]
      %v2350 = vld [vmem:[%s2346 + $0x18] sm:$0xff]
      %2351 = vrot.lane.b32.xlu0 %v171, 111
      %v2352 = vpop.permute.xlu0 %2351
      %2353 = vrot.lane.b32.xlu0 %v172, 111
      %v2354 = vpop.permute.xlu0 %2353
      %2355 = vrot.lane.b32.xlu0 %v179, 111
      %v2356 = vpop.permute.xlu0 %2355
      %2357 = vrot.lane.b32.xlu0 %v173, 111
      %v2358 = vpop.permute.xlu0 %2357
      %2359 = vrot.lane.b32.xlu0 %v174, 111
      %v2360 = vpop.permute.xlu0 %2359
      %2361 = vrot.lane.b32.xlu0 %v180, 111
      %v2362 = vpop.permute.xlu0 %2361
      %vm2363 = vcmask 908288
      %v2364 = vsel %vm2363, %v2352, %v2354
      %v2365 = vsel %vm2363, %v2354, %v2356
      %v2366 = vsel %vm2363, %v2358, %v2360
      %v2367 = vsel %vm2363, %v2360, %v2362
      %v2373 = vsel %vm213, %v2347, 0
      %v2376 = vsel %vm213, %v2348, 0
      %v2379 = vsel %vm213, %v2349, 0
      %v2382 = vsel %vm213, %v2350, 0
      %2384 = vmatpush.msra.mxu0 0.0
      %2385 = vmatpush.msra.mxu0 0.0
      %2386 = vmatpush.msra.mxu0 0.0
      %2387 = vmatpush.msra.mxu0 0.0
      %2388 = vmatpush.msra.mxu0 0.0
      %2389 = vmatpush.msra.mxu0 0.0
      %2390 = vmatpush.msra.mxu0 0.0
      %2391 = vmatpush.msra.mxu0 0.0
      %2392 = vmatpush.msra.mxu0 0.0
      %2393 = vmatpush.msra.mxu0 0.0
      %2394 = vmatpush.msra.mxu0 0.0
      %2395 = vmatpush.msra.mxu0 0.0
      %2396 = vmatpush.msra.mxu0 0.0
      %2397 = vmatpush.msra.mxu0 0.0
      %v2398 = vand.u32 %v2366, 4294901760
      %2399 = vmatpush.msra.mxu0 %v2398
      %v2400 = vand.u32 %v2364, 4294901760
      %2401 = vmatpush.msra.mxu0 %v2400
      %v2402 = vand.u32 %v2373, 4294901760
      %v2403 = vsub.f32 %v2373, %v2402
      %v2404 = vand.u32 %v2403, 4294901760
      %v2405 = vsub.f32 %v2403, %v2404
      %v2406 = vand.u32 %v2405, 4294901760
      %2407 = vmatmul.f32.gmra.mxu0 %v2406
      %v2408 = vpop.f32.mrf.mxu0
      %v2409 = vadd.f32 0.0, %v2408
      %v2410 = vand.u32 %v2376, 4294901760
      %v2411 = vsub.f32 %v2376, %v2410
      %v2412 = vand.u32 %v2411, 4294901760
      %v2413 = vsub.f32 %v2411, %v2412
      %v2414 = vand.u32 %v2413, 4294901760
      %2415 = vmatmul.f32.gmra.mxu0 %v2414
      %v2416 = vpop.f32.mrf.mxu0
      %v2417 = vadd.f32 0.0, %v2416
      %v2418 = vand.u32 %v2379, 4294901760
      %v2419 = vsub.f32 %v2379, %v2418
      %v2420 = vand.u32 %v2419, 4294901760
      %v2421 = vsub.f32 %v2419, %v2420
      %v2422 = vand.u32 %v2421, 4294901760
      %2423 = vmatmul.f32.gmra.mxu0 %v2422
      %v2424 = vpop.f32.mrf.mxu0
      %v2425 = vadd.f32 0.0, %v2424
      %v2426 = vand.u32 %v2382, 4294901760
      %v2427 = vsub.f32 %v2382, %v2426
      %v2428 = vand.u32 %v2427, 4294901760
      %v2429 = vsub.f32 %v2427, %v2428
      %v2430 = vand.u32 %v2429, 4294901760
      %2431 = vmatmul.f32.gmra.mxu0 %v2430
      %v2432 = vpop.f32.mrf.mxu0
      %v2433 = vadd.f32 0.0, %v2432
      %2434 = vdwg.mxu0
      %2435 = vmatpush.msra.mxu0 0.0
      %2436 = vmatpush.msra.mxu0 0.0
      %2437 = vmatpush.msra.mxu0 0.0
      %2438 = vmatpush.msra.mxu0 0.0
      %2439 = vmatpush.msra.mxu0 0.0
      %2440 = vmatpush.msra.mxu0 0.0
      %2441 = vmatpush.msra.mxu0 0.0
      %2442 = vmatpush.msra.mxu0 0.0
      %2443 = vmatpush.msra.mxu0 0.0
      %2444 = vmatpush.msra.mxu0 0.0
      %2445 = vmatpush.msra.mxu0 0.0
      %2446 = vmatpush.msra.mxu0 0.0
      %2447 = vmatpush.msra.mxu0 0.0
      %2448 = vmatpush.msra.mxu0 0.0
      %v2449 = vand.u32 %v2366, 4294901760
      %v2450 = vsub.f32 %v2366, %v2449
      %v2451 = vand.u32 %v2450, 4294901760
      %v2452 = vsub.f32 %v2450, %v2451
      %v2453 = vand.u32 %v2452, 4294901760
      %2454 = vmatpush.msra.mxu0 %v2453
      %v2455 = vand.u32 %v2364, 4294901760
      %v2456 = vsub.f32 %v2364, %v2455
      %v2457 = vand.u32 %v2456, 4294901760
      %v2458 = vsub.f32 %v2456, %v2457
      %v2459 = vand.u32 %v2458, 4294901760
      %2460 = vmatpush.msra.mxu0 %v2459
      %v2461 = vand.u32 %v2373, 4294901760
      %2462 = vmatmul.f32.gmra.mxu0 %v2461
      %v2463 = vpop.f32.mrf.mxu0
      %v2464 = vadd.f32 %v2409, %v2463
      %v2465 = vand.u32 %v2376, 4294901760
      %2466 = vmatmul.f32.gmra.mxu0 %v2465
      %v2467 = vpop.f32.mrf.mxu0
      %v2468 = vadd.f32 %v2417, %v2467
      %v2469 = vand.u32 %v2379, 4294901760
      %2470 = vmatmul.f32.gmra.mxu0 %v2469
      %v2471 = vpop.f32.mrf.mxu0
      %v2472 = vadd.f32 %v2425, %v2471
      %v2473 = vand.u32 %v2382, 4294901760
      %2474 = vmatmul.f32.gmra.mxu0 %v2473
      %v2475 = vpop.f32.mrf.mxu0
      %v2476 = vadd.f32 %v2433, %v2475
      %2477 = vdwg.mxu0
      %2478 = vmatpush.msra.mxu0 0.0
      %2479 = vmatpush.msra.mxu0 0.0
      %2480 = vmatpush.msra.mxu0 0.0
      %2481 = vmatpush.msra.mxu0 0.0
      %2482 = vmatpush.msra.mxu0 0.0
      %2483 = vmatpush.msra.mxu0 0.0
      %2484 = vmatpush.msra.mxu0 0.0
      %2485 = vmatpush.msra.mxu0 0.0
      %2486 = vmatpush.msra.mxu0 0.0
      %2487 = vmatpush.msra.mxu0 0.0
      %2488 = vmatpush.msra.mxu0 0.0
      %2489 = vmatpush.msra.mxu0 0.0
      %2490 = vmatpush.msra.mxu0 0.0
      %2491 = vmatpush.msra.mxu0 0.0
      %v2492 = vand.u32 %v2366, 4294901760
      %v2493 = vsub.f32 %v2366, %v2492
      %2494 = vmatpush.msra.mxu0 %v2493
      %v2495 = vand.u32 %v2364, 4294901760
      %v2496 = vsub.f32 %v2364, %v2495
      %2497 = vmatpush.msra.mxu0 %v2496
      %v2498 = vand.u32 %v2373, 4294901760
      %v2499 = vsub.f32 %v2373, %v2498
      %2500 = vmatmul.f32.gmra.mxu0 %v2499
      %v2501 = vpop.f32.mrf.mxu0
      %v2502 = vadd.f32 %v2464, %v2501
      %v2503 = vand.u32 %v2376, 4294901760
      %v2504 = vsub.f32 %v2376, %v2503
      %2505 = vmatmul.f32.gmra.mxu0 %v2504
      %v2506 = vpop.f32.mrf.mxu0
      %v2507 = vadd.f32 %v2468, %v2506
      %v2508 = vand.u32 %v2379, 4294901760
      %v2509 = vsub.f32 %v2379, %v2508
      %2510 = vmatmul.f32.gmra.mxu0 %v2509
      %v2511 = vpop.f32.mrf.mxu0
      %v2512 = vadd.f32 %v2472, %v2511
      %v2513 = vand.u32 %v2382, 4294901760
      %v2514 = vsub.f32 %v2382, %v2513
      %2515 = vmatmul.f32.gmra.mxu0 %v2514
      %v2516 = vpop.f32.mrf.mxu0
      %v2517 = vadd.f32 %v2476, %v2516
      %2518 = vdwg.mxu0
      %2519 = vmatpush.msra.mxu0 0.0
      %2520 = vmatpush.msra.mxu0 0.0
      %2521 = vmatpush.msra.mxu0 0.0
      %2522 = vmatpush.msra.mxu0 0.0
      %2523 = vmatpush.msra.mxu0 0.0
      %2524 = vmatpush.msra.mxu0 0.0
      %2525 = vmatpush.msra.mxu0 0.0
      %2526 = vmatpush.msra.mxu0 0.0
      %2527 = vmatpush.msra.mxu0 0.0
      %2528 = vmatpush.msra.mxu0 0.0
      %2529 = vmatpush.msra.mxu0 0.0
      %2530 = vmatpush.msra.mxu0 0.0
      %2531 = vmatpush.msra.mxu0 0.0
      %2532 = vmatpush.msra.mxu0 0.0
      %v2533 = vand.u32 %v2366, 4294901760
      %2534 = vmatpush.msra.mxu0 %v2533
      %v2535 = vand.u32 %v2364, 4294901760
      %2536 = vmatpush.msra.mxu0 %v2535
      %v2537 = vand.u32 %v2373, 4294901760
      %v2538 = vsub.f32 %v2373, %v2537
      %v2539 = vand.u32 %v2538, 4294901760
      %2540 = vmatmul.f32.gmra.mxu0 %v2539
      %v2541 = vpop.f32.mrf.mxu0
      %v2542 = vadd.f32 %v2502, %v2541
      %v2543 = vand.u32 %v2376, 4294901760
      %v2544 = vsub.f32 %v2376, %v2543
      %v2545 = vand.u32 %v2544, 4294901760
      %2546 = vmatmul.f32.gmra.mxu0 %v2545
      %v2547 = vpop.f32.mrf.mxu0
      %v2548 = vadd.f32 %v2507, %v2547
      %v2549 = vand.u32 %v2379, 4294901760
      %v2550 = vsub.f32 %v2379, %v2549
      %v2551 = vand.u32 %v2550, 4294901760
      %2552 = vmatmul.f32.gmra.mxu0 %v2551
      %v2553 = vpop.f32.mrf.mxu0
      %v2554 = vadd.f32 %v2512, %v2553
      %v2555 = vand.u32 %v2382, 4294901760
      %v2556 = vsub.f32 %v2382, %v2555
      %v2557 = vand.u32 %v2556, 4294901760
      %2558 = vmatmul.f32.gmra.mxu0 %v2557
      %v2559 = vpop.f32.mrf.mxu0
      %v2560 = vadd.f32 %v2517, %v2559
      %2561 = vdwg.mxu0
      %2562 = vmatpush.msra.mxu0 0.0
      %2563 = vmatpush.msra.mxu0 0.0
      %2564 = vmatpush.msra.mxu0 0.0
      %2565 = vmatpush.msra.mxu0 0.0
      %2566 = vmatpush.msra.mxu0 0.0
      %2567 = vmatpush.msra.mxu0 0.0
      %2568 = vmatpush.msra.mxu0 0.0
      %2569 = vmatpush.msra.mxu0 0.0
      %2570 = vmatpush.msra.mxu0 0.0
      %2571 = vmatpush.msra.mxu0 0.0
      %2572 = vmatpush.msra.mxu0 0.0
      %2573 = vmatpush.msra.mxu0 0.0
      %2574 = vmatpush.msra.mxu0 0.0
      %2575 = vmatpush.msra.mxu0 0.0
      %v2576 = vand.u32 %v2366, 4294901760
      %v2577 = vsub.f32 %v2366, %v2576
      %v2578 = vand.u32 %v2577, 4294901760
      %2579 = vmatpush.msra.mxu0 %v2578
      %v2580 = vand.u32 %v2364, 4294901760
      %v2581 = vsub.f32 %v2364, %v2580
      %v2582 = vand.u32 %v2581, 4294901760
      %2583 = vmatpush.msra.mxu0 %v2582
      %v2584 = vand.u32 %v2373, 4294901760
      %2585 = vmatmul.f32.gmra.mxu0 %v2584
      %v2586 = vpop.f32.mrf.mxu0
      %v2587 = vadd.f32 %v2542, %v2586
      %v2588 = vand.u32 %v2376, 4294901760
      %2589 = vmatmul.f32.gmra.mxu0 %v2588
      %v2590 = vpop.f32.mrf.mxu0
      %v2591 = vadd.f32 %v2548, %v2590
      %v2592 = vand.u32 %v2379, 4294901760
      %2593 = vmatmul.f32.gmra.mxu0 %v2592
      %v2594 = vpop.f32.mrf.mxu0
      %v2595 = vadd.f32 %v2554, %v2594
      %v2596 = vand.u32 %v2382, 4294901760
      %2597 = vmatmul.f32.gmra.mxu0 %v2596
      %v2598 = vpop.f32.mrf.mxu0
      %v2599 = vadd.f32 %v2560, %v2598
      %2600 = vdwg.mxu0
      %2601 = vmatpush.msra.mxu0 0.0
      %2602 = vmatpush.msra.mxu0 0.0
      %2603 = vmatpush.msra.mxu0 0.0
      %2604 = vmatpush.msra.mxu0 0.0
      %2605 = vmatpush.msra.mxu0 0.0
      %2606 = vmatpush.msra.mxu0 0.0
      %2607 = vmatpush.msra.mxu0 0.0
      %2608 = vmatpush.msra.mxu0 0.0
      %2609 = vmatpush.msra.mxu0 0.0
      %2610 = vmatpush.msra.mxu0 0.0
      %2611 = vmatpush.msra.mxu0 0.0
      %2612 = vmatpush.msra.mxu0 0.0
      %2613 = vmatpush.msra.mxu0 0.0
      %2614 = vmatpush.msra.mxu0 0.0
      %v2615 = vand.u32 %v2366, 4294901760
      %2616 = vmatpush.msra.mxu0 %v2615
      %v2617 = vand.u32 %v2364, 4294901760
      %2618 = vmatpush.msra.mxu0 %v2617
      %v2619 = vand.u32 %v2373, 4294901760
      %2620 = vmatmul.f32.gmra.mxu0 %v2619
      %v2621 = vpop.f32.mrf.mxu0
      %v2622 = vadd.f32 %v2587, %v2621
      %v2623 = vand.u32 %v2376, 4294901760
      %2624 = vmatmul.f32.gmra.mxu0 %v2623
      %v2625 = vpop.f32.mrf.mxu0
      %v2626 = vadd.f32 %v2591, %v2625
      %v2627 = vand.u32 %v2379, 4294901760
      %2628 = vmatmul.f32.gmra.mxu0 %v2627
      %v2629 = vpop.f32.mrf.mxu0
      %v2630 = vadd.f32 %v2595, %v2629
      %v2631 = vand.u32 %v2382, 4294901760
      %2632 = vmatmul.f32.gmra.mxu0 %v2631
      %v2633 = vpop.f32.mrf.mxu0
      %v2634 = vadd.f32 %v2599, %v2633
      %2635 = vdwg.mxu0
      %2636 = vmatpush.msra.mxu0 0.0
      %2637 = vmatpush.msra.mxu0 0.0
      %2638 = vmatpush.msra.mxu0 0.0
      %2639 = vmatpush.msra.mxu0 0.0
      %2640 = vmatpush.msra.mxu0 0.0
      %2641 = vmatpush.msra.mxu0 0.0
      %2642 = vmatpush.msra.mxu0 0.0
      %2643 = vmatpush.msra.mxu0 0.0
      %2644 = vmatpush.msra.mxu0 0.0
      %2645 = vmatpush.msra.mxu0 0.0
      %2646 = vmatpush.msra.mxu0 0.0
      %2647 = vmatpush.msra.mxu0 0.0
      %2648 = vmatpush.msra.mxu0 0.0
      %2649 = vmatpush.msra.mxu0 0.0
      %v2650 = vand.u32 %v2367, 4294901760
      %2651 = vmatpush.msra.mxu0 %v2650
      %v2652 = vand.u32 %v2365, 4294901760
      %2653 = vmatpush.msra.mxu0 %v2652
      %v2654 = vand.u32 %v2373, 4294901760
      %v2655 = vsub.f32 %v2373, %v2654
      %v2656 = vand.u32 %v2655, 4294901760
      %v2657 = vsub.f32 %v2655, %v2656
      %v2658 = vand.u32 %v2657, 4294901760
      %2659 = vmatmul.f32.gmra.mxu0 %v2658
      %v2660 = vpop.f32.mrf.mxu0
      %v2661 = vadd.f32 0.0, %v2660
      %v2662 = vand.u32 %v2376, 4294901760
      %v2663 = vsub.f32 %v2376, %v2662
      %v2664 = vand.u32 %v2663, 4294901760
      %v2665 = vsub.f32 %v2663, %v2664
      %v2666 = vand.u32 %v2665, 4294901760
      %2667 = vmatmul.f32.gmra.mxu0 %v2666
      %v2668 = vpop.f32.mrf.mxu0
      %v2669 = vadd.f32 0.0, %v2668
      %v2670 = vand.u32 %v2379, 4294901760
      %v2671 = vsub.f32 %v2379, %v2670
      %v2672 = vand.u32 %v2671, 4294901760
      %v2673 = vsub.f32 %v2671, %v2672
      %v2674 = vand.u32 %v2673, 4294901760
      %2675 = vmatmul.f32.gmra.mxu0 %v2674
      %v2676 = vpop.f32.mrf.mxu0
      %v2677 = vadd.f32 0.0, %v2676
      %v2678 = vand.u32 %v2382, 4294901760
      %v2679 = vsub.f32 %v2382, %v2678
      %v2680 = vand.u32 %v2679, 4294901760
      %v2681 = vsub.f32 %v2679, %v2680
      %v2682 = vand.u32 %v2681, 4294901760
      %2683 = vmatmul.f32.gmra.mxu0 %v2682
      %v2684 = vpop.f32.mrf.mxu0
      %v2685 = vadd.f32 0.0, %v2684
      %2686 = vdwg.mxu0
      %2687 = vmatpush.msra.mxu0 0.0
      %2688 = vmatpush.msra.mxu0 0.0
      %2689 = vmatpush.msra.mxu0 0.0
      %2690 = vmatpush.msra.mxu0 0.0
      %2691 = vmatpush.msra.mxu0 0.0
      %2692 = vmatpush.msra.mxu0 0.0
      %2693 = vmatpush.msra.mxu0 0.0
      %2694 = vmatpush.msra.mxu0 0.0
      %2695 = vmatpush.msra.mxu0 0.0
      %2696 = vmatpush.msra.mxu0 0.0
      %2697 = vmatpush.msra.mxu0 0.0
      %2698 = vmatpush.msra.mxu0 0.0
      %2699 = vmatpush.msra.mxu0 0.0
      %2700 = vmatpush.msra.mxu0 0.0
      %v2701 = vand.u32 %v2367, 4294901760
      %v2702 = vsub.f32 %v2367, %v2701
      %v2703 = vand.u32 %v2702, 4294901760
      %v2704 = vsub.f32 %v2702, %v2703
      %v2705 = vand.u32 %v2704, 4294901760
      %2706 = vmatpush.msra.mxu0 %v2705
      %v2707 = vand.u32 %v2365, 4294901760
      %v2708 = vsub.f32 %v2365, %v2707
      %v2709 = vand.u32 %v2708, 4294901760
      %v2710 = vsub.f32 %v2708, %v2709
      %v2711 = vand.u32 %v2710, 4294901760
      %2712 = vmatpush.msra.mxu0 %v2711
      %v2713 = vand.u32 %v2373, 4294901760
      %2714 = vmatmul.f32.gmra.mxu0 %v2713
      %v2715 = vpop.f32.mrf.mxu0
      %v2716 = vadd.f32 %v2661, %v2715
      %v2717 = vand.u32 %v2376, 4294901760
      %2718 = vmatmul.f32.gmra.mxu0 %v2717
      %v2719 = vpop.f32.mrf.mxu0
      %v2720 = vadd.f32 %v2669, %v2719
      %v2721 = vand.u32 %v2379, 4294901760
      %2722 = vmatmul.f32.gmra.mxu0 %v2721
      %v2723 = vpop.f32.mrf.mxu0
      %v2724 = vadd.f32 %v2677, %v2723
      %v2725 = vand.u32 %v2382, 4294901760
      %2726 = vmatmul.f32.gmra.mxu0 %v2725
      %v2727 = vpop.f32.mrf.mxu0
      %v2728 = vadd.f32 %v2685, %v2727
      %2729 = vdwg.mxu0
      %2730 = vmatpush.msra.mxu0 0.0
      %2731 = vmatpush.msra.mxu0 0.0
      %2732 = vmatpush.msra.mxu0 0.0
      %2733 = vmatpush.msra.mxu0 0.0
      %2734 = vmatpush.msra.mxu0 0.0
      %2735 = vmatpush.msra.mxu0 0.0
      %2736 = vmatpush.msra.mxu0 0.0
      %2737 = vmatpush.msra.mxu0 0.0
      %2738 = vmatpush.msra.mxu0 0.0
      %2739 = vmatpush.msra.mxu0 0.0
      %2740 = vmatpush.msra.mxu0 0.0
      %2741 = vmatpush.msra.mxu0 0.0
      %2742 = vmatpush.msra.mxu0 0.0
      %2743 = vmatpush.msra.mxu0 0.0
      %v2744 = vand.u32 %v2367, 4294901760
      %v2745 = vsub.f32 %v2367, %v2744
      %2746 = vmatpush.msra.mxu0 %v2745
      %v2747 = vand.u32 %v2365, 4294901760
      %v2748 = vsub.f32 %v2365, %v2747
      %2749 = vmatpush.msra.mxu0 %v2748
      %v2750 = vand.u32 %v2373, 4294901760
      %v2751 = vsub.f32 %v2373, %v2750
      %2752 = vmatmul.f32.gmra.mxu0 %v2751
      %v2753 = vpop.f32.mrf.mxu0
      %v2754 = vadd.f32 %v2716, %v2753
      %v2755 = vand.u32 %v2376, 4294901760
      %v2756 = vsub.f32 %v2376, %v2755
      %2757 = vmatmul.f32.gmra.mxu0 %v2756
      %v2758 = vpop.f32.mrf.mxu0
      %v2759 = vadd.f32 %v2720, %v2758
      %v2760 = vand.u32 %v2379, 4294901760
      %v2761 = vsub.f32 %v2379, %v2760
      %2762 = vmatmul.f32.gmra.mxu0 %v2761
      %v2763 = vpop.f32.mrf.mxu0
      %v2764 = vadd.f32 %v2724, %v2763
      %v2765 = vand.u32 %v2382, 4294901760
      %v2766 = vsub.f32 %v2382, %v2765
      %2767 = vmatmul.f32.gmra.mxu0 %v2766
      %v2768 = vpop.f32.mrf.mxu0
      %v2769 = vadd.f32 %v2728, %v2768
      %2770 = vdwg.mxu0
      %2771 = vmatpush.msra.mxu0 0.0
      %2772 = vmatpush.msra.mxu0 0.0
      %2773 = vmatpush.msra.mxu0 0.0
      %2774 = vmatpush.msra.mxu0 0.0
      %2775 = vmatpush.msra.mxu0 0.0
      %2776 = vmatpush.msra.mxu0 0.0
      %2777 = vmatpush.msra.mxu0 0.0
      %2778 = vmatpush.msra.mxu0 0.0
      %2779 = vmatpush.msra.mxu0 0.0
      %2780 = vmatpush.msra.mxu0 0.0
      %2781 = vmatpush.msra.mxu0 0.0
      %2782 = vmatpush.msra.mxu0 0.0
      %2783 = vmatpush.msra.mxu0 0.0
      %2784 = vmatpush.msra.mxu0 0.0
      %v2785 = vand.u32 %v2367, 4294901760
      %2786 = vmatpush.msra.mxu0 %v2785
      %v2787 = vand.u32 %v2365, 4294901760
      %2788 = vmatpush.msra.mxu0 %v2787
      %v2789 = vand.u32 %v2373, 4294901760
      %v2790 = vsub.f32 %v2373, %v2789
      %v2791 = vand.u32 %v2790, 4294901760
      %2792 = vmatmul.f32.gmra.mxu0 %v2791
      %v2793 = vpop.f32.mrf.mxu0
      %v2794 = vadd.f32 %v2754, %v2793
      %v2795 = vand.u32 %v2376, 4294901760
      %v2796 = vsub.f32 %v2376, %v2795
      %v2797 = vand.u32 %v2796, 4294901760
      %2798 = vmatmul.f32.gmra.mxu0 %v2797
      %v2799 = vpop.f32.mrf.mxu0
      %v2800 = vadd.f32 %v2759, %v2799
      %v2801 = vand.u32 %v2379, 4294901760
      %v2802 = vsub.f32 %v2379, %v2801
      %v2803 = vand.u32 %v2802, 4294901760
      %2804 = vmatmul.f32.gmra.mxu0 %v2803
      %v2805 = vpop.f32.mrf.mxu0
      %v2806 = vadd.f32 %v2764, %v2805
      %v2807 = vand.u32 %v2382, 4294901760
      %v2808 = vsub.f32 %v2382, %v2807
      %v2809 = vand.u32 %v2808, 4294901760
      %2810 = vmatmul.f32.gmra.mxu0 %v2809
      %v2811 = vpop.f32.mrf.mxu0
      %v2812 = vadd.f32 %v2769, %v2811
      %2813 = vdwg.mxu0
      %2814 = vmatpush.msra.mxu0 0.0
      %2815 = vmatpush.msra.mxu0 0.0
      %2816 = vmatpush.msra.mxu0 0.0
      %2817 = vmatpush.msra.mxu0 0.0
      %2818 = vmatpush.msra.mxu0 0.0
      %2819 = vmatpush.msra.mxu0 0.0
      %2820 = vmatpush.msra.mxu0 0.0
      %2821 = vmatpush.msra.mxu0 0.0
      %2822 = vmatpush.msra.mxu0 0.0
      %2823 = vmatpush.msra.mxu0 0.0
      %2824 = vmatpush.msra.mxu0 0.0
      %2825 = vmatpush.msra.mxu0 0.0
      %2826 = vmatpush.msra.mxu0 0.0
      %2827 = vmatpush.msra.mxu0 0.0
      %v2828 = vand.u32 %v2367, 4294901760
      %v2829 = vsub.f32 %v2367, %v2828
      %v2830 = vand.u32 %v2829, 4294901760
      %2831 = vmatpush.msra.mxu0 %v2830
      %v2832 = vand.u32 %v2365, 4294901760
      %v2833 = vsub.f32 %v2365, %v2832
      %v2834 = vand.u32 %v2833, 4294901760
      %2835 = vmatpush.msra.mxu0 %v2834
      %v2836 = vand.u32 %v2373, 4294901760
      %2837 = vmatmul.f32.gmra.mxu0 %v2836
      %v2838 = vpop.f32.mrf.mxu0
      %v2839 = vadd.f32 %v2794, %v2838
      %v2840 = vand.u32 %v2376, 4294901760
      %2841 = vmatmul.f32.gmra.mxu0 %v2840
      %v2842 = vpop.f32.mrf.mxu0
      %v2843 = vadd.f32 %v2800, %v2842
      %v2844 = vand.u32 %v2379, 4294901760
      %2845 = vmatmul.f32.gmra.mxu0 %v2844
      %v2846 = vpop.f32.mrf.mxu0
      %v2847 = vadd.f32 %v2806, %v2846
      %v2848 = vand.u32 %v2382, 4294901760
      %2849 = vmatmul.f32.gmra.mxu0 %v2848
      %v2850 = vpop.f32.mrf.mxu0
      %v2851 = vadd.f32 %v2812, %v2850
      %2852 = vdwg.mxu0
      %2853 = vmatpush.msra.mxu0 0.0
      %2854 = vmatpush.msra.mxu0 0.0
      %2855 = vmatpush.msra.mxu0 0.0
      %2856 = vmatpush.msra.mxu0 0.0
      %2857 = vmatpush.msra.mxu0 0.0
      %2858 = vmatpush.msra.mxu0 0.0
      %2859 = vmatpush.msra.mxu0 0.0
      %2860 = vmatpush.msra.mxu0 0.0
      %2861 = vmatpush.msra.mxu0 0.0
      %2862 = vmatpush.msra.mxu0 0.0
      %2863 = vmatpush.msra.mxu0 0.0
      %2864 = vmatpush.msra.mxu0 0.0
      %2865 = vmatpush.msra.mxu0 0.0
      %2866 = vmatpush.msra.mxu0 0.0
      %v2867 = vand.u32 %v2367, 4294901760
      %2868 = vmatpush.msra.mxu0 %v2867
      %v2869 = vand.u32 %v2365, 4294901760
      %2870 = vmatpush.msra.mxu0 %v2869
      %v2871 = vand.u32 %v2373, 4294901760
      %2872 = vmatmul.f32.gmra.mxu0 %v2871
      %v2873 = vpop.f32.mrf.mxu0
      %v2874 = vadd.f32 %v2839, %v2873
      %v2875 = vand.u32 %v2376, 4294901760
      %2876 = vmatmul.f32.gmra.mxu0 %v2875
      %v2877 = vpop.f32.mrf.mxu0
      %v2878 = vadd.f32 %v2843, %v2877
      %v2879 = vand.u32 %v2379, 4294901760
      %2880 = vmatmul.f32.gmra.mxu0 %v2879
      %v2881 = vpop.f32.mrf.mxu0
      %v2882 = vadd.f32 %v2847, %v2881
      %v2883 = vand.u32 %v2382, 4294901760
      %2884 = vmatmul.f32.gmra.mxu0 %v2883
      %v2885 = vpop.f32.mrf.mxu0
      %v2886 = vadd.f32 %v2851, %v2885
      %2887 = vdwg.mxu0
      %v2888 = vadd.f32 %v2338, %v2622
      %v2889 = vadd.f32 %v2339, %v2874
      %v2890 = vadd.f32 %v2340, %v2626
      %v2891 = vadd.f32 %v2341, %v2878
      %v2892 = vadd.f32 %v2342, %v2630
      %v2893 = vadd.f32 %v2343, %v2882
      %v2894 = vadd.f32 %v2344, %v2634
      %v2895 = vadd.f32 %v2345, %v2886
      %s2896 = scalar_lea.vmem %s1, 160
      %v2897 = vld [vmem:[%s2896] sm:$0xff]
      %v2898 = vld [vmem:[%s2896 + $0x8] sm:$0xff]
      %v2899 = vld [vmem:[%s2896 + $0x10] sm:$0xff]
      %v2900 = vld [vmem:[%s2896 + $0x18] sm:$0xff]
      %2901 = vrot.lane.b32.xlu0 %v171, 110
      %v2902 = vpop.permute.xlu0 %2901
      %2903 = vrot.lane.b32.xlu0 %v172, 110
      %v2904 = vpop.permute.xlu0 %2903
      %2905 = vrot.lane.b32.xlu0 %v179, 110
      %v2906 = vpop.permute.xlu0 %2905
      %2907 = vrot.lane.b32.xlu0 %v173, 110
      %v2908 = vpop.permute.xlu0 %2907
      %2909 = vrot.lane.b32.xlu0 %v174, 110
      %v2910 = vpop.permute.xlu0 %2909
      %2911 = vrot.lane.b32.xlu0 %v180, 110
      %v2912 = vpop.permute.xlu0 %2911
      %vm2913 = vcmask 900096
      %v2914 = vsel %vm2913, %v2902, %v2904
      %v2915 = vsel %vm2913, %v2904, %v2906
      %v2916 = vsel %vm2913, %v2908, %v2910
      %v2917 = vsel %vm2913, %v2910, %v2912
      %v2923 = vsel %vm213, %v2897, 0
      %v2926 = vsel %vm213, %v2898, 0
      %v2929 = vsel %vm213, %v2899, 0
      %v2932 = vsel %vm213, %v2900, 0
      %2934 = vmatpush.msra.mxu0 0.0
      %2935 = vmatpush.msra.mxu0 0.0
      %2936 = vmatpush.msra.mxu0 0.0
      %2937 = vmatpush.msra.mxu0 0.0
      %2938 = vmatpush.msra.mxu0 0.0
      %2939 = vmatpush.msra.mxu0 0.0
      %2940 = vmatpush.msra.mxu0 0.0
      %2941 = vmatpush.msra.mxu0 0.0
      %2942 = vmatpush.msra.mxu0 0.0
      %2943 = vmatpush.msra.mxu0 0.0
      %2944 = vmatpush.msra.mxu0 0.0
      %2945 = vmatpush.msra.mxu0 0.0
      %2946 = vmatpush.msra.mxu0 0.0
      %2947 = vmatpush.msra.mxu0 0.0
      %v2948 = vand.u32 %v2916, 4294901760
      %2949 = vmatpush.msra.mxu0 %v2948
      %v2950 = vand.u32 %v2914, 4294901760
      %2951 = vmatpush.msra.mxu0 %v2950
      %v2952 = vand.u32 %v2923, 4294901760
      %v2953 = vsub.f32 %v2923, %v2952
      %v2954 = vand.u32 %v2953, 4294901760
      %v2955 = vsub.f32 %v2953, %v2954
      %v2956 = vand.u32 %v2955, 4294901760
      %2957 = vmatmul.f32.gmra.mxu0 %v2956
      %v2958 = vpop.f32.mrf.mxu0
      %v2959 = vadd.f32 0.0, %v2958
      %v2960 = vand.u32 %v2926, 4294901760
      %v2961 = vsub.f32 %v2926, %v2960
      %v2962 = vand.u32 %v2961, 4294901760
      %v2963 = vsub.f32 %v2961, %v2962
      %v2964 = vand.u32 %v2963, 4294901760
      %2965 = vmatmul.f32.gmra.mxu0 %v2964
      %v2966 = vpop.f32.mrf.mxu0
      %v2967 = vadd.f32 0.0, %v2966
      %v2968 = vand.u32 %v2929, 4294901760
      %v2969 = vsub.f32 %v2929, %v2968
      %v2970 = vand.u32 %v2969, 4294901760
      %v2971 = vsub.f32 %v2969, %v2970
      %v2972 = vand.u32 %v2971, 4294901760
      %2973 = vmatmul.f32.gmra.mxu0 %v2972
      %v2974 = vpop.f32.mrf.mxu0
      %v2975 = vadd.f32 0.0, %v2974
      %v2976 = vand.u32 %v2932, 4294901760
      %v2977 = vsub.f32 %v2932, %v2976
      %v2978 = vand.u32 %v2977, 4294901760
      %v2979 = vsub.f32 %v2977, %v2978
      %v2980 = vand.u32 %v2979, 4294901760
      %2981 = vmatmul.f32.gmra.mxu0 %v2980
      %v2982 = vpop.f32.mrf.mxu0
      %v2983 = vadd.f32 0.0, %v2982
      %2984 = vdwg.mxu0
      %2985 = vmatpush.msra.mxu0 0.0
      %2986 = vmatpush.msra.mxu0 0.0
      %2987 = vmatpush.msra.mxu0 0.0
      %2988 = vmatpush.msra.mxu0 0.0
      %2989 = vmatpush.msra.mxu0 0.0
      %2990 = vmatpush.msra.mxu0 0.0
      %2991 = vmatpush.msra.mxu0 0.0
      %2992 = vmatpush.msra.mxu0 0.0
      %2993 = vmatpush.msra.mxu0 0.0
      %2994 = vmatpush.msra.mxu0 0.0
      %2995 = vmatpush.msra.mxu0 0.0
      %2996 = vmatpush.msra.mxu0 0.0
      %2997 = vmatpush.msra.mxu0 0.0
      %2998 = vmatpush.msra.mxu0 0.0
      %v2999 = vand.u32 %v2916, 4294901760
      %v3000 = vsub.f32 %v2916, %v2999
      %v3001 = vand.u32 %v3000, 4294901760
      %v3002 = vsub.f32 %v3000, %v3001
      %v3003 = vand.u32 %v3002, 4294901760
      %3004 = vmatpush.msra.mxu0 %v3003
      %v3005 = vand.u32 %v2914, 4294901760
      %v3006 = vsub.f32 %v2914, %v3005
      %v3007 = vand.u32 %v3006, 4294901760
      %v3008 = vsub.f32 %v3006, %v3007
      %v3009 = vand.u32 %v3008, 4294901760
      %3010 = vmatpush.msra.mxu0 %v3009
      %v3011 = vand.u32 %v2923, 4294901760
      %3012 = vmatmul.f32.gmra.mxu0 %v3011
      %v3013 = vpop.f32.mrf.mxu0
      %v3014 = vadd.f32 %v2959, %v3013
      %v3015 = vand.u32 %v2926, 4294901760
      %3016 = vmatmul.f32.gmra.mxu0 %v3015
      %v3017 = vpop.f32.mrf.mxu0
      %v3018 = vadd.f32 %v2967, %v3017
      %v3019 = vand.u32 %v2929, 4294901760
      %3020 = vmatmul.f32.gmra.mxu0 %v3019
      %v3021 = vpop.f32.mrf.mxu0
      %v3022 = vadd.f32 %v2975, %v3021
      %v3023 = vand.u32 %v2932, 4294901760
      %3024 = vmatmul.f32.gmra.mxu0 %v3023
      %v3025 = vpop.f32.mrf.mxu0
      %v3026 = vadd.f32 %v2983, %v3025
      %3027 = vdwg.mxu0
      %3028 = vmatpush.msra.mxu0 0.0
      %3029 = vmatpush.msra.mxu0 0.0
      %3030 = vmatpush.msra.mxu0 0.0
      %3031 = vmatpush.msra.mxu0 0.0
      %3032 = vmatpush.msra.mxu0 0.0
      %3033 = vmatpush.msra.mxu0 0.0
      %3034 = vmatpush.msra.mxu0 0.0
      %3035 = vmatpush.msra.mxu0 0.0
      %3036 = vmatpush.msra.mxu0 0.0
      %3037 = vmatpush.msra.mxu0 0.0
      %3038 = vmatpush.msra.mxu0 0.0
      %3039 = vmatpush.msra.mxu0 0.0
      %3040 = vmatpush.msra.mxu0 0.0
      %3041 = vmatpush.msra.mxu0 0.0
      %v3042 = vand.u32 %v2916, 4294901760
      %v3043 = vsub.f32 %v2916, %v3042
      %3044 = vmatpush.msra.mxu0 %v3043
      %v3045 = vand.u32 %v2914, 4294901760
      %v3046 = vsub.f32 %v2914, %v3045
      %3047 = vmatpush.msra.mxu0 %v3046
      %v3048 = vand.u32 %v2923, 4294901760
      %v3049 = vsub.f32 %v2923, %v3048
      %3050 = vmatmul.f32.gmra.mxu0 %v3049
      %v3051 = vpop.f32.mrf.mxu0
      %v3052 = vadd.f32 %v3014, %v3051
      %v3053 = vand.u32 %v2926, 4294901760
      %v3054 = vsub.f32 %v2926, %v3053
      %3055 = vmatmul.f32.gmra.mxu0 %v3054
      %v3056 = vpop.f32.mrf.mxu0
      %v3057 = vadd.f32 %v3018, %v3056
      %v3058 = vand.u32 %v2929, 4294901760
      %v3059 = vsub.f32 %v2929, %v3058
      %3060 = vmatmul.f32.gmra.mxu0 %v3059
      %v3061 = vpop.f32.mrf.mxu0
      %v3062 = vadd.f32 %v3022, %v3061
      %v3063 = vand.u32 %v2932, 4294901760
      %v3064 = vsub.f32 %v2932, %v3063
      %3065 = vmatmul.f32.gmra.mxu0 %v3064
      %v3066 = vpop.f32.mrf.mxu0
      %v3067 = vadd.f32 %v3026, %v3066
      %3068 = vdwg.mxu0
      %3069 = vmatpush.msra.mxu0 0.0
      %3070 = vmatpush.msra.mxu0 0.0
      %3071 = vmatpush.msra.mxu0 0.0
      %3072 = vmatpush.msra.mxu0 0.0
      %3073 = vmatpush.msra.mxu0 0.0
      %3074 = vmatpush.msra.mxu0 0.0
      %3075 = vmatpush.msra.mxu0 0.0
      %3076 = vmatpush.msra.mxu0 0.0
      %3077 = vmatpush.msra.mxu0 0.0
      %3078 = vmatpush.msra.mxu0 0.0
      %3079 = vmatpush.msra.mxu0 0.0
      %3080 = vmatpush.msra.mxu0 0.0
      %3081 = vmatpush.msra.mxu0 0.0
      %3082 = vmatpush.msra.mxu0 0.0
      %v3083 = vand.u32 %v2916, 4294901760
      %3084 = vmatpush.msra.mxu0 %v3083
      %v3085 = vand.u32 %v2914, 4294901760
      %3086 = vmatpush.msra.mxu0 %v3085
      %v3087 = vand.u32 %v2923, 4294901760
      %v3088 = vsub.f32 %v2923, %v3087
      %v3089 = vand.u32 %v3088, 4294901760
      %3090 = vmatmul.f32.gmra.mxu0 %v3089
      %v3091 = vpop.f32.mrf.mxu0
      %v3092 = vadd.f32 %v3052, %v3091
      %v3093 = vand.u32 %v2926, 4294901760
      %v3094 = vsub.f32 %v2926, %v3093
      %v3095 = vand.u32 %v3094, 4294901760
      %3096 = vmatmul.f32.gmra.mxu0 %v3095
      %v3097 = vpop.f32.mrf.mxu0
      %v3098 = vadd.f32 %v3057, %v3097
      %v3099 = vand.u32 %v2929, 4294901760
      %v3100 = vsub.f32 %v2929, %v3099
      %v3101 = vand.u32 %v3100, 4294901760
      %3102 = vmatmul.f32.gmra.mxu0 %v3101
      %v3103 = vpop.f32.mrf.mxu0
      %v3104 = vadd.f32 %v3062, %v3103
      %v3105 = vand.u32 %v2932, 4294901760
      %v3106 = vsub.f32 %v2932, %v3105
      %v3107 = vand.u32 %v3106, 4294901760
      %3108 = vmatmul.f32.gmra.mxu0 %v3107
      %v3109 = vpop.f32.mrf.mxu0
      %v3110 = vadd.f32 %v3067, %v3109
      %3111 = vdwg.mxu0
      %3112 = vmatpush.msra.mxu0 0.0
      %3113 = vmatpush.msra.mxu0 0.0
      %3114 = vmatpush.msra.mxu0 0.0
      %3115 = vmatpush.msra.mxu0 0.0
      %3116 = vmatpush.msra.mxu0 0.0
      %3117 = vmatpush.msra.mxu0 0.0
      %3118 = vmatpush.msra.mxu0 0.0
      %3119 = vmatpush.msra.mxu0 0.0
      %3120 = vmatpush.msra.mxu0 0.0
      %3121 = vmatpush.msra.mxu0 0.0
      %3122 = vmatpush.msra.mxu0 0.0
      %3123 = vmatpush.msra.mxu0 0.0
      %3124 = vmatpush.msra.mxu0 0.0
      %3125 = vmatpush.msra.mxu0 0.0
      %v3126 = vand.u32 %v2916, 4294901760
      %v3127 = vsub.f32 %v2916, %v3126
      %v3128 = vand.u32 %v3127, 4294901760
      %3129 = vmatpush.msra.mxu0 %v3128
      %v3130 = vand.u32 %v2914, 4294901760
      %v3131 = vsub.f32 %v2914, %v3130
      %v3132 = vand.u32 %v3131, 4294901760
      %3133 = vmatpush.msra.mxu0 %v3132
      %v3134 = vand.u32 %v2923, 4294901760
      %3135 = vmatmul.f32.gmra.mxu0 %v3134
      %v3136 = vpop.f32.mrf.mxu0
      %v3137 = vadd.f32 %v3092, %v3136
      %v3138 = vand.u32 %v2926, 4294901760
      %3139 = vmatmul.f32.gmra.mxu0 %v3138
      %v3140 = vpop.f32.mrf.mxu0
      %v3141 = vadd.f32 %v3098, %v3140
      %v3142 = vand.u32 %v2929, 4294901760
      %3143 = vmatmul.f32.gmra.mxu0 %v3142
      %v3144 = vpop.f32.mrf.mxu0
      %v3145 = vadd.f32 %v3104, %v3144
      %v3146 = vand.u32 %v2932, 4294901760
      %3147 = vmatmul.f32.gmra.mxu0 %v3146
      %v3148 = vpop.f32.mrf.mxu0
      %v3149 = vadd.f32 %v3110, %v3148
      %3150 = vdwg.mxu0
      %3151 = vmatpush.msra.mxu0 0.0
      %3152 = vmatpush.msra.mxu0 0.0
      %3153 = vmatpush.msra.mxu0 0.0
      %3154 = vmatpush.msra.mxu0 0.0
      %3155 = vmatpush.msra.mxu0 0.0
      %3156 = vmatpush.msra.mxu0 0.0
      %3157 = vmatpush.msra.mxu0 0.0
      %3158 = vmatpush.msra.mxu0 0.0
      %3159 = vmatpush.msra.mxu0 0.0
      %3160 = vmatpush.msra.mxu0 0.0
      %3161 = vmatpush.msra.mxu0 0.0
      %3162 = vmatpush.msra.mxu0 0.0
      %3163 = vmatpush.msra.mxu0 0.0
      %3164 = vmatpush.msra.mxu0 0.0
      %v3165 = vand.u32 %v2916, 4294901760
      %3166 = vmatpush.msra.mxu0 %v3165
      %v3167 = vand.u32 %v2914, 4294901760
      %3168 = vmatpush.msra.mxu0 %v3167
      %v3169 = vand.u32 %v2923, 4294901760
      %3170 = vmatmul.f32.gmra.mxu0 %v3169
      %v3171 = vpop.f32.mrf.mxu0
      %v3172 = vadd.f32 %v3137, %v3171
      %v3173 = vand.u32 %v2926, 4294901760
      %3174 = vmatmul.f32.gmra.mxu0 %v3173
      %v3175 = vpop.f32.mrf.mxu0
      %v3176 = vadd.f32 %v3141, %v3175
      %v3177 = vand.u32 %v2929, 4294901760
      %3178 = vmatmul.f32.gmra.mxu0 %v3177
      %v3179 = vpop.f32.mrf.mxu0
      %v3180 = vadd.f32 %v3145, %v3179
      %v3181 = vand.u32 %v2932, 4294901760
      %3182 = vmatmul.f32.gmra.mxu0 %v3181
      %v3183 = vpop.f32.mrf.mxu0
      %v3184 = vadd.f32 %v3149, %v3183
      %3185 = vdwg.mxu0
      %3186 = vmatpush.msra.mxu0 0.0
      %3187 = vmatpush.msra.mxu0 0.0
      %3188 = vmatpush.msra.mxu0 0.0
      %3189 = vmatpush.msra.mxu0 0.0
      %3190 = vmatpush.msra.mxu0 0.0
      %3191 = vmatpush.msra.mxu0 0.0
      %3192 = vmatpush.msra.mxu0 0.0
      %3193 = vmatpush.msra.mxu0 0.0
      %3194 = vmatpush.msra.mxu0 0.0
      %3195 = vmatpush.msra.mxu0 0.0
      %3196 = vmatpush.msra.mxu0 0.0
      %3197 = vmatpush.msra.mxu0 0.0
      %3198 = vmatpush.msra.mxu0 0.0
      %3199 = vmatpush.msra.mxu0 0.0
      %v3200 = vand.u32 %v2917, 4294901760
      %3201 = vmatpush.msra.mxu0 %v3200
      %v3202 = vand.u32 %v2915, 4294901760
      %3203 = vmatpush.msra.mxu0 %v3202
      %v3204 = vand.u32 %v2923, 4294901760
      %v3205 = vsub.f32 %v2923, %v3204
      %v3206 = vand.u32 %v3205, 4294901760
      %v3207 = vsub.f32 %v3205, %v3206
      %v3208 = vand.u32 %v3207, 4294901760
      %3209 = vmatmul.f32.gmra.mxu0 %v3208
      %v3210 = vpop.f32.mrf.mxu0
      %v3211 = vadd.f32 0.0, %v3210
      %v3212 = vand.u32 %v2926, 4294901760
      %v3213 = vsub.f32 %v2926, %v3212
      %v3214 = vand.u32 %v3213, 4294901760
      %v3215 = vsub.f32 %v3213, %v3214
      %v3216 = vand.u32 %v3215, 4294901760
      %3217 = vmatmul.f32.gmra.mxu0 %v3216
      %v3218 = vpop.f32.mrf.mxu0
      %v3219 = vadd.f32 0.0, %v3218
      %v3220 = vand.u32 %v2929, 4294901760
      %v3221 = vsub.f32 %v2929, %v3220
      %v3222 = vand.u32 %v3221, 4294901760
      %v3223 = vsub.f32 %v3221, %v3222
      %v3224 = vand.u32 %v3223, 4294901760
      %3225 = vmatmul.f32.gmra.mxu0 %v3224
      %v3226 = vpop.f32.mrf.mxu0
      %v3227 = vadd.f32 0.0, %v3226
      %v3228 = vand.u32 %v2932, 4294901760
      %v3229 = vsub.f32 %v2932, %v3228
      %v3230 = vand.u32 %v3229, 4294901760
      %v3231 = vsub.f32 %v3229, %v3230
      %v3232 = vand.u32 %v3231, 4294901760
      %3233 = vmatmul.f32.gmra.mxu0 %v3232
      %v3234 = vpop.f32.mrf.mxu0
      %v3235 = vadd.f32 0.0, %v3234
      %3236 = vdwg.mxu0
      %3237 = vmatpush.msra.mxu0 0.0
      %3238 = vmatpush.msra.mxu0 0.0
      %3239 = vmatpush.msra.mxu0 0.0
      %3240 = vmatpush.msra.mxu0 0.0
      %3241 = vmatpush.msra.mxu0 0.0
      %3242 = vmatpush.msra.mxu0 0.0
      %3243 = vmatpush.msra.mxu0 0.0
      %3244 = vmatpush.msra.mxu0 0.0
      %3245 = vmatpush.msra.mxu0 0.0
      %3246 = vmatpush.msra.mxu0 0.0
      %3247 = vmatpush.msra.mxu0 0.0
      %3248 = vmatpush.msra.mxu0 0.0
      %3249 = vmatpush.msra.mxu0 0.0
      %3250 = vmatpush.msra.mxu0 0.0
      %v3251 = vand.u32 %v2917, 4294901760
      %v3252 = vsub.f32 %v2917, %v3251
      %v3253 = vand.u32 %v3252, 4294901760
      %v3254 = vsub.f32 %v3252, %v3253
      %v3255 = vand.u32 %v3254, 4294901760
      %3256 = vmatpush.msra.mxu0 %v3255
      %v3257 = vand.u32 %v2915, 4294901760
      %v3258 = vsub.f32 %v2915, %v3257
      %v3259 = vand.u32 %v3258, 4294901760
      %v3260 = vsub.f32 %v3258, %v3259
      %v3261 = vand.u32 %v3260, 4294901760
      %3262 = vmatpush.msra.mxu0 %v3261
      %v3263 = vand.u32 %v2923, 4294901760
      %3264 = vmatmul.f32.gmra.mxu0 %v3263
      %v3265 = vpop.f32.mrf.mxu0
      %v3266 = vadd.f32 %v3211, %v3265
      %v3267 = vand.u32 %v2926, 4294901760
      %3268 = vmatmul.f32.gmra.mxu0 %v3267
      %v3269 = vpop.f32.mrf.mxu0
      %v3270 = vadd.f32 %v3219, %v3269
      %v3271 = vand.u32 %v2929, 4294901760
      %3272 = vmatmul.f32.gmra.mxu0 %v3271
      %v3273 = vpop.f32.mrf.mxu0
      %v3274 = vadd.f32 %v3227, %v3273
      %v3275 = vand.u32 %v2932, 4294901760
      %3276 = vmatmul.f32.gmra.mxu0 %v3275
      %v3277 = vpop.f32.mrf.mxu0
      %v3278 = vadd.f32 %v3235, %v3277
      %3279 = vdwg.mxu0
      %3280 = vmatpush.msra.mxu0 0.0
      %3281 = vmatpush.msra.mxu0 0.0
      %3282 = vmatpush.msra.mxu0 0.0
      %3283 = vmatpush.msra.mxu0 0.0
      %3284 = vmatpush.msra.mxu0 0.0
      %3285 = vmatpush.msra.mxu0 0.0
      %3286 = vmatpush.msra.mxu0 0.0
      %3287 = vmatpush.msra.mxu0 0.0
      %3288 = vmatpush.msra.mxu0 0.0
      %3289 = vmatpush.msra.mxu0 0.0
      %3290 = vmatpush.msra.mxu0 0.0
      %3291 = vmatpush.msra.mxu0 0.0
      %3292 = vmatpush.msra.mxu0 0.0
      %3293 = vmatpush.msra.mxu0 0.0
      %v3294 = vand.u32 %v2917, 4294901760
      %v3295 = vsub.f32 %v2917, %v3294
      %3296 = vmatpush.msra.mxu0 %v3295
      %v3297 = vand.u32 %v2915, 4294901760
      %v3298 = vsub.f32 %v2915, %v3297
      %3299 = vmatpush.msra.mxu0 %v3298
      %v3300 = vand.u32 %v2923, 4294901760
      %v3301 = vsub.f32 %v2923, %v3300
      %3302 = vmatmul.f32.gmra.mxu0 %v3301
      %v3303 = vpop.f32.mrf.mxu0
      %v3304 = vadd.f32 %v3266, %v3303
      %v3305 = vand.u32 %v2926, 4294901760
      %v3306 = vsub.f32 %v2926, %v3305
      %3307 = vmatmul.f32.gmra.mxu0 %v3306
      %v3308 = vpop.f32.mrf.mxu0
      %v3309 = vadd.f32 %v3270, %v3308
      %v3310 = vand.u32 %v2929, 4294901760
      %v3311 = vsub.f32 %v2929, %v3310
      %3312 = vmatmul.f32.gmra.mxu0 %v3311
      %v3313 = vpop.f32.mrf.mxu0
      %v3314 = vadd.f32 %v3274, %v3313
      %v3315 = vand.u32 %v2932, 4294901760
      %v3316 = vsub.f32 %v2932, %v3315
      %3317 = vmatmul.f32.gmra.mxu0 %v3316
      %v3318 = vpop.f32.mrf.mxu0
      %v3319 = vadd.f32 %v3278, %v3318
      %3320 = vdwg.mxu0
      %3321 = vmatpush.msra.mxu0 0.0
      %3322 = vmatpush.msra.mxu0 0.0
      %3323 = vmatpush.msra.mxu0 0.0
      %3324 = vmatpush.msra.mxu0 0.0
      %3325 = vmatpush.msra.mxu0 0.0
      %3326 = vmatpush.msra.mxu0 0.0
      %3327 = vmatpush.msra.mxu0 0.0
      %3328 = vmatpush.msra.mxu0 0.0
      %3329 = vmatpush.msra.mxu0 0.0
      %3330 = vmatpush.msra.mxu0 0.0
      %3331 = vmatpush.msra.mxu0 0.0
      %3332 = vmatpush.msra.mxu0 0.0
      %3333 = vmatpush.msra.mxu0 0.0
      %3334 = vmatpush.msra.mxu0 0.0
      %v3335 = vand.u32 %v2917, 4294901760
      %3336 = vmatpush.msra.mxu0 %v3335
      %v3337 = vand.u32 %v2915, 4294901760
      %3338 = vmatpush.msra.mxu0 %v3337
      %v3339 = vand.u32 %v2923, 4294901760
      %v3340 = vsub.f32 %v2923, %v3339
      %v3341 = vand.u32 %v3340, 4294901760
      %3342 = vmatmul.f32.gmra.mxu0 %v3341
      %v3343 = vpop.f32.mrf.mxu0
      %v3344 = vadd.f32 %v3304, %v3343
      %v3345 = vand.u32 %v2926, 4294901760
      %v3346 = vsub.f32 %v2926, %v3345
      %v3347 = vand.u32 %v3346, 4294901760
      %3348 = vmatmul.f32.gmra.mxu0 %v3347
      %v3349 = vpop.f32.mrf.mxu0
      %v3350 = vadd.f32 %v3309, %v3349
      %v3351 = vand.u32 %v2929, 4294901760
      %v3352 = vsub.f32 %v2929, %v3351
      %v3353 = vand.u32 %v3352, 4294901760
      %3354 = vmatmul.f32.gmra.mxu0 %v3353
      %v3355 = vpop.f32.mrf.mxu0
      %v3356 = vadd.f32 %v3314, %v3355
      %v3357 = vand.u32 %v2932, 4294901760
      %v3358 = vsub.f32 %v2932, %v3357
      %v3359 = vand.u32 %v3358, 4294901760
      %3360 = vmatmul.f32.gmra.mxu0 %v3359
      %v3361 = vpop.f32.mrf.mxu0
      %v3362 = vadd.f32 %v3319, %v3361
      %3363 = vdwg.mxu0
      %3364 = vmatpush.msra.mxu0 0.0
      %3365 = vmatpush.msra.mxu0 0.0
      %3366 = vmatpush.msra.mxu0 0.0
      %3367 = vmatpush.msra.mxu0 0.0
      %3368 = vmatpush.msra.mxu0 0.0
      %3369 = vmatpush.msra.mxu0 0.0
      %3370 = vmatpush.msra.mxu0 0.0
      %3371 = vmatpush.msra.mxu0 0.0
      %3372 = vmatpush.msra.mxu0 0.0
      %3373 = vmatpush.msra.mxu0 0.0
      %3374 = vmatpush.msra.mxu0 0.0
      %3375 = vmatpush.msra.mxu0 0.0
      %3376 = vmatpush.msra.mxu0 0.0
      %3377 = vmatpush.msra.mxu0 0.0
      %v3378 = vand.u32 %v2917, 4294901760
      %v3379 = vsub.f32 %v2917, %v3378
      %v3380 = vand.u32 %v3379, 4294901760
      %3381 = vmatpush.msra.mxu0 %v3380
      %v3382 = vand.u32 %v2915, 4294901760
      %v3383 = vsub.f32 %v2915, %v3382
      %v3384 = vand.u32 %v3383, 4294901760
      %3385 = vmatpush.msra.mxu0 %v3384
      %v3386 = vand.u32 %v2923, 4294901760
      %3387 = vmatmul.f32.gmra.mxu0 %v3386
      %v3388 = vpop.f32.mrf.mxu0
      %v3389 = vadd.f32 %v3344, %v3388
      %v3390 = vand.u32 %v2926, 4294901760
      %3391 = vmatmul.f32.gmra.mxu0 %v3390
      %v3392 = vpop.f32.mrf.mxu0
      %v3393 = vadd.f32 %v3350, %v3392
      %v3394 = vand.u32 %v2929, 4294901760
      %3395 = vmatmul.f32.gmra.mxu0 %v3394
      %v3396 = vpop.f32.mrf.mxu0
      %v3397 = vadd.f32 %v3356, %v3396
      %v3398 = vand.u32 %v2932, 4294901760
      %3399 = vmatmul.f32.gmra.mxu0 %v3398
      %v3400 = vpop.f32.mrf.mxu0
      %v3401 = vadd.f32 %v3362, %v3400
      %3402 = vdwg.mxu0
      %3403 = vmatpush.msra.mxu0 0.0
      %3404 = vmatpush.msra.mxu0 0.0
      %3405 = vmatpush.msra.mxu0 0.0
      %3406 = vmatpush.msra.mxu0 0.0
      %3407 = vmatpush.msra.mxu0 0.0
      %3408 = vmatpush.msra.mxu0 0.0
      %3409 = vmatpush.msra.mxu0 0.0
      %3410 = vmatpush.msra.mxu0 0.0
      %3411 = vmatpush.msra.mxu0 0.0
      %3412 = vmatpush.msra.mxu0 0.0
      %3413 = vmatpush.msra.mxu0 0.0
      %3414 = vmatpush.msra.mxu0 0.0
      %3415 = vmatpush.msra.mxu0 0.0
      %3416 = vmatpush.msra.mxu0 0.0
      %v3417 = vand.u32 %v2917, 4294901760
      %3418 = vmatpush.msra.mxu0 %v3417
      %v3419 = vand.u32 %v2915, 4294901760
      %3420 = vmatpush.msra.mxu0 %v3419
      %v3421 = vand.u32 %v2923, 4294901760
      %3422 = vmatmul.f32.gmra.mxu0 %v3421
      %v3423 = vpop.f32.mrf.mxu0
      %v3424 = vadd.f32 %v3389, %v3423
      %v3425 = vand.u32 %v2926, 4294901760
      %3426 = vmatmul.f32.gmra.mxu0 %v3425
      %v3427 = vpop.f32.mrf.mxu0
      %v3428 = vadd.f32 %v3393, %v3427
      %v3429 = vand.u32 %v2929, 4294901760
      %3430 = vmatmul.f32.gmra.mxu0 %v3429
      %v3431 = vpop.f32.mrf.mxu0
      %v3432 = vadd.f32 %v3397, %v3431
      %v3433 = vand.u32 %v2932, 4294901760
      %3434 = vmatmul.f32.gmra.mxu0 %v3433
      %v3435 = vpop.f32.mrf.mxu0
      %v3436 = vadd.f32 %v3401, %v3435
      %3437 = vdwg.mxu0
      %v3438 = vadd.f32 %v2888, %v3172
      %v3439 = vadd.f32 %v2889, %v3424
      %v3440 = vadd.f32 %v2890, %v3176
      %v3441 = vadd.f32 %v2891, %v3428
      %v3442 = vadd.f32 %v2892, %v3180
      %v3443 = vadd.f32 %v2893, %v3432
      %v3444 = vadd.f32 %v2894, %v3184
      %v3445 = vadd.f32 %v2895, %v3436
      %s3446 = scalar_lea.vmem %s1, 192
      %v3447 = vld [vmem:[%s3446] sm:$0xff]
      %v3448 = vld [vmem:[%s3446 + $0x8] sm:$0xff]
      %v3449 = vld [vmem:[%s3446 + $0x10] sm:$0xff]
      %v3450 = vld [vmem:[%s3446 + $0x18] sm:$0xff]
      %3451 = vrot.lane.b32.xlu0 %v171, 96
      %v3452 = vpop.permute.xlu0 %3451
      %3453 = vrot.lane.b32.xlu0 %v172, 96
      %v3454 = vpop.permute.xlu0 %3453
      %3455 = vrot.lane.b32.xlu0 %v179, 96
      %v3456 = vpop.permute.xlu0 %3455
      %3457 = vrot.lane.b32.xlu0 %v173, 96
      %v3458 = vpop.permute.xlu0 %3457
      %3459 = vrot.lane.b32.xlu0 %v174, 96
      %v3460 = vpop.permute.xlu0 %3459
      %3461 = vrot.lane.b32.xlu0 %v180, 96
      %v3462 = vpop.permute.xlu0 %3461
      %vm3463 = vcmask 785408
      %v3464 = vsel %vm3463, %v3452, %v3454
      %v3465 = vsel %vm3463, %v3454, %v3456
      %v3466 = vsel %vm3463, %v3458, %v3460
      %v3467 = vsel %vm3463, %v3460, %v3462
      %v3473 = vsel %vm213, %v3447, 0
      %v3476 = vsel %vm213, %v3448, 0
      %v3479 = vsel %vm213, %v3449, 0
      %v3482 = vsel %vm213, %v3450, 0
      %3484 = vmatpush.msra.mxu0 0.0
      %3485 = vmatpush.msra.mxu0 0.0
      %3486 = vmatpush.msra.mxu0 0.0
      %3487 = vmatpush.msra.mxu0 0.0
      %3488 = vmatpush.msra.mxu0 0.0
      %3489 = vmatpush.msra.mxu0 0.0
      %3490 = vmatpush.msra.mxu0 0.0
      %3491 = vmatpush.msra.mxu0 0.0
      %3492 = vmatpush.msra.mxu0 0.0
      %3493 = vmatpush.msra.mxu0 0.0
      %3494 = vmatpush.msra.mxu0 0.0
      %3495 = vmatpush.msra.mxu0 0.0
      %3496 = vmatpush.msra.mxu0 0.0
      %3497 = vmatpush.msra.mxu0 0.0
      %v3498 = vand.u32 %v3466, 4294901760
      %3499 = vmatpush.msra.mxu0 %v3498
      %v3500 = vand.u32 %v3464, 4294901760
      %3501 = vmatpush.msra.mxu0 %v3500
      %v3502 = vand.u32 %v3473, 4294901760
      %v3503 = vsub.f32 %v3473, %v3502
      %v3504 = vand.u32 %v3503, 4294901760
      %v3505 = vsub.f32 %v3503, %v3504
      %v3506 = vand.u32 %v3505, 4294901760
      %3507 = vmatmul.f32.gmra.mxu0 %v3506
      %v3508 = vpop.f32.mrf.mxu0
      %v3509 = vadd.f32 0.0, %v3508
      %v3510 = vand.u32 %v3476, 4294901760
      %v3511 = vsub.f32 %v3476, %v3510
      %v3512 = vand.u32 %v3511, 4294901760
      %v3513 = vsub.f32 %v3511, %v3512
      %v3514 = vand.u32 %v3513, 4294901760
      %3515 = vmatmul.f32.gmra.mxu0 %v3514
      %v3516 = vpop.f32.mrf.mxu0
      %v3517 = vadd.f32 0.0, %v3516
      %v3518 = vand.u32 %v3479, 4294901760
      %v3519 = vsub.f32 %v3479, %v3518
      %v3520 = vand.u32 %v3519, 4294901760
      %v3521 = vsub.f32 %v3519, %v3520
      %v3522 = vand.u32 %v3521, 4294901760
      %3523 = vmatmul.f32.gmra.mxu0 %v3522
      %v3524 = vpop.f32.mrf.mxu0
      %v3525 = vadd.f32 0.0, %v3524
      %v3526 = vand.u32 %v3482, 4294901760
      %v3527 = vsub.f32 %v3482, %v3526
      %v3528 = vand.u32 %v3527, 4294901760
      %v3529 = vsub.f32 %v3527, %v3528
      %v3530 = vand.u32 %v3529, 4294901760
      %3531 = vmatmul.f32.gmra.mxu0 %v3530
      %v3532 = vpop.f32.mrf.mxu0
      %v3533 = vadd.f32 0.0, %v3532
      %3534 = vdwg.mxu0
      %3535 = vmatpush.msra.mxu0 0.0
      %3536 = vmatpush.msra.mxu0 0.0
      %3537 = vmatpush.msra.mxu0 0.0
      %3538 = vmatpush.msra.mxu0 0.0
      %3539 = vmatpush.msra.mxu0 0.0
      %3540 = vmatpush.msra.mxu0 0.0
      %3541 = vmatpush.msra.mxu0 0.0
      %3542 = vmatpush.msra.mxu0 0.0
      %3543 = vmatpush.msra.mxu0 0.0
      %3544 = vmatpush.msra.mxu0 0.0
      %3545 = vmatpush.msra.mxu0 0.0
      %3546 = vmatpush.msra.mxu0 0.0
      %3547 = vmatpush.msra.mxu0 0.0
      %3548 = vmatpush.msra.mxu0 0.0
      %v3549 = vand.u32 %v3466, 4294901760
      %v3550 = vsub.f32 %v3466, %v3549
      %v3551 = vand.u32 %v3550, 4294901760
      %v3552 = vsub.f32 %v3550, %v3551
      %v3553 = vand.u32 %v3552, 4294901760
      %3554 = vmatpush.msra.mxu0 %v3553
      %v3555 = vand.u32 %v3464, 4294901760
      %v3556 = vsub.f32 %v3464, %v3555
      %v3557 = vand.u32 %v3556, 4294901760
      %v3558 = vsub.f32 %v3556, %v3557
      %v3559 = vand.u32 %v3558, 4294901760
      %3560 = vmatpush.msra.mxu0 %v3559
      %v3561 = vand.u32 %v3473, 4294901760
      %3562 = vmatmul.f32.gmra.mxu0 %v3561
      %v3563 = vpop.f32.mrf.mxu0
      %v3564 = vadd.f32 %v3509, %v3563
      %v3565 = vand.u32 %v3476, 4294901760
      %3566 = vmatmul.f32.gmra.mxu0 %v3565
      %v3567 = vpop.f32.mrf.mxu0
      %v3568 = vadd.f32 %v3517, %v3567
      %v3569 = vand.u32 %v3479, 4294901760
      %3570 = vmatmul.f32.gmra.mxu0 %v3569
      %v3571 = vpop.f32.mrf.mxu0
      %v3572 = vadd.f32 %v3525, %v3571
      %v3573 = vand.u32 %v3482, 4294901760
      %3574 = vmatmul.f32.gmra.mxu0 %v3573
      %v3575 = vpop.f32.mrf.mxu0
      %v3576 = vadd.f32 %v3533, %v3575
      %3577 = vdwg.mxu0
      %3578 = vmatpush.msra.mxu0 0.0
      %3579 = vmatpush.msra.mxu0 0.0
      %3580 = vmatpush.msra.mxu0 0.0
      %3581 = vmatpush.msra.mxu0 0.0
      %3582 = vmatpush.msra.mxu0 0.0
      %3583 = vmatpush.msra.mxu0 0.0
      %3584 = vmatpush.msra.mxu0 0.0
      %3585 = vmatpush.msra.mxu0 0.0
      %3586 = vmatpush.msra.mxu0 0.0
      %3587 = vmatpush.msra.mxu0 0.0
      %3588 = vmatpush.msra.mxu0 0.0
      %3589 = vmatpush.msra.mxu0 0.0
      %3590 = vmatpush.msra.mxu0 0.0
      %3591 = vmatpush.msra.mxu0 0.0
      %v3592 = vand.u32 %v3466, 4294901760
      %v3593 = vsub.f32 %v3466, %v3592
      %3594 = vmatpush.msra.mxu0 %v3593
      %v3595 = vand.u32 %v3464, 4294901760
      %v3596 = vsub.f32 %v3464, %v3595
      %3597 = vmatpush.msra.mxu0 %v3596
      %v3598 = vand.u32 %v3473, 4294901760
      %v3599 = vsub.f32 %v3473, %v3598
      %3600 = vmatmul.f32.gmra.mxu0 %v3599
      %v3601 = vpop.f32.mrf.mxu0
      %v3602 = vadd.f32 %v3564, %v3601
      %v3603 = vand.u32 %v3476, 4294901760
      %v3604 = vsub.f32 %v3476, %v3603
      %3605 = vmatmul.f32.gmra.mxu0 %v3604
      %v3606 = vpop.f32.mrf.mxu0
      %v3607 = vadd.f32 %v3568, %v3606
      %v3608 = vand.u32 %v3479, 4294901760
      %v3609 = vsub.f32 %v3479, %v3608
      %3610 = vmatmul.f32.gmra.mxu0 %v3609
      %v3611 = vpop.f32.mrf.mxu0
      %v3612 = vadd.f32 %v3572, %v3611
      %v3613 = vand.u32 %v3482, 4294901760
      %v3614 = vsub.f32 %v3482, %v3613
      %3615 = vmatmul.f32.gmra.mxu0 %v3614
      %v3616 = vpop.f32.mrf.mxu0
      %v3617 = vadd.f32 %v3576, %v3616
      %3618 = vdwg.mxu0
      %3619 = vmatpush.msra.mxu0 0.0
      %3620 = vmatpush.msra.mxu0 0.0
      %3621 = vmatpush.msra.mxu0 0.0
      %3622 = vmatpush.msra.mxu0 0.0
      %3623 = vmatpush.msra.mxu0 0.0
      %3624 = vmatpush.msra.mxu0 0.0
      %3625 = vmatpush.msra.mxu0 0.0
      %3626 = vmatpush.msra.mxu0 0.0
      %3627 = vmatpush.msra.mxu0 0.0
      %3628 = vmatpush.msra.mxu0 0.0
      %3629 = vmatpush.msra.mxu0 0.0
      %3630 = vmatpush.msra.mxu0 0.0
      %3631 = vmatpush.msra.mxu0 0.0
      %3632 = vmatpush.msra.mxu0 0.0
      %v3633 = vand.u32 %v3466, 4294901760
      %3634 = vmatpush.msra.mxu0 %v3633
      %v3635 = vand.u32 %v3464, 4294901760
      %3636 = vmatpush.msra.mxu0 %v3635
      %v3637 = vand.u32 %v3473, 4294901760
      %v3638 = vsub.f32 %v3473, %v3637
      %v3639 = vand.u32 %v3638, 4294901760
      %3640 = vmatmul.f32.gmra.mxu0 %v3639
      %v3641 = vpop.f32.mrf.mxu0
      %v3642 = vadd.f32 %v3602, %v3641
      %v3643 = vand.u32 %v3476, 4294901760
      %v3644 = vsub.f32 %v3476, %v3643
      %v3645 = vand.u32 %v3644, 4294901760
      %3646 = vmatmul.f32.gmra.mxu0 %v3645
      %v3647 = vpop.f32.mrf.mxu0
      %v3648 = vadd.f32 %v3607, %v3647
      %v3649 = vand.u32 %v3479, 4294901760
      %v3650 = vsub.f32 %v3479, %v3649
      %v3651 = vand.u32 %v3650, 4294901760
      %3652 = vmatmul.f32.gmra.mxu0 %v3651
      %v3653 = vpop.f32.mrf.mxu0
      %v3654 = vadd.f32 %v3612, %v3653
      %v3655 = vand.u32 %v3482, 4294901760
      %v3656 = vsub.f32 %v3482, %v3655
      %v3657 = vand.u32 %v3656, 4294901760
      %3658 = vmatmul.f32.gmra.mxu0 %v3657
      %v3659 = vpop.f32.mrf.mxu0
      %v3660 = vadd.f32 %v3617, %v3659
      %3661 = vdwg.mxu0
      %3662 = vmatpush.msra.mxu0 0.0
      %3663 = vmatpush.msra.mxu0 0.0
      %3664 = vmatpush.msra.mxu0 0.0
      %3665 = vmatpush.msra.mxu0 0.0
      %3666 = vmatpush.msra.mxu0 0.0
      %3667 = vmatpush.msra.mxu0 0.0
      %3668 = vmatpush.msra.mxu0 0.0
      %3669 = vmatpush.msra.mxu0 0.0
      %3670 = vmatpush.msra.mxu0 0.0
      %3671 = vmatpush.msra.mxu0 0.0
      %3672 = vmatpush.msra.mxu0 0.0
      %3673 = vmatpush.msra.mxu0 0.0
      %3674 = vmatpush.msra.mxu0 0.0
      %3675 = vmatpush.msra.mxu0 0.0
      %v3676 = vand.u32 %v3466, 4294901760
      %v3677 = vsub.f32 %v3466, %v3676
      %v3678 = vand.u32 %v3677, 4294901760
      %3679 = vmatpush.msra.mxu0 %v3678
      %v3680 = vand.u32 %v3464, 4294901760
      %v3681 = vsub.f32 %v3464, %v3680
      %v3682 = vand.u32 %v3681, 4294901760
      %3683 = vmatpush.msra.mxu0 %v3682
      %v3684 = vand.u32 %v3473, 4294901760
      %3685 = vmatmul.f32.gmra.mxu0 %v3684
      %v3686 = vpop.f32.mrf.mxu0
      %v3687 = vadd.f32 %v3642, %v3686
      %v3688 = vand.u32 %v3476, 4294901760
      %3689 = vmatmul.f32.gmra.mxu0 %v3688
      %v3690 = vpop.f32.mrf.mxu0
      %v3691 = vadd.f32 %v3648, %v3690
      %v3692 = vand.u32 %v3479, 4294901760
      %3693 = vmatmul.f32.gmra.mxu0 %v3692
      %v3694 = vpop.f32.mrf.mxu0
      %v3695 = vadd.f32 %v3654, %v3694
      %v3696 = vand.u32 %v3482, 4294901760
      %3697 = vmatmul.f32.gmra.mxu0 %v3696
      %v3698 = vpop.f32.mrf.mxu0
      %v3699 = vadd.f32 %v3660, %v3698
      %3700 = vdwg.mxu0
      %3701 = vmatpush.msra.mxu0 0.0
      %3702 = vmatpush.msra.mxu0 0.0
      %3703 = vmatpush.msra.mxu0 0.0
      %3704 = vmatpush.msra.mxu0 0.0
      %3705 = vmatpush.msra.mxu0 0.0
      %3706 = vmatpush.msra.mxu0 0.0
      %3707 = vmatpush.msra.mxu0 0.0
      %3708 = vmatpush.msra.mxu0 0.0
      %3709 = vmatpush.msra.mxu0 0.0
      %3710 = vmatpush.msra.mxu0 0.0
      %3711 = vmatpush.msra.mxu0 0.0
      %3712 = vmatpush.msra.mxu0 0.0
      %3713 = vmatpush.msra.mxu0 0.0
      %3714 = vmatpush.msra.mxu0 0.0
      %v3715 = vand.u32 %v3466, 4294901760
      %3716 = vmatpush.msra.mxu0 %v3715
      %v3717 = vand.u32 %v3464, 4294901760
      %3718 = vmatpush.msra.mxu0 %v3717
      %v3719 = vand.u32 %v3473, 4294901760
      %3720 = vmatmul.f32.gmra.mxu0 %v3719
      %v3721 = vpop.f32.mrf.mxu0
      %v3722 = vadd.f32 %v3687, %v3721
      %v3723 = vand.u32 %v3476, 4294901760
      %3724 = vmatmul.f32.gmra.mxu0 %v3723
      %v3725 = vpop.f32.mrf.mxu0
      %v3726 = vadd.f32 %v3691, %v3725
      %v3727 = vand.u32 %v3479, 4294901760
      %3728 = vmatmul.f32.gmra.mxu0 %v3727
      %v3729 = vpop.f32.mrf.mxu0
      %v3730 = vadd.f32 %v3695, %v3729
      %v3731 = vand.u32 %v3482, 4294901760
      %3732 = vmatmul.f32.gmra.mxu0 %v3731
      %v3733 = vpop.f32.mrf.mxu0
      %v3734 = vadd.f32 %v3699, %v3733
      %3735 = vdwg.mxu0
      %3736 = vmatpush.msra.mxu0 0.0
      %3737 = vmatpush.msra.mxu0 0.0
      %3738 = vmatpush.msra.mxu0 0.0
      %3739 = vmatpush.msra.mxu0 0.0
      %3740 = vmatpush.msra.mxu0 0.0
      %3741 = vmatpush.msra.mxu0 0.0
      %3742 = vmatpush.msra.mxu0 0.0
      %3743 = vmatpush.msra.mxu0 0.0
      %3744 = vmatpush.msra.mxu0 0.0
      %3745 = vmatpush.msra.mxu0 0.0
      %3746 = vmatpush.msra.mxu0 0.0
      %3747 = vmatpush.msra.mxu0 0.0
      %3748 = vmatpush.msra.mxu0 0.0
      %3749 = vmatpush.msra.mxu0 0.0
      %v3750 = vand.u32 %v3467, 4294901760
      %3751 = vmatpush.msra.mxu0 %v3750
      %v3752 = vand.u32 %v3465, 4294901760
      %3753 = vmatpush.msra.mxu0 %v3752
      %v3754 = vand.u32 %v3473, 4294901760
      %v3755 = vsub.f32 %v3473, %v3754
      %v3756 = vand.u32 %v3755, 4294901760
      %v3757 = vsub.f32 %v3755, %v3756
      %v3758 = vand.u32 %v3757, 4294901760
      %3759 = vmatmul.f32.gmra.mxu0 %v3758
      %v3760 = vpop.f32.mrf.mxu0
      %v3761 = vadd.f32 0.0, %v3760
      %v3762 = vand.u32 %v3476, 4294901760
      %v3763 = vsub.f32 %v3476, %v3762
      %v3764 = vand.u32 %v3763, 4294901760
      %v3765 = vsub.f32 %v3763, %v3764
      %v3766 = vand.u32 %v3765, 4294901760
      %3767 = vmatmul.f32.gmra.mxu0 %v3766
      %v3768 = vpop.f32.mrf.mxu0
      %v3769 = vadd.f32 0.0, %v3768
      %v3770 = vand.u32 %v3479, 4294901760
      %v3771 = vsub.f32 %v3479, %v3770
      %v3772 = vand.u32 %v3771, 4294901760
      %v3773 = vsub.f32 %v3771, %v3772
      %v3774 = vand.u32 %v3773, 4294901760
      %3775 = vmatmul.f32.gmra.mxu0 %v3774
      %v3776 = vpop.f32.mrf.mxu0
      %v3777 = vadd.f32 0.0, %v3776
      %v3778 = vand.u32 %v3482, 4294901760
      %v3779 = vsub.f32 %v3482, %v3778
      %v3780 = vand.u32 %v3779, 4294901760
      %v3781 = vsub.f32 %v3779, %v3780
      %v3782 = vand.u32 %v3781, 4294901760
      %3783 = vmatmul.f32.gmra.mxu0 %v3782
      %v3784 = vpop.f32.mrf.mxu0
      %v3785 = vadd.f32 0.0, %v3784
      %3786 = vdwg.mxu0
      %3787 = vmatpush.msra.mxu0 0.0
      %3788 = vmatpush.msra.mxu0 0.0
      %3789 = vmatpush.msra.mxu0 0.0
      %3790 = vmatpush.msra.mxu0 0.0
      %3791 = vmatpush.msra.mxu0 0.0
      %3792 = vmatpush.msra.mxu0 0.0
      %3793 = vmatpush.msra.mxu0 0.0
      %3794 = vmatpush.msra.mxu0 0.0
      %3795 = vmatpush.msra.mxu0 0.0
      %3796 = vmatpush.msra.mxu0 0.0
      %3797 = vmatpush.msra.mxu0 0.0
      %3798 = vmatpush.msra.mxu0 0.0
      %3799 = vmatpush.msra.mxu0 0.0
      %3800 = vmatpush.msra.mxu0 0.0
      %v3801 = vand.u32 %v3467, 4294901760
      %v3802 = vsub.f32 %v3467, %v3801
      %v3803 = vand.u32 %v3802, 4294901760
      %v3804 = vsub.f32 %v3802, %v3803
      %v3805 = vand.u32 %v3804, 4294901760
      %3806 = vmatpush.msra.mxu0 %v3805
      %v3807 = vand.u32 %v3465, 4294901760
      %v3808 = vsub.f32 %v3465, %v3807
      %v3809 = vand.u32 %v3808, 4294901760
      %v3810 = vsub.f32 %v3808, %v3809
      %v3811 = vand.u32 %v3810, 4294901760
      %3812 = vmatpush.msra.mxu0 %v3811
      %v3813 = vand.u32 %v3473, 4294901760
      %3814 = vmatmul.f32.gmra.mxu0 %v3813
      %v3815 = vpop.f32.mrf.mxu0
      %v3816 = vadd.f32 %v3761, %v3815
      %v3817 = vand.u32 %v3476, 4294901760
      %3818 = vmatmul.f32.gmra.mxu0 %v3817
      %v3819 = vpop.f32.mrf.mxu0
      %v3820 = vadd.f32 %v3769, %v3819
      %v3821 = vand.u32 %v3479, 4294901760
      %3822 = vmatmul.f32.gmra.mxu0 %v3821
      %v3823 = vpop.f32.mrf.mxu0
      %v3824 = vadd.f32 %v3777, %v3823
      %v3825 = vand.u32 %v3482, 4294901760
      %3826 = vmatmul.f32.gmra.mxu0 %v3825
      %v3827 = vpop.f32.mrf.mxu0
      %v3828 = vadd.f32 %v3785, %v3827
      %3829 = vdwg.mxu0
      %3830 = vmatpush.msra.mxu0 0.0
      %3831 = vmatpush.msra.mxu0 0.0
      %3832 = vmatpush.msra.mxu0 0.0
      %3833 = vmatpush.msra.mxu0 0.0
      %3834 = vmatpush.msra.mxu0 0.0
      %3835 = vmatpush.msra.mxu0 0.0
      %3836 = vmatpush.msra.mxu0 0.0
      %3837 = vmatpush.msra.mxu0 0.0
      %3838 = vmatpush.msra.mxu0 0.0
      %3839 = vmatpush.msra.mxu0 0.0
      %3840 = vmatpush.msra.mxu0 0.0
      %3841 = vmatpush.msra.mxu0 0.0
      %3842 = vmatpush.msra.mxu0 0.0
      %3843 = vmatpush.msra.mxu0 0.0
      %v3844 = vand.u32 %v3467, 4294901760
      %v3845 = vsub.f32 %v3467, %v3844
      %3846 = vmatpush.msra.mxu0 %v3845
      %v3847 = vand.u32 %v3465, 4294901760
      %v3848 = vsub.f32 %v3465, %v3847
      %3849 = vmatpush.msra.mxu0 %v3848
      %v3850 = vand.u32 %v3473, 4294901760
      %v3851 = vsub.f32 %v3473, %v3850
      %3852 = vmatmul.f32.gmra.mxu0 %v3851
      %v3853 = vpop.f32.mrf.mxu0
      %v3854 = vadd.f32 %v3816, %v3853
      %v3855 = vand.u32 %v3476, 4294901760
      %v3856 = vsub.f32 %v3476, %v3855
      %3857 = vmatmul.f32.gmra.mxu0 %v3856
      %v3858 = vpop.f32.mrf.mxu0
      %v3859 = vadd.f32 %v3820, %v3858
      %v3860 = vand.u32 %v3479, 4294901760
      %v3861 = vsub.f32 %v3479, %v3860
      %3862 = vmatmul.f32.gmra.mxu0 %v3861
      %v3863 = vpop.f32.mrf.mxu0
      %v3864 = vadd.f32 %v3824, %v3863
      %v3865 = vand.u32 %v3482, 4294901760
      %v3866 = vsub.f32 %v3482, %v3865
      %3867 = vmatmul.f32.gmra.mxu0 %v3866
      %v3868 = vpop.f32.mrf.mxu0
      %v3869 = vadd.f32 %v3828, %v3868
      %3870 = vdwg.mxu0
      %3871 = vmatpush.msra.mxu0 0.0
      %3872 = vmatpush.msra.mxu0 0.0
      %3873 = vmatpush.msra.mxu0 0.0
      %3874 = vmatpush.msra.mxu0 0.0
      %3875 = vmatpush.msra.mxu0 0.0
      %3876 = vmatpush.msra.mxu0 0.0
      %3877 = vmatpush.msra.mxu0 0.0
      %3878 = vmatpush.msra.mxu0 0.0
      %3879 = vmatpush.msra.mxu0 0.0
      %3880 = vmatpush.msra.mxu0 0.0
      %3881 = vmatpush.msra.mxu0 0.0
      %3882 = vmatpush.msra.mxu0 0.0
      %3883 = vmatpush.msra.mxu0 0.0
      %3884 = vmatpush.msra.mxu0 0.0
      %v3885 = vand.u32 %v3467, 4294901760
      %3886 = vmatpush.msra.mxu0 %v3885
      %v3887 = vand.u32 %v3465, 4294901760
      %3888 = vmatpush.msra.mxu0 %v3887
      %v3889 = vand.u32 %v3473, 4294901760
      %v3890 = vsub.f32 %v3473, %v3889
      %v3891 = vand.u32 %v3890, 4294901760
      %3892 = vmatmul.f32.gmra.mxu0 %v3891
      %v3893 = vpop.f32.mrf.mxu0
      %v3894 = vadd.f32 %v3854, %v3893
      %v3895 = vand.u32 %v3476, 4294901760
      %v3896 = vsub.f32 %v3476, %v3895
      %v3897 = vand.u32 %v3896, 4294901760
      %3898 = vmatmul.f32.gmra.mxu0 %v3897
      %v3899 = vpop.f32.mrf.mxu0
      %v3900 = vadd.f32 %v3859, %v3899
      %v3901 = vand.u32 %v3479, 4294901760
      %v3902 = vsub.f32 %v3479, %v3901
      %v3903 = vand.u32 %v3902, 4294901760
      %3904 = vmatmul.f32.gmra.mxu0 %v3903
      %v3905 = vpop.f32.mrf.mxu0
      %v3906 = vadd.f32 %v3864, %v3905
      %v3907 = vand.u32 %v3482, 4294901760
      %v3908 = vsub.f32 %v3482, %v3907
      %v3909 = vand.u32 %v3908, 4294901760
      %3910 = vmatmul.f32.gmra.mxu0 %v3909
      %v3911 = vpop.f32.mrf.mxu0
      %v3912 = vadd.f32 %v3869, %v3911
      %3913 = vdwg.mxu0
      %3914 = vmatpush.msra.mxu0 0.0
      %3915 = vmatpush.msra.mxu0 0.0
      %3916 = vmatpush.msra.mxu0 0.0
      %3917 = vmatpush.msra.mxu0 0.0
      %3918 = vmatpush.msra.mxu0 0.0
      %3919 = vmatpush.msra.mxu0 0.0
      %3920 = vmatpush.msra.mxu0 0.0
      %3921 = vmatpush.msra.mxu0 0.0
      %3922 = vmatpush.msra.mxu0 0.0
      %3923 = vmatpush.msra.mxu0 0.0
      %3924 = vmatpush.msra.mxu0 0.0
      %3925 = vmatpush.msra.mxu0 0.0
      %3926 = vmatpush.msra.mxu0 0.0
      %3927 = vmatpush.msra.mxu0 0.0
      %v3928 = vand.u32 %v3467, 4294901760
      %v3929 = vsub.f32 %v3467, %v3928
      %v3930 = vand.u32 %v3929, 4294901760
      %3931 = vmatpush.msra.mxu0 %v3930
      %v3932 = vand.u32 %v3465, 4294901760
      %v3933 = vsub.f32 %v3465, %v3932
      %v3934 = vand.u32 %v3933, 4294901760
      %3935 = vmatpush.msra.mxu0 %v3934
      %v3936 = vand.u32 %v3473, 4294901760
      %3937 = vmatmul.f32.gmra.mxu0 %v3936
      %v3938 = vpop.f32.mrf.mxu0
      %v3939 = vadd.f32 %v3894, %v3938
      %v3940 = vand.u32 %v3476, 4294901760
      %3941 = vmatmul.f32.gmra.mxu0 %v3940
      %v3942 = vpop.f32.mrf.mxu0
      %v3943 = vadd.f32 %v3900, %v3942
      %v3944 = vand.u32 %v3479, 4294901760
      %3945 = vmatmul.f32.gmra.mxu0 %v3944
      %v3946 = vpop.f32.mrf.mxu0
      %v3947 = vadd.f32 %v3906, %v3946
      %v3948 = vand.u32 %v3482, 4294901760
      %3949 = vmatmul.f32.gmra.mxu0 %v3948
      %v3950 = vpop.f32.mrf.mxu0
      %v3951 = vadd.f32 %v3912, %v3950
      %3952 = vdwg.mxu0
      %3953 = vmatpush.msra.mxu0 0.0
      %3954 = vmatpush.msra.mxu0 0.0
      %3955 = vmatpush.msra.mxu0 0.0
      %3956 = vmatpush.msra.mxu0 0.0
      %3957 = vmatpush.msra.mxu0 0.0
      %3958 = vmatpush.msra.mxu0 0.0
      %3959 = vmatpush.msra.mxu0 0.0
      %3960 = vmatpush.msra.mxu0 0.0
      %3961 = vmatpush.msra.mxu0 0.0
      %3962 = vmatpush.msra.mxu0 0.0
      %3963 = vmatpush.msra.mxu0 0.0
      %3964 = vmatpush.msra.mxu0 0.0
      %3965 = vmatpush.msra.mxu0 0.0
      %3966 = vmatpush.msra.mxu0 0.0
      %v3967 = vand.u32 %v3467, 4294901760
      %3968 = vmatpush.msra.mxu0 %v3967
      %v3969 = vand.u32 %v3465, 4294901760
      %3970 = vmatpush.msra.mxu0 %v3969
      %v3971 = vand.u32 %v3473, 4294901760
      %3972 = vmatmul.f32.gmra.mxu0 %v3971
      %v3973 = vpop.f32.mrf.mxu0
      %v3974 = vadd.f32 %v3939, %v3973
      %v3975 = vand.u32 %v3476, 4294901760
      %3976 = vmatmul.f32.gmra.mxu0 %v3975
      %v3977 = vpop.f32.mrf.mxu0
      %v3978 = vadd.f32 %v3943, %v3977
      %v3979 = vand.u32 %v3479, 4294901760
      %3980 = vmatmul.f32.gmra.mxu0 %v3979
      %v3981 = vpop.f32.mrf.mxu0
      %v3982 = vadd.f32 %v3947, %v3981
      %v3983 = vand.u32 %v3482, 4294901760
      %3984 = vmatmul.f32.gmra.mxu0 %v3983
      %v3985 = vpop.f32.mrf.mxu0
      %v3986 = vadd.f32 %v3951, %v3985
      %3987 = vdwg.mxu0
      %v3988 = vadd.f32 %v3438, %v3722
      %v3989 = vadd.f32 %v3439, %v3974
      %v3990 = vadd.f32 %v3440, %v3726
      %v3991 = vadd.f32 %v3441, %v3978
      %v3992 = vadd.f32 %v3442, %v3730
      %v3993 = vadd.f32 %v3443, %v3982
      %v3994 = vadd.f32 %v3444, %v3734
      %v3995 = vadd.f32 %v3445, %v3986
      %s3996 = scalar_lea.vmem %s1, 224
      %v3997 = vld [vmem:[%s3996] sm:$0xff]
      %v3998 = vld [vmem:[%s3996 + $0x8] sm:$0xff]
      %v3999 = vld [vmem:[%s3996 + $0x10] sm:$0xff]
      %v4000 = vld [vmem:[%s3996 + $0x18] sm:$0xff]
      %4001 = vrot.lane.b32.xlu0 %v171, 95
      %v4002 = vpop.permute.xlu0 %4001
      %4003 = vrot.lane.b32.xlu0 %v172, 95
      %v4004 = vpop.permute.xlu0 %4003
      %4005 = vrot.lane.b32.xlu0 %v179, 95
      %v4006 = vpop.permute.xlu0 %4005
      %4007 = vrot.lane.b32.xlu0 %v173, 95
      %v4008 = vpop.permute.xlu0 %4007
      %4009 = vrot.lane.b32.xlu0 %v174, 95
      %v4010 = vpop.permute.xlu0 %4009
      %4011 = vrot.lane.b32.xlu0 %v180, 95
      %v4012 = vpop.permute.xlu0 %4011
      %vm4013 = vcmask 777216
      %v4014 = vsel %vm4013, %v4002, %v4004
      %v4015 = vsel %vm4013, %v4004, %v4006
      %v4016 = vsel %vm4013, %v4008, %v4010
      %v4017 = vsel %vm4013, %v4010, %v4012
      %v4023 = vsel %vm213, %v3997, 0
      %v4026 = vsel %vm213, %v3998, 0
      %v4029 = vsel %vm213, %v3999, 0
      %v4032 = vsel %vm213, %v4000, 0
      %4034 = vmatpush.msra.mxu0 0.0
      %4035 = vmatpush.msra.mxu0 0.0
      %4036 = vmatpush.msra.mxu0 0.0
      %4037 = vmatpush.msra.mxu0 0.0
      %4038 = vmatpush.msra.mxu0 0.0
      %4039 = vmatpush.msra.mxu0 0.0
      %4040 = vmatpush.msra.mxu0 0.0
      %4041 = vmatpush.msra.mxu0 0.0
      %4042 = vmatpush.msra.mxu0 0.0
      %4043 = vmatpush.msra.mxu0 0.0
      %4044 = vmatpush.msra.mxu0 0.0
      %4045 = vmatpush.msra.mxu0 0.0
      %4046 = vmatpush.msra.mxu0 0.0
      %4047 = vmatpush.msra.mxu0 0.0
      %v4048 = vand.u32 %v4016, 4294901760
      %4049 = vmatpush.msra.mxu0 %v4048
      %v4050 = vand.u32 %v4014, 4294901760
      %4051 = vmatpush.msra.mxu0 %v4050
      %v4052 = vand.u32 %v4023, 4294901760
      %v4053 = vsub.f32 %v4023, %v4052
      %v4054 = vand.u32 %v4053, 4294901760
      %v4055 = vsub.f32 %v4053, %v4054
      %v4056 = vand.u32 %v4055, 4294901760
      %4057 = vmatmul.f32.gmra.mxu0 %v4056
      %v4058 = vpop.f32.mrf.mxu0
      %v4059 = vadd.f32 0.0, %v4058
      %v4060 = vand.u32 %v4026, 4294901760
      %v4061 = vsub.f32 %v4026, %v4060
      %v4062 = vand.u32 %v4061, 4294901760
      %v4063 = vsub.f32 %v4061, %v4062
      %v4064 = vand.u32 %v4063, 4294901760
      %4065 = vmatmul.f32.gmra.mxu0 %v4064
      %v4066 = vpop.f32.mrf.mxu0
      %v4067 = vadd.f32 0.0, %v4066
      %v4068 = vand.u32 %v4029, 4294901760
      %v4069 = vsub.f32 %v4029, %v4068
      %v4070 = vand.u32 %v4069, 4294901760
      %v4071 = vsub.f32 %v4069, %v4070
      %v4072 = vand.u32 %v4071, 4294901760
      %4073 = vmatmul.f32.gmra.mxu0 %v4072
      %v4074 = vpop.f32.mrf.mxu0
      %v4075 = vadd.f32 0.0, %v4074
      %v4076 = vand.u32 %v4032, 4294901760
      %v4077 = vsub.f32 %v4032, %v4076
      %v4078 = vand.u32 %v4077, 4294901760
      %v4079 = vsub.f32 %v4077, %v4078
      %v4080 = vand.u32 %v4079, 4294901760
      %4081 = vmatmul.f32.gmra.mxu0 %v4080
      %v4082 = vpop.f32.mrf.mxu0
      %v4083 = vadd.f32 0.0, %v4082
      %4084 = vdwg.mxu0
      %4085 = vmatpush.msra.mxu0 0.0
      %4086 = vmatpush.msra.mxu0 0.0
      %4087 = vmatpush.msra.mxu0 0.0
      %4088 = vmatpush.msra.mxu0 0.0
      %4089 = vmatpush.msra.mxu0 0.0
      %4090 = vmatpush.msra.mxu0 0.0
      %4091 = vmatpush.msra.mxu0 0.0
      %4092 = vmatpush.msra.mxu0 0.0
      %4093 = vmatpush.msra.mxu0 0.0
      %4094 = vmatpush.msra.mxu0 0.0
      %4095 = vmatpush.msra.mxu0 0.0
      %4096 = vmatpush.msra.mxu0 0.0
      %4097 = vmatpush.msra.mxu0 0.0
      %4098 = vmatpush.msra.mxu0 0.0
      %v4099 = vand.u32 %v4016, 4294901760
      %v4100 = vsub.f32 %v4016, %v4099
      %v4101 = vand.u32 %v4100, 4294901760
      %v4102 = vsub.f32 %v4100, %v4101
      %v4103 = vand.u32 %v4102, 4294901760
      %4104 = vmatpush.msra.mxu0 %v4103
      %v4105 = vand.u32 %v4014, 4294901760
      %v4106 = vsub.f32 %v4014, %v4105
      %v4107 = vand.u32 %v4106, 4294901760
      %v4108 = vsub.f32 %v4106, %v4107
      %v4109 = vand.u32 %v4108, 4294901760
      %4110 = vmatpush.msra.mxu0 %v4109
      %v4111 = vand.u32 %v4023, 4294901760
      %4112 = vmatmul.f32.gmra.mxu0 %v4111
      %v4113 = vpop.f32.mrf.mxu0
      %v4114 = vadd.f32 %v4059, %v4113
      %v4115 = vand.u32 %v4026, 4294901760
      %4116 = vmatmul.f32.gmra.mxu0 %v4115
      %v4117 = vpop.f32.mrf.mxu0
      %v4118 = vadd.f32 %v4067, %v4117
      %v4119 = vand.u32 %v4029, 4294901760
      %4120 = vmatmul.f32.gmra.mxu0 %v4119
      %v4121 = vpop.f32.mrf.mxu0
      %v4122 = vadd.f32 %v4075, %v4121
      %v4123 = vand.u32 %v4032, 4294901760
      %4124 = vmatmul.f32.gmra.mxu0 %v4123
      %v4125 = vpop.f32.mrf.mxu0
      %v4126 = vadd.f32 %v4083, %v4125
      %4127 = vdwg.mxu0
      %4128 = vmatpush.msra.mxu0 0.0
      %4129 = vmatpush.msra.mxu0 0.0
      %4130 = vmatpush.msra.mxu0 0.0
      %4131 = vmatpush.msra.mxu0 0.0
      %4132 = vmatpush.msra.mxu0 0.0
      %4133 = vmatpush.msra.mxu0 0.0
      %4134 = vmatpush.msra.mxu0 0.0
      %4135 = vmatpush.msra.mxu0 0.0
      %4136 = vmatpush.msra.mxu0 0.0
      %4137 = vmatpush.msra.mxu0 0.0
      %4138 = vmatpush.msra.mxu0 0.0
      %4139 = vmatpush.msra.mxu0 0.0
      %4140 = vmatpush.msra.mxu0 0.0
      %4141 = vmatpush.msra.mxu0 0.0
      %v4142 = vand.u32 %v4016, 4294901760
      %v4143 = vsub.f32 %v4016, %v4142
      %4144 = vmatpush.msra.mxu0 %v4143
      %v4145 = vand.u32 %v4014, 4294901760
      %v4146 = vsub.f32 %v4014, %v4145
      %4147 = vmatpush.msra.mxu0 %v4146
      %v4148 = vand.u32 %v4023, 4294901760
      %v4149 = vsub.f32 %v4023, %v4148
      %4150 = vmatmul.f32.gmra.mxu0 %v4149
      %v4151 = vpop.f32.mrf.mxu0
      %v4152 = vadd.f32 %v4114, %v4151
      %v4153 = vand.u32 %v4026, 4294901760
      %v4154 = vsub.f32 %v4026, %v4153
      %4155 = vmatmul.f32.gmra.mxu0 %v4154
      %v4156 = vpop.f32.mrf.mxu0
      %v4157 = vadd.f32 %v4118, %v4156
      %v4158 = vand.u32 %v4029, 4294901760
      %v4159 = vsub.f32 %v4029, %v4158
      %4160 = vmatmul.f32.gmra.mxu0 %v4159
      %v4161 = vpop.f32.mrf.mxu0
      %v4162 = vadd.f32 %v4122, %v4161
      %v4163 = vand.u32 %v4032, 4294901760
      %v4164 = vsub.f32 %v4032, %v4163
      %4165 = vmatmul.f32.gmra.mxu0 %v4164
      %v4166 = vpop.f32.mrf.mxu0
      %v4167 = vadd.f32 %v4126, %v4166
      %4168 = vdwg.mxu0
      %4169 = vmatpush.msra.mxu0 0.0
      %4170 = vmatpush.msra.mxu0 0.0
      %4171 = vmatpush.msra.mxu0 0.0
      %4172 = vmatpush.msra.mxu0 0.0
      %4173 = vmatpush.msra.mxu0 0.0
      %4174 = vmatpush.msra.mxu0 0.0
      %4175 = vmatpush.msra.mxu0 0.0
      %4176 = vmatpush.msra.mxu0 0.0
      %4177 = vmatpush.msra.mxu0 0.0
      %4178 = vmatpush.msra.mxu0 0.0
      %4179 = vmatpush.msra.mxu0 0.0
      %4180 = vmatpush.msra.mxu0 0.0
      %4181 = vmatpush.msra.mxu0 0.0
      %4182 = vmatpush.msra.mxu0 0.0
      %v4183 = vand.u32 %v4016, 4294901760
      %4184 = vmatpush.msra.mxu0 %v4183
      %v4185 = vand.u32 %v4014, 4294901760
      %4186 = vmatpush.msra.mxu0 %v4185
      %v4187 = vand.u32 %v4023, 4294901760
      %v4188 = vsub.f32 %v4023, %v4187
      %v4189 = vand.u32 %v4188, 4294901760
      %4190 = vmatmul.f32.gmra.mxu0 %v4189
      %v4191 = vpop.f32.mrf.mxu0
      %v4192 = vadd.f32 %v4152, %v4191
      %v4193 = vand.u32 %v4026, 4294901760
      %v4194 = vsub.f32 %v4026, %v4193
      %v4195 = vand.u32 %v4194, 4294901760
      %4196 = vmatmul.f32.gmra.mxu0 %v4195
      %v4197 = vpop.f32.mrf.mxu0
      %v4198 = vadd.f32 %v4157, %v4197
      %v4199 = vand.u32 %v4029, 4294901760
      %v4200 = vsub.f32 %v4029, %v4199
      %v4201 = vand.u32 %v4200, 4294901760
      %4202 = vmatmul.f32.gmra.mxu0 %v4201
      %v4203 = vpop.f32.mrf.mxu0
      %v4204 = vadd.f32 %v4162, %v4203
      %v4205 = vand.u32 %v4032, 4294901760
      %v4206 = vsub.f32 %v4032, %v4205
      %v4207 = vand.u32 %v4206, 4294901760
      %4208 = vmatmul.f32.gmra.mxu0 %v4207
      %v4209 = vpop.f32.mrf.mxu0
      %v4210 = vadd.f32 %v4167, %v4209
      %4211 = vdwg.mxu0
      %4212 = vmatpush.msra.mxu0 0.0
      %4213 = vmatpush.msra.mxu0 0.0
      %4214 = vmatpush.msra.mxu0 0.0
      %4215 = vmatpush.msra.mxu0 0.0
      %4216 = vmatpush.msra.mxu0 0.0
      %4217 = vmatpush.msra.mxu0 0.0
      %4218 = vmatpush.msra.mxu0 0.0
      %4219 = vmatpush.msra.mxu0 0.0
      %4220 = vmatpush.msra.mxu0 0.0
      %4221 = vmatpush.msra.mxu0 0.0
      %4222 = vmatpush.msra.mxu0 0.0
      %4223 = vmatpush.msra.mxu0 0.0
      %4224 = vmatpush.msra.mxu0 0.0
      %4225 = vmatpush.msra.mxu0 0.0
      %v4226 = vand.u32 %v4016, 4294901760
      %v4227 = vsub.f32 %v4016, %v4226
      %v4228 = vand.u32 %v4227, 4294901760
      %4229 = vmatpush.msra.mxu0 %v4228
      %v4230 = vand.u32 %v4014, 4294901760
      %v4231 = vsub.f32 %v4014, %v4230
      %v4232 = vand.u32 %v4231, 4294901760
      %4233 = vmatpush.msra.mxu0 %v4232
      %v4234 = vand.u32 %v4023, 4294901760
      %4235 = vmatmul.f32.gmra.mxu0 %v4234
      %v4236 = vpop.f32.mrf.mxu0
      %v4237 = vadd.f32 %v4192, %v4236
      %v4238 = vand.u32 %v4026, 4294901760
      %4239 = vmatmul.f32.gmra.mxu0 %v4238
      %v4240 = vpop.f32.mrf.mxu0
      %v4241 = vadd.f32 %v4198, %v4240
      %v4242 = vand.u32 %v4029, 4294901760
      %4243 = vmatmul.f32.gmra.mxu0 %v4242
      %v4244 = vpop.f32.mrf.mxu0
      %v4245 = vadd.f32 %v4204, %v4244
      %v4246 = vand.u32 %v4032, 4294901760
      %4247 = vmatmul.f32.gmra.mxu0 %v4246
      %v4248 = vpop.f32.mrf.mxu0
      %v4249 = vadd.f32 %v4210, %v4248
      %4250 = vdwg.mxu0
      %4251 = vmatpush.msra.mxu0 0.0
      %4252 = vmatpush.msra.mxu0 0.0
      %4253 = vmatpush.msra.mxu0 0.0
      %4254 = vmatpush.msra.mxu0 0.0
      %4255 = vmatpush.msra.mxu0 0.0
      %4256 = vmatpush.msra.mxu0 0.0
      %4257 = vmatpush.msra.mxu0 0.0
      %4258 = vmatpush.msra.mxu0 0.0
      %4259 = vmatpush.msra.mxu0 0.0
      %4260 = vmatpush.msra.mxu0 0.0
      %4261 = vmatpush.msra.mxu0 0.0
      %4262 = vmatpush.msra.mxu0 0.0
      %4263 = vmatpush.msra.mxu0 0.0
      %4264 = vmatpush.msra.mxu0 0.0
      %v4265 = vand.u32 %v4016, 4294901760
      %4266 = vmatpush.msra.mxu0 %v4265
      %v4267 = vand.u32 %v4014, 4294901760
      %4268 = vmatpush.msra.mxu0 %v4267
      %v4269 = vand.u32 %v4023, 4294901760
      %4270 = vmatmul.f32.gmra.mxu0 %v4269
      %v4271 = vpop.f32.mrf.mxu0
      %v4272 = vadd.f32 %v4237, %v4271
      %v4273 = vand.u32 %v4026, 4294901760
      %4274 = vmatmul.f32.gmra.mxu0 %v4273
      %v4275 = vpop.f32.mrf.mxu0
      %v4276 = vadd.f32 %v4241, %v4275
      %v4277 = vand.u32 %v4029, 4294901760
      %4278 = vmatmul.f32.gmra.mxu0 %v4277
      %v4279 = vpop.f32.mrf.mxu0
      %v4280 = vadd.f32 %v4245, %v4279
      %v4281 = vand.u32 %v4032, 4294901760
      %4282 = vmatmul.f32.gmra.mxu0 %v4281
      %v4283 = vpop.f32.mrf.mxu0
      %v4284 = vadd.f32 %v4249, %v4283
      %4285 = vdwg.mxu0
      %4286 = vmatpush.msra.mxu0 0.0
      %4287 = vmatpush.msra.mxu0 0.0
      %4288 = vmatpush.msra.mxu0 0.0
      %4289 = vmatpush.msra.mxu0 0.0
      %4290 = vmatpush.msra.mxu0 0.0
      %4291 = vmatpush.msra.mxu0 0.0
      %4292 = vmatpush.msra.mxu0 0.0
      %4293 = vmatpush.msra.mxu0 0.0
      %4294 = vmatpush.msra.mxu0 0.0
      %4295 = vmatpush.msra.mxu0 0.0
      %4296 = vmatpush.msra.mxu0 0.0
      %4297 = vmatpush.msra.mxu0 0.0
      %4298 = vmatpush.msra.mxu0 0.0
      %4299 = vmatpush.msra.mxu0 0.0
      %v4300 = vand.u32 %v4017, 4294901760
      %4301 = vmatpush.msra.mxu0 %v4300
      %v4302 = vand.u32 %v4015, 4294901760
      %4303 = vmatpush.msra.mxu0 %v4302
      %v4304 = vand.u32 %v4023, 4294901760
      %v4305 = vsub.f32 %v4023, %v4304
      %v4306 = vand.u32 %v4305, 4294901760
      %v4307 = vsub.f32 %v4305, %v4306
      %v4308 = vand.u32 %v4307, 4294901760
      %4309 = vmatmul.f32.gmra.mxu0 %v4308
      %v4310 = vpop.f32.mrf.mxu0
      %v4311 = vadd.f32 0.0, %v4310
      %v4312 = vand.u32 %v4026, 4294901760
      %v4313 = vsub.f32 %v4026, %v4312
      %v4314 = vand.u32 %v4313, 4294901760
      %v4315 = vsub.f32 %v4313, %v4314
      %v4316 = vand.u32 %v4315, 4294901760
      %4317 = vmatmul.f32.gmra.mxu0 %v4316
      %v4318 = vpop.f32.mrf.mxu0
      %v4319 = vadd.f32 0.0, %v4318
      %v4320 = vand.u32 %v4029, 4294901760
      %v4321 = vsub.f32 %v4029, %v4320
      %v4322 = vand.u32 %v4321, 4294901760
      %v4323 = vsub.f32 %v4321, %v4322
      %v4324 = vand.u32 %v4323, 4294901760
      %4325 = vmatmul.f32.gmra.mxu0 %v4324
      %v4326 = vpop.f32.mrf.mxu0
      %v4327 = vadd.f32 0.0, %v4326
      %v4328 = vand.u32 %v4032, 4294901760
      %v4329 = vsub.f32 %v4032, %v4328
      %v4330 = vand.u32 %v4329, 4294901760
      %v4331 = vsub.f32 %v4329, %v4330
      %v4332 = vand.u32 %v4331, 4294901760
      %4333 = vmatmul.f32.gmra.mxu0 %v4332
      %v4334 = vpop.f32.mrf.mxu0
      %v4335 = vadd.f32 0.0, %v4334
      %4336 = vdwg.mxu0
      %4337 = vmatpush.msra.mxu0 0.0
      %4338 = vmatpush.msra.mxu0 0.0
      %4339 = vmatpush.msra.mxu0 0.0
      %4340 = vmatpush.msra.mxu0 0.0
      %4341 = vmatpush.msra.mxu0 0.0
      %4342 = vmatpush.msra.mxu0 0.0
      %4343 = vmatpush.msra.mxu0 0.0
      %4344 = vmatpush.msra.mxu0 0.0
      %4345 = vmatpush.msra.mxu0 0.0
      %4346 = vmatpush.msra.mxu0 0.0
      %4347 = vmatpush.msra.mxu0 0.0
      %4348 = vmatpush.msra.mxu0 0.0
      %4349 = vmatpush.msra.mxu0 0.0
      %4350 = vmatpush.msra.mxu0 0.0
      %v4351 = vand.u32 %v4017, 4294901760
      %v4352 = vsub.f32 %v4017, %v4351
      %v4353 = vand.u32 %v4352, 4294901760
      %v4354 = vsub.f32 %v4352, %v4353
      %v4355 = vand.u32 %v4354, 4294901760
      %4356 = vmatpush.msra.mxu0 %v4355
      %v4357 = vand.u32 %v4015, 4294901760
      %v4358 = vsub.f32 %v4015, %v4357
      %v4359 = vand.u32 %v4358, 4294901760
      %v4360 = vsub.f32 %v4358, %v4359
      %v4361 = vand.u32 %v4360, 4294901760
      %4362 = vmatpush.msra.mxu0 %v4361
      %v4363 = vand.u32 %v4023, 4294901760
      %4364 = vmatmul.f32.gmra.mxu0 %v4363
      %v4365 = vpop.f32.mrf.mxu0
      %v4366 = vadd.f32 %v4311, %v4365
      %v4367 = vand.u32 %v4026, 4294901760
      %4368 = vmatmul.f32.gmra.mxu0 %v4367
      %v4369 = vpop.f32.mrf.mxu0
      %v4370 = vadd.f32 %v4319, %v4369
      %v4371 = vand.u32 %v4029, 4294901760
      %4372 = vmatmul.f32.gmra.mxu0 %v4371
      %v4373 = vpop.f32.mrf.mxu0
      %v4374 = vadd.f32 %v4327, %v4373
      %v4375 = vand.u32 %v4032, 4294901760
      %4376 = vmatmul.f32.gmra.mxu0 %v4375
      %v4377 = vpop.f32.mrf.mxu0
      %v4378 = vadd.f32 %v4335, %v4377
      %4379 = vdwg.mxu0
      %4380 = vmatpush.msra.mxu0 0.0
      %4381 = vmatpush.msra.mxu0 0.0
      %4382 = vmatpush.msra.mxu0 0.0
      %4383 = vmatpush.msra.mxu0 0.0
      %4384 = vmatpush.msra.mxu0 0.0
      %4385 = vmatpush.msra.mxu0 0.0
      %4386 = vmatpush.msra.mxu0 0.0
      %4387 = vmatpush.msra.mxu0 0.0
      %4388 = vmatpush.msra.mxu0 0.0
      %4389 = vmatpush.msra.mxu0 0.0
      %4390 = vmatpush.msra.mxu0 0.0
      %4391 = vmatpush.msra.mxu0 0.0
      %4392 = vmatpush.msra.mxu0 0.0
      %4393 = vmatpush.msra.mxu0 0.0
      %v4394 = vand.u32 %v4017, 4294901760
      %v4395 = vsub.f32 %v4017, %v4394
      %4396 = vmatpush.msra.mxu0 %v4395
      %v4397 = vand.u32 %v4015, 4294901760
      %v4398 = vsub.f32 %v4015, %v4397
      %4399 = vmatpush.msra.mxu0 %v4398
      %v4400 = vand.u32 %v4023, 4294901760
      %v4401 = vsub.f32 %v4023, %v4400
      %4402 = vmatmul.f32.gmra.mxu0 %v4401
      %v4403 = vpop.f32.mrf.mxu0
      %v4404 = vadd.f32 %v4366, %v4403
      %v4405 = vand.u32 %v4026, 4294901760
      %v4406 = vsub.f32 %v4026, %v4405
      %4407 = vmatmul.f32.gmra.mxu0 %v4406
      %v4408 = vpop.f32.mrf.mxu0
      %v4409 = vadd.f32 %v4370, %v4408
      %v4410 = vand.u32 %v4029, 4294901760
      %v4411 = vsub.f32 %v4029, %v4410
      %4412 = vmatmul.f32.gmra.mxu0 %v4411
      %v4413 = vpop.f32.mrf.mxu0
      %v4414 = vadd.f32 %v4374, %v4413
      %v4415 = vand.u32 %v4032, 4294901760
      %v4416 = vsub.f32 %v4032, %v4415
      %4417 = vmatmul.f32.gmra.mxu0 %v4416
      %v4418 = vpop.f32.mrf.mxu0
      %v4419 = vadd.f32 %v4378, %v4418
      %4420 = vdwg.mxu0
      %4421 = vmatpush.msra.mxu0 0.0
      %4422 = vmatpush.msra.mxu0 0.0
      %4423 = vmatpush.msra.mxu0 0.0
      %4424 = vmatpush.msra.mxu0 0.0
      %4425 = vmatpush.msra.mxu0 0.0
      %4426 = vmatpush.msra.mxu0 0.0
      %4427 = vmatpush.msra.mxu0 0.0
      %4428 = vmatpush.msra.mxu0 0.0
      %4429 = vmatpush.msra.mxu0 0.0
      %4430 = vmatpush.msra.mxu0 0.0
      %4431 = vmatpush.msra.mxu0 0.0
      %4432 = vmatpush.msra.mxu0 0.0
      %4433 = vmatpush.msra.mxu0 0.0
      %4434 = vmatpush.msra.mxu0 0.0
      %v4435 = vand.u32 %v4017, 4294901760
      %4436 = vmatpush.msra.mxu0 %v4435
      %v4437 = vand.u32 %v4015, 4294901760
      %4438 = vmatpush.msra.mxu0 %v4437
      %v4439 = vand.u32 %v4023, 4294901760
      %v4440 = vsub.f32 %v4023, %v4439
      %v4441 = vand.u32 %v4440, 4294901760
      %4442 = vmatmul.f32.gmra.mxu0 %v4441
      %v4443 = vpop.f32.mrf.mxu0
      %v4444 = vadd.f32 %v4404, %v4443
      %v4445 = vand.u32 %v4026, 4294901760
      %v4446 = vsub.f32 %v4026, %v4445
      %v4447 = vand.u32 %v4446, 4294901760
      %4448 = vmatmul.f32.gmra.mxu0 %v4447
      %v4449 = vpop.f32.mrf.mxu0
      %v4450 = vadd.f32 %v4409, %v4449
      %v4451 = vand.u32 %v4029, 4294901760
      %v4452 = vsub.f32 %v4029, %v4451
      %v4453 = vand.u32 %v4452, 4294901760
      %4454 = vmatmul.f32.gmra.mxu0 %v4453
      %v4455 = vpop.f32.mrf.mxu0
      %v4456 = vadd.f32 %v4414, %v4455
      %v4457 = vand.u32 %v4032, 4294901760
      %v4458 = vsub.f32 %v4032, %v4457
      %v4459 = vand.u32 %v4458, 4294901760
      %4460 = vmatmul.f32.gmra.mxu0 %v4459
      %v4461 = vpop.f32.mrf.mxu0
      %v4462 = vadd.f32 %v4419, %v4461
      %4463 = vdwg.mxu0
      %4464 = vmatpush.msra.mxu0 0.0
      %4465 = vmatpush.msra.mxu0 0.0
      %4466 = vmatpush.msra.mxu0 0.0
      %4467 = vmatpush.msra.mxu0 0.0
      %4468 = vmatpush.msra.mxu0 0.0
      %4469 = vmatpush.msra.mxu0 0.0
      %4470 = vmatpush.msra.mxu0 0.0
      %4471 = vmatpush.msra.mxu0 0.0
      %4472 = vmatpush.msra.mxu0 0.0
      %4473 = vmatpush.msra.mxu0 0.0
      %4474 = vmatpush.msra.mxu0 0.0
      %4475 = vmatpush.msra.mxu0 0.0
      %4476 = vmatpush.msra.mxu0 0.0
      %4477 = vmatpush.msra.mxu0 0.0
      %v4478 = vand.u32 %v4017, 4294901760
      %v4479 = vsub.f32 %v4017, %v4478
      %v4480 = vand.u32 %v4479, 4294901760
      %4481 = vmatpush.msra.mxu0 %v4480
      %v4482 = vand.u32 %v4015, 4294901760
      %v4483 = vsub.f32 %v4015, %v4482
      %v4484 = vand.u32 %v4483, 4294901760
      %4485 = vmatpush.msra.mxu0 %v4484
      %v4486 = vand.u32 %v4023, 4294901760
      %4487 = vmatmul.f32.gmra.mxu0 %v4486
      %v4488 = vpop.f32.mrf.mxu0
      %v4489 = vadd.f32 %v4444, %v4488
      %v4490 = vand.u32 %v4026, 4294901760
      %4491 = vmatmul.f32.gmra.mxu0 %v4490
      %v4492 = vpop.f32.mrf.mxu0
      %v4493 = vadd.f32 %v4450, %v4492
      %v4494 = vand.u32 %v4029, 4294901760
      %4495 = vmatmul.f32.gmra.mxu0 %v4494
      %v4496 = vpop.f32.mrf.mxu0
      %v4497 = vadd.f32 %v4456, %v4496
      %v4498 = vand.u32 %v4032, 4294901760
      %4499 = vmatmul.f32.gmra.mxu0 %v4498
      %v4500 = vpop.f32.mrf.mxu0
      %v4501 = vadd.f32 %v4462, %v4500
      %4502 = vdwg.mxu0
      %4503 = vmatpush.msra.mxu0 0.0
      %4504 = vmatpush.msra.mxu0 0.0
      %4505 = vmatpush.msra.mxu0 0.0
      %4506 = vmatpush.msra.mxu0 0.0
      %4507 = vmatpush.msra.mxu0 0.0
      %4508 = vmatpush.msra.mxu0 0.0
      %4509 = vmatpush.msra.mxu0 0.0
      %4510 = vmatpush.msra.mxu0 0.0
      %4511 = vmatpush.msra.mxu0 0.0
      %4512 = vmatpush.msra.mxu0 0.0
      %4513 = vmatpush.msra.mxu0 0.0
      %4514 = vmatpush.msra.mxu0 0.0
      %4515 = vmatpush.msra.mxu0 0.0
      %4516 = vmatpush.msra.mxu0 0.0
      %v4517 = vand.u32 %v4017, 4294901760
      %4518 = vmatpush.msra.mxu0 %v4517
      %v4519 = vand.u32 %v4015, 4294901760
      %4520 = vmatpush.msra.mxu0 %v4519
      %v4521 = vand.u32 %v4023, 4294901760
      %4522 = vmatmul.f32.gmra.mxu0 %v4521
      %v4523 = vpop.f32.mrf.mxu0
      %v4524 = vadd.f32 %v4489, %v4523
      %v4525 = vand.u32 %v4026, 4294901760
      %4526 = vmatmul.f32.gmra.mxu0 %v4525
      %v4527 = vpop.f32.mrf.mxu0
      %v4528 = vadd.f32 %v4493, %v4527
      %v4529 = vand.u32 %v4029, 4294901760
      %4530 = vmatmul.f32.gmra.mxu0 %v4529
      %v4531 = vpop.f32.mrf.mxu0
      %v4532 = vadd.f32 %v4497, %v4531
      %v4533 = vand.u32 %v4032, 4294901760
      %4534 = vmatmul.f32.gmra.mxu0 %v4533
      %v4535 = vpop.f32.mrf.mxu0
      %v4536 = vadd.f32 %v4501, %v4535
      %4537 = vdwg.mxu0
      %v4538 = vadd.f32 %v3988, %v4272
      %v4539 = vadd.f32 %v3989, %v4524
      %v4540 = vadd.f32 %v3990, %v4276
      %v4541 = vadd.f32 %v3991, %v4528
      %v4542 = vadd.f32 %v3992, %v4280
      %v4543 = vadd.f32 %v3993, %v4532
      %v4544 = vadd.f32 %v3994, %v4284
      %v4545 = vadd.f32 %v3995, %v4536
      %s4546 = scalar_lea.vmem %s1, 256
      %v4547 = vld [vmem:[%s4546] sm:$0xff]
      %v4548 = vld [vmem:[%s4546 + $0x8] sm:$0xff]
      %v4549 = vld [vmem:[%s4546 + $0x10] sm:$0xff]
      %v4550 = vld [vmem:[%s4546 + $0x18] sm:$0xff]
      %4551 = vrot.lane.b32.xlu0 %v171, 94
      %v4552 = vpop.permute.xlu0 %4551
      %4553 = vrot.lane.b32.xlu0 %v172, 94
      %v4554 = vpop.permute.xlu0 %4553
      %4555 = vrot.lane.b32.xlu0 %v179, 94
      %v4556 = vpop.permute.xlu0 %4555
      %4557 = vrot.lane.b32.xlu0 %v173, 94
      %v4558 = vpop.permute.xlu0 %4557
      %4559 = vrot.lane.b32.xlu0 %v174, 94
      %v4560 = vpop.permute.xlu0 %4559
      %4561 = vrot.lane.b32.xlu0 %v180, 94
      %v4562 = vpop.permute.xlu0 %4561
      %vm4563 = vcmask 769024
      %v4564 = vsel %vm4563, %v4552, %v4554
      %v4565 = vsel %vm4563, %v4554, %v4556
      %v4566 = vsel %vm4563, %v4558, %v4560
      %v4567 = vsel %vm4563, %v4560, %v4562
      %v4573 = vsel %vm213, %v4547, 0
      %v4576 = vsel %vm213, %v4548, 0
      %v4579 = vsel %vm213, %v4549, 0
      %v4582 = vsel %vm213, %v4550, 0
      %4584 = vmatpush.msra.mxu0 0.0
      %4585 = vmatpush.msra.mxu0 0.0
      %4586 = vmatpush.msra.mxu0 0.0
      %4587 = vmatpush.msra.mxu0 0.0
      %4588 = vmatpush.msra.mxu0 0.0
      %4589 = vmatpush.msra.mxu0 0.0
      %4590 = vmatpush.msra.mxu0 0.0
      %4591 = vmatpush.msra.mxu0 0.0
      %4592 = vmatpush.msra.mxu0 0.0
      %4593 = vmatpush.msra.mxu0 0.0
      %4594 = vmatpush.msra.mxu0 0.0
      %4595 = vmatpush.msra.mxu0 0.0
      %4596 = vmatpush.msra.mxu0 0.0
      %4597 = vmatpush.msra.mxu0 0.0
      %v4598 = vand.u32 %v4566, 4294901760
      %4599 = vmatpush.msra.mxu0 %v4598
      %v4600 = vand.u32 %v4564, 4294901760
      %4601 = vmatpush.msra.mxu0 %v4600
      %v4602 = vand.u32 %v4573, 4294901760
      %v4603 = vsub.f32 %v4573, %v4602
      %v4604 = vand.u32 %v4603, 4294901760
      %v4605 = vsub.f32 %v4603, %v4604
      %v4606 = vand.u32 %v4605, 4294901760
      %4607 = vmatmul.f32.gmra.mxu0 %v4606
      %v4608 = vpop.f32.mrf.mxu0
      %v4609 = vadd.f32 0.0, %v4608
      %v4610 = vand.u32 %v4576, 4294901760
      %v4611 = vsub.f32 %v4576, %v4610
      %v4612 = vand.u32 %v4611, 4294901760
      %v4613 = vsub.f32 %v4611, %v4612
      %v4614 = vand.u32 %v4613, 4294901760
      %4615 = vmatmul.f32.gmra.mxu0 %v4614
      %v4616 = vpop.f32.mrf.mxu0
      %v4617 = vadd.f32 0.0, %v4616
      %v4618 = vand.u32 %v4579, 4294901760
      %v4619 = vsub.f32 %v4579, %v4618
      %v4620 = vand.u32 %v4619, 4294901760
      %v4621 = vsub.f32 %v4619, %v4620
      %v4622 = vand.u32 %v4621, 4294901760
      %4623 = vmatmul.f32.gmra.mxu0 %v4622
      %v4624 = vpop.f32.mrf.mxu0
      %v4625 = vadd.f32 0.0, %v4624
      %v4626 = vand.u32 %v4582, 4294901760
      %v4627 = vsub.f32 %v4582, %v4626
      %v4628 = vand.u32 %v4627, 4294901760
      %v4629 = vsub.f32 %v4627, %v4628
      %v4630 = vand.u32 %v4629, 4294901760
      %4631 = vmatmul.f32.gmra.mxu0 %v4630
      %v4632 = vpop.f32.mrf.mxu0
      %v4633 = vadd.f32 0.0, %v4632
      %4634 = vdwg.mxu0
      %4635 = vmatpush.msra.mxu0 0.0
      %4636 = vmatpush.msra.mxu0 0.0
      %4637 = vmatpush.msra.mxu0 0.0
      %4638 = vmatpush.msra.mxu0 0.0
      %4639 = vmatpush.msra.mxu0 0.0
      %4640 = vmatpush.msra.mxu0 0.0
      %4641 = vmatpush.msra.mxu0 0.0
      %4642 = vmatpush.msra.mxu0 0.0
      %4643 = vmatpush.msra.mxu0 0.0
      %4644 = vmatpush.msra.mxu0 0.0
      %4645 = vmatpush.msra.mxu0 0.0
      %4646 = vmatpush.msra.mxu0 0.0
      %4647 = vmatpush.msra.mxu0 0.0
      %4648 = vmatpush.msra.mxu0 0.0
      %v4649 = vand.u32 %v4566, 4294901760
      %v4650 = vsub.f32 %v4566, %v4649
      %v4651 = vand.u32 %v4650, 4294901760
      %v4652 = vsub.f32 %v4650, %v4651
      %v4653 = vand.u32 %v4652, 4294901760
      %4654 = vmatpush.msra.mxu0 %v4653
      %v4655 = vand.u32 %v4564, 4294901760
      %v4656 = vsub.f32 %v4564, %v4655
      %v4657 = vand.u32 %v4656, 4294901760
      %v4658 = vsub.f32 %v4656, %v4657
      %v4659 = vand.u32 %v4658, 4294901760
      %4660 = vmatpush.msra.mxu0 %v4659
      %v4661 = vand.u32 %v4573, 4294901760
      %4662 = vmatmul.f32.gmra.mxu0 %v4661
      %v4663 = vpop.f32.mrf.mxu0
      %v4664 = vadd.f32 %v4609, %v4663
      %v4665 = vand.u32 %v4576, 4294901760
      %4666 = vmatmul.f32.gmra.mxu0 %v4665
      %v4667 = vpop.f32.mrf.mxu0
      %v4668 = vadd.f32 %v4617, %v4667
      %v4669 = vand.u32 %v4579, 4294901760
      %4670 = vmatmul.f32.gmra.mxu0 %v4669
      %v4671 = vpop.f32.mrf.mxu0
      %v4672 = vadd.f32 %v4625, %v4671
      %v4673 = vand.u32 %v4582, 4294901760
      %4674 = vmatmul.f32.gmra.mxu0 %v4673
      %v4675 = vpop.f32.mrf.mxu0
      %v4676 = vadd.f32 %v4633, %v4675
      %4677 = vdwg.mxu0
      %4678 = vmatpush.msra.mxu0 0.0
      %4679 = vmatpush.msra.mxu0 0.0
      %4680 = vmatpush.msra.mxu0 0.0
      %4681 = vmatpush.msra.mxu0 0.0
      %4682 = vmatpush.msra.mxu0 0.0
      %4683 = vmatpush.msra.mxu0 0.0
      %4684 = vmatpush.msra.mxu0 0.0
      %4685 = vmatpush.msra.mxu0 0.0
      %4686 = vmatpush.msra.mxu0 0.0
      %4687 = vmatpush.msra.mxu0 0.0
      %4688 = vmatpush.msra.mxu0 0.0
      %4689 = vmatpush.msra.mxu0 0.0
      %4690 = vmatpush.msra.mxu0 0.0
      %4691 = vmatpush.msra.mxu0 0.0
      %v4692 = vand.u32 %v4566, 4294901760
      %v4693 = vsub.f32 %v4566, %v4692
      %4694 = vmatpush.msra.mxu0 %v4693
      %v4695 = vand.u32 %v4564, 4294901760
      %v4696 = vsub.f32 %v4564, %v4695
      %4697 = vmatpush.msra.mxu0 %v4696
      %v4698 = vand.u32 %v4573, 4294901760
      %v4699 = vsub.f32 %v4573, %v4698
      %4700 = vmatmul.f32.gmra.mxu0 %v4699
      %v4701 = vpop.f32.mrf.mxu0
      %v4702 = vadd.f32 %v4664, %v4701
      %v4703 = vand.u32 %v4576, 4294901760
      %v4704 = vsub.f32 %v4576, %v4703
      %4705 = vmatmul.f32.gmra.mxu0 %v4704
      %v4706 = vpop.f32.mrf.mxu0
      %v4707 = vadd.f32 %v4668, %v4706
      %v4708 = vand.u32 %v4579, 4294901760
      %v4709 = vsub.f32 %v4579, %v4708
      %4710 = vmatmul.f32.gmra.mxu0 %v4709
      %v4711 = vpop.f32.mrf.mxu0
      %v4712 = vadd.f32 %v4672, %v4711
      %v4713 = vand.u32 %v4582, 4294901760
      %v4714 = vsub.f32 %v4582, %v4713
      %4715 = vmatmul.f32.gmra.mxu0 %v4714
      %v4716 = vpop.f32.mrf.mxu0
      %v4717 = vadd.f32 %v4676, %v4716
      %4718 = vdwg.mxu0
      %4719 = vmatpush.msra.mxu0 0.0
      %4720 = vmatpush.msra.mxu0 0.0
      %4721 = vmatpush.msra.mxu0 0.0
      %4722 = vmatpush.msra.mxu0 0.0
      %4723 = vmatpush.msra.mxu0 0.0
      %4724 = vmatpush.msra.mxu0 0.0
      %4725 = vmatpush.msra.mxu0 0.0
      %4726 = vmatpush.msra.mxu0 0.0
      %4727 = vmatpush.msra.mxu0 0.0
      %4728 = vmatpush.msra.mxu0 0.0
      %4729 = vmatpush.msra.mxu0 0.0
      %4730 = vmatpush.msra.mxu0 0.0
      %4731 = vmatpush.msra.mxu0 0.0
      %4732 = vmatpush.msra.mxu0 0.0
      %v4733 = vand.u32 %v4566, 4294901760
      %4734 = vmatpush.msra.mxu0 %v4733
      %v4735 = vand.u32 %v4564, 4294901760
      %4736 = vmatpush.msra.mxu0 %v4735
      %v4737 = vand.u32 %v4573, 4294901760
      %v4738 = vsub.f32 %v4573, %v4737
      %v4739 = vand.u32 %v4738, 4294901760
      %4740 = vmatmul.f32.gmra.mxu0 %v4739
      %v4741 = vpop.f32.mrf.mxu0
      %v4742 = vadd.f32 %v4702, %v4741
      %v4743 = vand.u32 %v4576, 4294901760
      %v4744 = vsub.f32 %v4576, %v4743
      %v4745 = vand.u32 %v4744, 4294901760
      %4746 = vmatmul.f32.gmra.mxu0 %v4745
      %v4747 = vpop.f32.mrf.mxu0
      %v4748 = vadd.f32 %v4707, %v4747
      %v4749 = vand.u32 %v4579, 4294901760
      %v4750 = vsub.f32 %v4579, %v4749
      %v4751 = vand.u32 %v4750, 4294901760
      %4752 = vmatmul.f32.gmra.mxu0 %v4751
      %v4753 = vpop.f32.mrf.mxu0
      %v4754 = vadd.f32 %v4712, %v4753
      %v4755 = vand.u32 %v4582, 4294901760
      %v4756 = vsub.f32 %v4582, %v4755
      %v4757 = vand.u32 %v4756, 4294901760
      %4758 = vmatmul.f32.gmra.mxu0 %v4757
      %v4759 = vpop.f32.mrf.mxu0
      %v4760 = vadd.f32 %v4717, %v4759
      %4761 = vdwg.mxu0
      %4762 = vmatpush.msra.mxu0 0.0
      %4763 = vmatpush.msra.mxu0 0.0
      %4764 = vmatpush.msra.mxu0 0.0
      %4765 = vmatpush.msra.mxu0 0.0
      %4766 = vmatpush.msra.mxu0 0.0
      %4767 = vmatpush.msra.mxu0 0.0
      %4768 = vmatpush.msra.mxu0 0.0
      %4769 = vmatpush.msra.mxu0 0.0
      %4770 = vmatpush.msra.mxu0 0.0
      %4771 = vmatpush.msra.mxu0 0.0
      %4772 = vmatpush.msra.mxu0 0.0
      %4773 = vmatpush.msra.mxu0 0.0
      %4774 = vmatpush.msra.mxu0 0.0
      %4775 = vmatpush.msra.mxu0 0.0
      %v4776 = vand.u32 %v4566, 4294901760
      %v4777 = vsub.f32 %v4566, %v4776
      %v4778 = vand.u32 %v4777, 4294901760
      %4779 = vmatpush.msra.mxu0 %v4778
      %v4780 = vand.u32 %v4564, 4294901760
      %v4781 = vsub.f32 %v4564, %v4780
      %v4782 = vand.u32 %v4781, 4294901760
      %4783 = vmatpush.msra.mxu0 %v4782
      %v4784 = vand.u32 %v4573, 4294901760
      %4785 = vmatmul.f32.gmra.mxu0 %v4784
      %v4786 = vpop.f32.mrf.mxu0
      %v4787 = vadd.f32 %v4742, %v4786
      %v4788 = vand.u32 %v4576, 4294901760
      %4789 = vmatmul.f32.gmra.mxu0 %v4788
      %v4790 = vpop.f32.mrf.mxu0
      %v4791 = vadd.f32 %v4748, %v4790
      %v4792 = vand.u32 %v4579, 4294901760
      %4793 = vmatmul.f32.gmra.mxu0 %v4792
      %v4794 = vpop.f32.mrf.mxu0
      %v4795 = vadd.f32 %v4754, %v4794
      %v4796 = vand.u32 %v4582, 4294901760
      %4797 = vmatmul.f32.gmra.mxu0 %v4796
      %v4798 = vpop.f32.mrf.mxu0
      %v4799 = vadd.f32 %v4760, %v4798
      %4800 = vdwg.mxu0
      %4801 = vmatpush.msra.mxu0 0.0
      %4802 = vmatpush.msra.mxu0 0.0
      %4803 = vmatpush.msra.mxu0 0.0
      %4804 = vmatpush.msra.mxu0 0.0
      %4805 = vmatpush.msra.mxu0 0.0
      %4806 = vmatpush.msra.mxu0 0.0
      %4807 = vmatpush.msra.mxu0 0.0
      %4808 = vmatpush.msra.mxu0 0.0
      %4809 = vmatpush.msra.mxu0 0.0
      %4810 = vmatpush.msra.mxu0 0.0
      %4811 = vmatpush.msra.mxu0 0.0
      %4812 = vmatpush.msra.mxu0 0.0
      %4813 = vmatpush.msra.mxu0 0.0
      %4814 = vmatpush.msra.mxu0 0.0
      %v4815 = vand.u32 %v4566, 4294901760
      %4816 = vmatpush.msra.mxu0 %v4815
      %v4817 = vand.u32 %v4564, 4294901760
      %4818 = vmatpush.msra.mxu0 %v4817
      %v4819 = vand.u32 %v4573, 4294901760
      %4820 = vmatmul.f32.gmra.mxu0 %v4819
      %v4821 = vpop.f32.mrf.mxu0
      %v4822 = vadd.f32 %v4787, %v4821
      %v4823 = vand.u32 %v4576, 4294901760
      %4824 = vmatmul.f32.gmra.mxu0 %v4823
      %v4825 = vpop.f32.mrf.mxu0
      %v4826 = vadd.f32 %v4791, %v4825
      %v4827 = vand.u32 %v4579, 4294901760
      %4828 = vmatmul.f32.gmra.mxu0 %v4827
      %v4829 = vpop.f32.mrf.mxu0
      %v4830 = vadd.f32 %v4795, %v4829
      %v4831 = vand.u32 %v4582, 4294901760
      %4832 = vmatmul.f32.gmra.mxu0 %v4831
      %v4833 = vpop.f32.mrf.mxu0
      %v4834 = vadd.f32 %v4799, %v4833
      %4835 = vdwg.mxu0
      %4836 = vmatpush.msra.mxu0 0.0
      %4837 = vmatpush.msra.mxu0 0.0
      %4838 = vmatpush.msra.mxu0 0.0
      %4839 = vmatpush.msra.mxu0 0.0
      %4840 = vmatpush.msra.mxu0 0.0
      %4841 = vmatpush.msra.mxu0 0.0
      %4842 = vmatpush.msra.mxu0 0.0
      %4843 = vmatpush.msra.mxu0 0.0
      %4844 = vmatpush.msra.mxu0 0.0
      %4845 = vmatpush.msra.mxu0 0.0
      %4846 = vmatpush.msra.mxu0 0.0
      %4847 = vmatpush.msra.mxu0 0.0
      %4848 = vmatpush.msra.mxu0 0.0
      %4849 = vmatpush.msra.mxu0 0.0
      %v4850 = vand.u32 %v4567, 4294901760
      %4851 = vmatpush.msra.mxu0 %v4850
      %v4852 = vand.u32 %v4565, 4294901760
      %4853 = vmatpush.msra.mxu0 %v4852
      %v4854 = vand.u32 %v4573, 4294901760
      %v4855 = vsub.f32 %v4573, %v4854
      %v4856 = vand.u32 %v4855, 4294901760
      %v4857 = vsub.f32 %v4855, %v4856
      %v4858 = vand.u32 %v4857, 4294901760
      %4859 = vmatmul.f32.gmra.mxu0 %v4858
      %v4860 = vpop.f32.mrf.mxu0
      %v4861 = vadd.f32 0.0, %v4860
      %v4862 = vand.u32 %v4576, 4294901760
      %v4863 = vsub.f32 %v4576, %v4862
      %v4864 = vand.u32 %v4863, 4294901760
      %v4865 = vsub.f32 %v4863, %v4864
      %v4866 = vand.u32 %v4865, 4294901760
      %4867 = vmatmul.f32.gmra.mxu0 %v4866
      %v4868 = vpop.f32.mrf.mxu0
      %v4869 = vadd.f32 0.0, %v4868
      %v4870 = vand.u32 %v4579, 4294901760
      %v4871 = vsub.f32 %v4579, %v4870
      %v4872 = vand.u32 %v4871, 4294901760
      %v4873 = vsub.f32 %v4871, %v4872
      %v4874 = vand.u32 %v4873, 4294901760
      %4875 = vmatmul.f32.gmra.mxu0 %v4874
      %v4876 = vpop.f32.mrf.mxu0
      %v4877 = vadd.f32 0.0, %v4876
      %v4878 = vand.u32 %v4582, 4294901760
      %v4879 = vsub.f32 %v4582, %v4878
      %v4880 = vand.u32 %v4879, 4294901760
      %v4881 = vsub.f32 %v4879, %v4880
      %v4882 = vand.u32 %v4881, 4294901760
      %4883 = vmatmul.f32.gmra.mxu0 %v4882
      %v4884 = vpop.f32.mrf.mxu0
      %v4885 = vadd.f32 0.0, %v4884
      %4886 = vdwg.mxu0
      %4887 = vmatpush.msra.mxu0 0.0
      %4888 = vmatpush.msra.mxu0 0.0
      %4889 = vmatpush.msra.mxu0 0.0
      %4890 = vmatpush.msra.mxu0 0.0
      %4891 = vmatpush.msra.mxu0 0.0
      %4892 = vmatpush.msra.mxu0 0.0
      %4893 = vmatpush.msra.mxu0 0.0
      %4894 = vmatpush.msra.mxu0 0.0
      %4895 = vmatpush.msra.mxu0 0.0
      %4896 = vmatpush.msra.mxu0 0.0
      %4897 = vmatpush.msra.mxu0 0.0
      %4898 = vmatpush.msra.mxu0 0.0
      %4899 = vmatpush.msra.mxu0 0.0
      %4900 = vmatpush.msra.mxu0 0.0
      %v4901 = vand.u32 %v4567, 4294901760
      %v4902 = vsub.f32 %v4567, %v4901
      %v4903 = vand.u32 %v4902, 4294901760
      %v4904 = vsub.f32 %v4902, %v4903
      %v4905 = vand.u32 %v4904, 4294901760
      %4906 = vmatpush.msra.mxu0 %v4905
      %v4907 = vand.u32 %v4565, 4294901760
      %v4908 = vsub.f32 %v4565, %v4907
      %v4909 = vand.u32 %v4908, 4294901760
      %v4910 = vsub.f32 %v4908, %v4909
      %v4911 = vand.u32 %v4910, 4294901760
      %4912 = vmatpush.msra.mxu0 %v4911
      %v4913 = vand.u32 %v4573, 4294901760
      %4914 = vmatmul.f32.gmra.mxu0 %v4913
      %v4915 = vpop.f32.mrf.mxu0
      %v4916 = vadd.f32 %v4861, %v4915
      %v4917 = vand.u32 %v4576, 4294901760
      %4918 = vmatmul.f32.gmra.mxu0 %v4917
      %v4919 = vpop.f32.mrf.mxu0
      %v4920 = vadd.f32 %v4869, %v4919
      %v4921 = vand.u32 %v4579, 4294901760
      %4922 = vmatmul.f32.gmra.mxu0 %v4921
      %v4923 = vpop.f32.mrf.mxu0
      %v4924 = vadd.f32 %v4877, %v4923
      %v4925 = vand.u32 %v4582, 4294901760
      %4926 = vmatmul.f32.gmra.mxu0 %v4925
      %v4927 = vpop.f32.mrf.mxu0
      %v4928 = vadd.f32 %v4885, %v4927
      %4929 = vdwg.mxu0
      %4930 = vmatpush.msra.mxu0 0.0
      %4931 = vmatpush.msra.mxu0 0.0
      %4932 = vmatpush.msra.mxu0 0.0
      %4933 = vmatpush.msra.mxu0 0.0
      %4934 = vmatpush.msra.mxu0 0.0
      %4935 = vmatpush.msra.mxu0 0.0
      %4936 = vmatpush.msra.mxu0 0.0
      %4937 = vmatpush.msra.mxu0 0.0
      %4938 = vmatpush.msra.mxu0 0.0
      %4939 = vmatpush.msra.mxu0 0.0
      %4940 = vmatpush.msra.mxu0 0.0
      %4941 = vmatpush.msra.mxu0 0.0
      %4942 = vmatpush.msra.mxu0 0.0
      %4943 = vmatpush.msra.mxu0 0.0
      %v4944 = vand.u32 %v4567, 4294901760
      %v4945 = vsub.f32 %v4567, %v4944
      %4946 = vmatpush.msra.mxu0 %v4945
      %v4947 = vand.u32 %v4565, 4294901760
      %v4948 = vsub.f32 %v4565, %v4947
      %4949 = vmatpush.msra.mxu0 %v4948
      %v4950 = vand.u32 %v4573, 4294901760
      %v4951 = vsub.f32 %v4573, %v4950
      %4952 = vmatmul.f32.gmra.mxu0 %v4951
      %v4953 = vpop.f32.mrf.mxu0
      %v4954 = vadd.f32 %v4916, %v4953
      %v4955 = vand.u32 %v4576, 4294901760
      %v4956 = vsub.f32 %v4576, %v4955
      %4957 = vmatmul.f32.gmra.mxu0 %v4956
      %v4958 = vpop.f32.mrf.mxu0
      %v4959 = vadd.f32 %v4920, %v4958
      %v4960 = vand.u32 %v4579, 4294901760
      %v4961 = vsub.f32 %v4579, %v4960
      %4962 = vmatmul.f32.gmra.mxu0 %v4961
      %v4963 = vpop.f32.mrf.mxu0
      %v4964 = vadd.f32 %v4924, %v4963
      %v4965 = vand.u32 %v4582, 4294901760
      %v4966 = vsub.f32 %v4582, %v4965
      %4967 = vmatmul.f32.gmra.mxu0 %v4966
      %v4968 = vpop.f32.mrf.mxu0
      %v4969 = vadd.f32 %v4928, %v4968
      %4970 = vdwg.mxu0
      %4971 = vmatpush.msra.mxu0 0.0
      %4972 = vmatpush.msra.mxu0 0.0
      %4973 = vmatpush.msra.mxu0 0.0
      %4974 = vmatpush.msra.mxu0 0.0
      %4975 = vmatpush.msra.mxu0 0.0
      %4976 = vmatpush.msra.mxu0 0.0
      %4977 = vmatpush.msra.mxu0 0.0
      %4978 = vmatpush.msra.mxu0 0.0
      %4979 = vmatpush.msra.mxu0 0.0
      %4980 = vmatpush.msra.mxu0 0.0
      %4981 = vmatpush.msra.mxu0 0.0
      %4982 = vmatpush.msra.mxu0 0.0
      %4983 = vmatpush.msra.mxu0 0.0
      %4984 = vmatpush.msra.mxu0 0.0
      %v4985 = vand.u32 %v4567, 4294901760
      %4986 = vmatpush.msra.mxu0 %v4985
      %v4987 = vand.u32 %v4565, 4294901760
      %4988 = vmatpush.msra.mxu0 %v4987
      %v4989 = vand.u32 %v4573, 4294901760
      %v4990 = vsub.f32 %v4573, %v4989
      %v4991 = vand.u32 %v4990, 4294901760
      %4992 = vmatmul.f32.gmra.mxu0 %v4991
      %v4993 = vpop.f32.mrf.mxu0
      %v4994 = vadd.f32 %v4954, %v4993
      %v4995 = vand.u32 %v4576, 4294901760
      %v4996 = vsub.f32 %v4576, %v4995
      %v4997 = vand.u32 %v4996, 4294901760
      %4998 = vmatmul.f32.gmra.mxu0 %v4997
      %v4999 = vpop.f32.mrf.mxu0
      %v5000 = vadd.f32 %v4959, %v4999
      %v5001 = vand.u32 %v4579, 4294901760
      %v5002 = vsub.f32 %v4579, %v5001
      %v5003 = vand.u32 %v5002, 4294901760
      %5004 = vmatmul.f32.gmra.mxu0 %v5003
      %v5005 = vpop.f32.mrf.mxu0
      %v5006 = vadd.f32 %v4964, %v5005
      %v5007 = vand.u32 %v4582, 4294901760
      %v5008 = vsub.f32 %v4582, %v5007
      %v5009 = vand.u32 %v5008, 4294901760
      %5010 = vmatmul.f32.gmra.mxu0 %v5009
      %v5011 = vpop.f32.mrf.mxu0
      %v5012 = vadd.f32 %v4969, %v5011
      %5013 = vdwg.mxu0
      %5014 = vmatpush.msra.mxu0 0.0
      %5015 = vmatpush.msra.mxu0 0.0
      %5016 = vmatpush.msra.mxu0 0.0
      %5017 = vmatpush.msra.mxu0 0.0
      %5018 = vmatpush.msra.mxu0 0.0
      %5019 = vmatpush.msra.mxu0 0.0
      %5020 = vmatpush.msra.mxu0 0.0
      %5021 = vmatpush.msra.mxu0 0.0
      %5022 = vmatpush.msra.mxu0 0.0
      %5023 = vmatpush.msra.mxu0 0.0
      %5024 = vmatpush.msra.mxu0 0.0
      %5025 = vmatpush.msra.mxu0 0.0
      %5026 = vmatpush.msra.mxu0 0.0
      %5027 = vmatpush.msra.mxu0 0.0
      %v5028 = vand.u32 %v4567, 4294901760
      %v5029 = vsub.f32 %v4567, %v5028
      %v5030 = vand.u32 %v5029, 4294901760
      %5031 = vmatpush.msra.mxu0 %v5030
      %v5032 = vand.u32 %v4565, 4294901760
      %v5033 = vsub.f32 %v4565, %v5032
      %v5034 = vand.u32 %v5033, 4294901760
      %5035 = vmatpush.msra.mxu0 %v5034
      %v5036 = vand.u32 %v4573, 4294901760
      %5037 = vmatmul.f32.gmra.mxu0 %v5036
      %v5038 = vpop.f32.mrf.mxu0
      %v5039 = vadd.f32 %v4994, %v5038
      %v5040 = vand.u32 %v4576, 4294901760
      %5041 = vmatmul.f32.gmra.mxu0 %v5040
      %v5042 = vpop.f32.mrf.mxu0
      %v5043 = vadd.f32 %v5000, %v5042
      %v5044 = vand.u32 %v4579, 4294901760
      %5045 = vmatmul.f32.gmra.mxu0 %v5044
      %v5046 = vpop.f32.mrf.mxu0
      %v5047 = vadd.f32 %v5006, %v5046
      %v5048 = vand.u32 %v4582, 4294901760
      %5049 = vmatmul.f32.gmra.mxu0 %v5048
      %v5050 = vpop.f32.mrf.mxu0
      %v5051 = vadd.f32 %v5012, %v5050
      %5052 = vdwg.mxu0
      %5053 = vmatpush.msra.mxu0 0.0
      %5054 = vmatpush.msra.mxu0 0.0
      %5055 = vmatpush.msra.mxu0 0.0
      %5056 = vmatpush.msra.mxu0 0.0
      %5057 = vmatpush.msra.mxu0 0.0
      %5058 = vmatpush.msra.mxu0 0.0
      %5059 = vmatpush.msra.mxu0 0.0
      %5060 = vmatpush.msra.mxu0 0.0
      %5061 = vmatpush.msra.mxu0 0.0
      %5062 = vmatpush.msra.mxu0 0.0
      %5063 = vmatpush.msra.mxu0 0.0
      %5064 = vmatpush.msra.mxu0 0.0
      %5065 = vmatpush.msra.mxu0 0.0
      %5066 = vmatpush.msra.mxu0 0.0
      %v5067 = vand.u32 %v4567, 4294901760
      %5068 = vmatpush.msra.mxu0 %v5067
      %v5069 = vand.u32 %v4565, 4294901760
      %5070 = vmatpush.msra.mxu0 %v5069
      %v5071 = vand.u32 %v4573, 4294901760
      %5072 = vmatmul.f32.gmra.mxu0 %v5071
      %v5073 = vpop.f32.mrf.mxu0
      %v5074 = vadd.f32 %v5039, %v5073
      %v5075 = vand.u32 %v4576, 4294901760
      %5076 = vmatmul.f32.gmra.mxu0 %v5075
      %v5077 = vpop.f32.mrf.mxu0
      %v5078 = vadd.f32 %v5043, %v5077
      %v5079 = vand.u32 %v4579, 4294901760
      %5080 = vmatmul.f32.gmra.mxu0 %v5079
      %v5081 = vpop.f32.mrf.mxu0
      %v5082 = vadd.f32 %v5047, %v5081
      %v5083 = vand.u32 %v4582, 4294901760
      %5084 = vmatmul.f32.gmra.mxu0 %v5083
      %v5085 = vpop.f32.mrf.mxu0
      %v5086 = vadd.f32 %v5051, %v5085
      %5087 = vdwg.mxu0
      %v5088 = vadd.f32 %v4538, %v4822
      %v5089 = vadd.f32 %v4539, %v5074
      %v5090 = vadd.f32 %v4540, %v4826
      %v5091 = vadd.f32 %v4541, %v5078
      %v5092 = vadd.f32 %v4542, %v4830
      %v5093 = vadd.f32 %v4543, %v5082
      %v5094 = vadd.f32 %v4544, %v4834
      %v5095 = vadd.f32 %v4545, %v5086
      %v5096 = vld [vmem:[%s2] sm:$0xff]
      %v5097 = vld [vmem:[%s2 + $0x8] sm:$0xff]
      %v5098 = vld [vmem:[%s2 + $0x10] sm:$0xff]
      %v5099 = vld [vmem:[%s2 + $0x18] sm:$0xff]
      %5101 = vset.pattern.permute.xlu0 0
      %5102 = vperm.xlu0 %5101, %v5096
      %v5103 = vpop.permute.xlu0 %5102
      %5106 = vset.pattern.permute.xlu0 0
      %5107 = vperm.xlu0 %5106, %v5097
      %v5108 = vpop.permute.xlu0 %5107
      %5111 = vset.pattern.permute.xlu0 0
      %5112 = vperm.xlu0 %5111, %v5098
      %v5113 = vpop.permute.xlu0 %5112
      %5116 = vset.pattern.permute.xlu0 0
      %5117 = vperm.xlu0 %5116, %v5099
      %v5118 = vpop.permute.xlu0 %5117
      %v5120 = vadd.f32 %v5088, %v5103
      %v5121 = vadd.f32 %v5089, %v5103
      %v5122 = vadd.f32 %v5090, %v5108
      %v5123 = vadd.f32 %v5091, %v5108
      %v5124 = vadd.f32 %v5092, %v5113
      %v5125 = vadd.f32 %v5093, %v5113
      %v5126 = vadd.f32 %v5094, %v5118
      %v5127 = vadd.f32 %v5095, %v5118
      %5128 = vst [vmem:[%s170] sm:$0xff] %v5120
      %5129 = vst [vmem:[%s170 + $0x8] sm:$0xff] %v5121
      %5130 = vst [vmem:[%s170 + $0x10] sm:$0xff] %v5122
      %5131 = vst [vmem:[%s170 + $0x18] sm:$0xff] %v5123
      %5132 = vst [vmem:[%s170 + $0x20] sm:$0xff] %v5124
      %5133 = vst [vmem:[%s170 + $0x28] sm:$0xff] %v5125
      %5134 = vst [vmem:[%s170 + $0x30] sm:$0xff] %v5126
      %5135 = vst [vmem:[%s170 + $0x38] sm:$0xff] %v5127
      %p5136 = scmp.lt.s32.totalorder %s14, 1
      %s5137 = scalar_select %p5136, %s14, 1
      %s5138 = smul.addr %s5137, 8
      %s5139 = smul.addr %s5138, 8
      %s5140 = scalar_lea.vmem %s3, %s5139
      // Predicated region
      $region33: #{lora_conv2d.1} parent=31 // pred_check
        %p5141 = pneg %p100
      $region34: #{lora_conv2d.1} parent=31 // pred_check_branch
        %5143 = sbr.rel (%p5141) target = $region36
      $region35: #{lora_conv2d.1} parent=31 // pred_region
        _
      $region36: #{lora_conv2d.1} parent=31 // pred_fallthru
        _
    $region32: #{lora_conv2d.1} parent=5 // pred_fallthru
      _
    %p5144 = scmp.le.s32.totalorder 2, %s9
    // Predicated region
    $region37: #{lora_conv2d.1} parent=5 // pred_check
      %p5145 = pneg %p5144
    $region38: #{lora_conv2d.1} parent=5 // pred_check_branch
      %5147 = sbr.rel (%p5145) target = $region40
    $region39: #{lora_conv2d.1} parent=5 // pred_region
      %s5148 = ssub.s32 %s9, 2
      // Predicated region
      $region41: #{lora_conv2d.1} parent=39 // pred_check
        %p5149 = pneg %p106
      $region42: #{lora_conv2d.1} parent=39 // pred_check_branch
        %5151 = sbr.rel (%p5149) target = $region44
      $region43: #{lora_conv2d.1} parent=39 // pred_region
        %p5152 = scmp.lt.s32.totalorder %s15, 1
        %s5153 = scalar_select %p5152, %s15, 1
        %s5154 = smul.addr %s5153, 8
        %s5155 = smul.addr %s5154, 8
        %s5156 = scalar_lea.vmem %s3, %s5155
      $region44: #{lora_conv2d.1} parent=39 // pred_fallthru
        _
    $region40: #{lora_conv2d.1} parent=5 // pred_fallthru
      _
  $region6: #{lora_conv2d.1} parent=0 // loop_footer
    %s13 = sadd.s32 1, %s9
  $region7: #{lora_conv2d.1} parent=0 // loop_footer_branch
    %8 = sbr.rel target = $region3
  $region8: #{lora_conv2d.1} parent=0 // loop_exit
    _

</llo_original>
